<compile_context>
chip_gen: v7x
topology: tpu7x:2x2x1
jax: 0.10.0
libtpu: 0.0.40
codegen_flags: <defaults>
</compile_context>

<pallas_src>
import functools

import jax
import jax.numpy as jnp
from jax.experimental import pallas as pl
from jax.experimental.pallas import tpu as pltpu


def _round_up(x, m):
    return (x + m - 1) // m * m


def _grouped_conv3x3_kernel(x_ref, w_ref, o_ref, acc_ref, *, WP, HWP):
    # x_ref:   (1, 1, HP*WP, Cgp)  bf16  spatially pre-padded image, (h, w) flattened row-major
    # w_ref:   (1, 9, Cgp, Cgop)   bf16  taps in kh*3 + kw order
    # o_ref:   (1, 1, H*WP, Cgop)  f32   output (padded width kept; stripped in the glue)
    # acc_ref: (H*WP, Cgop)        f32   VMEM scratch accumulator
    acc_ref[...] = jnp.zeros_like(acc_ref)
    for kh in range(3):              # static 3x3 unroll -> 9 MXU matmuls
        for kw in range(3):
            # Tap (kh, kw) at output position p = h*WP + w needs flat input row
            # (h+kh)*WP + (w+kw) == kh*WP + kw + p, i.e. a *contiguous* window of HWP rows.
            # (Rows that wrap into the next image row only land in the padded output
            #  columns w >= W, which are discarded outside the kernel.)
            lhs = x_ref[0, 0, pl.ds(kh * WP + kw, HWP), :]          # (HWP, Cgp) bf16
            acc_ref[...] += jnp.dot(lhs, w_ref[0, kh * 3 + kw],
                                    preferred_element_type=jnp.float32)
    o_ref[0, 0] = acc_ref[...].astype(o_ref.dtype)


def grouped_conv3x3(x_nchw, w_oihw, groups):
    """Grouped 3x3 conv, stride 1, padding 1, no bias. Matches torch.nn.Conv2d semantics
    (bf16 operands, f32 accumulation)."""
    N, C, H, W = x_nchw.shape
    Cout, Cg, KH, KW = w_oihw.shape
    G = groups
    assert C == G * Cg and Cout % G == 0 and (KH, KW) == (3, 3)
    Cgo = Cout // G

    # lane-dense channel padding
    Cgp = _round_up(Cg, 128)
    Cgop = _round_up(Cgo, 128)
    # spatial padding: 1 top, 2 bottom, 1 left/right. The extra bottom row keeps the
    # largest tap window (start = 2*WP + 2, length H*WP) inside the flat buffer.
    HP, WP = H + 3, W + 2
    HWP = H * WP

    # glue: NCHW -> (G, N, HP*WP, Cgp) bf16
    x = x_nchw.reshape(N, G, Cg, H, W).transpose(1, 0, 3, 4, 2)           # (G, N, H, W, Cg)
    x = jnp.pad(x, ((0, 0), (0, 0), (1, 2), (1, 1), (0, Cgp - Cg)))       # (G, N, HP, WP, Cgp)
    x = x.astype(jnp.bfloat16).reshape(G, N, HP * WP, Cgp)

    # glue: OIHW -> (G, 9, Cgp, Cgop) bf16 (zero-padded channels)
    w = w_oihw.reshape(G, Cgo, Cg, KH, KW).transpose(0, 3, 4, 2, 1)       # (G, 3, 3, Cg, Cgo)
    w = jnp.pad(w, ((0, 0), (0, 0), (0, 0), (0, Cgp - Cg), (0, Cgop - Cgo)))
    w = w.astype(jnp.bfloat16).reshape(G, KH * KW, Cgp, Cgop)

    kernel = functools.partial(_grouped_conv3x3_kernel, WP=WP, HWP=HWP)

    out = pl.pallas_call(
        kernel,
        out_shape=jax.ShapeDtypeStruct((G, N, HWP, Cgop), jnp.float32),
        grid=(G, N),
        in_specs=[
            pl.BlockSpec((1, 1, HP * WP, Cgp), lambda g, n: (g, n, 0, 0)),
            # weight index_map is independent of n -> tile stays resident across batch steps
            pl.BlockSpec((1, KH * KW, Cgp, Cgop), lambda g, n: (g, 0, 0, 0)),
        ],
        out_specs=pl.BlockSpec((1, 1, HWP, Cgop), lambda g, n: (g, n, 0, 0)),
        scratch_shapes=[pltpu.VMEM((HWP, Cgop), jnp.float32)],
        compiler_params=pltpu.CompilerParams(
            dimension_semantics=("parallel", "parallel"),
        ),
        cost_estimate=pl.CostEstimate(
            flops=2 * KH * KW * G * N * HWP * Cgp * Cgop,
            transcendentals=0,
            bytes_accessed=x.size * 2 + w.size * 2 + G * N * HWP * Cgop * 4,
        ),
    )(x, w)

    # glue: (G, N, H*WP, Cgop) -> strip padded width/channels -> NCHW
    out = out.reshape(G, N, H, WP, Cgop)[:, :, :, :W, :Cgo]               # (G, N, H, W, Cgo)
    out = out.transpose(1, 0, 4, 2, 3).reshape(N, Cout, H, W)
    return out.astype(x_nchw.dtype)


if __name__ == "__main__":
    # Small shapes consistent with the module: groups=6, 3x3 kernel, in_channels == out_channels,
    # 14x14 spatial (the full module uses C=1392 -> Cg=232; here Cg=8 for a quick test).
    G = 6
    C = 48          # divisible by groups (Cg = Cgo = 8)
    H = W = 14
    N = 2

    key = jax.random.PRNGKey(0)
    kx, kw = jax.random.split(key)
    x = jax.random.normal(kx, (N, C, H, W), dtype=jnp.float32)
    # Conv2d weight shape: (out_channels, in_channels // groups, 3, 3)
    w = jax.random.normal(kw, (C, C // G, 3, 3), dtype=jnp.float32) * 0.05

    y = grouped_conv3x3(x, w, groups=G)
    y = jax.block_until_ready(y)

    # Reference with the same bf16 operand rounding and f32 accumulation.
    y_ref = jax.lax.conv_general_dilated(
        x.astype(jnp.bfloat16), w.astype(jnp.bfloat16),
        window_strides=(1, 1), padding=((1, 1), (1, 1)),
        feature_group_count=G,
        dimension_numbers=("NCHW", "OIHW", "NCHW"),
        preferred_element_type=jnp.float32)

    assert y.shape == (N, C, H, W)
    assert jnp.allclose(y, y_ref, atol=1e-2, rtol=1e-2), "mismatch vs reference conv"

    print("KERNEL_OK")
</pallas_src>

<mosaic_0001>
module attributes {stable_mosaic.version = 11 : i64} {
  func.func @_grouped_conv3x3_kernel(%arg0: i32, %arg1: i32, %arg2: memref<1x1x272x128xbf16, #tpu.memory_space<vmem>>, %arg3: memref<1x9x128x128xbf16, #tpu.memory_space<vmem>>, %arg4: memref<1x1x224x128xf32, #tpu.memory_space<vmem>>, %arg5: memref<224x128xf32, #tpu.memory_space<vmem>>) attributes {dimension_semantics = [#tpu.dimension_semantics<parallel>, #tpu.dimension_semantics<parallel>], iteration_bounds = array<i64: 6, 2>, scalar_prefetch = 0 : i64, scratch_operands = 1 : i64, tpu.core_type = #tpu.core_type<tc>, window_params = [{transform_indices = @transform_0, window_bounds = array<i64: 1, 1, 272, 128>}, {transform_indices = @transform_1, window_bounds = array<i64: 1, 9, 128, 128>}, {transform_indices = @transform_2, window_bounds = array<i64: 1, 1, 224, 128>}]} {
    %cst = arith.constant 0.000000e+00 : f32
    %0 = vector.broadcast %cst : f32 to vector<224x128xf32>
    %c0 = arith.constant 0 : index
    %c0_0 = arith.constant 0 : index
    %1 = vector.load %arg5[%c0, %c0_0] : memref<224x128xf32, #tpu.memory_space<vmem>>, vector<224x128xf32>
    tpu.vector_store %arg5[%c0, %c0_0], %0 {strides = array<i32>} : memref<224x128xf32, #tpu.memory_space<vmem>>, vector<224x128xf32>,
    %c0_1 = arith.constant 0 : index
    %c0_2 = arith.constant 0 : index
    %c0_3 = arith.constant 0 : index
    %c0_4 = arith.constant 0 : index
    %2 = vector.load %arg2[%c0_1, %c0_2, %c0_3, %c0_4] : memref<1x1x272x128xbf16, #tpu.memory_space<vmem>>, vector<1x1x224x128xbf16>
    %3 = vector.shape_cast %2 : vector<1x1x224x128xbf16> to vector<224x128xbf16>
    %c0_5 = arith.constant 0 : index
    %c0_6 = arith.constant 0 : index
    %4 = vector.load %arg5[%c0_5, %c0_6] : memref<224x128xf32, #tpu.memory_space<vmem>>, vector<224x128xf32>
    %c0_7 = arith.constant 0 : index
    %c0_8 = arith.constant 0 : index
    %c0_9 = arith.constant 0 : index
    %c0_10 = arith.constant 0 : index
    %5 = vector.load %arg3[%c0_7, %c0_8, %c0_9, %c0_10] : memref<1x9x128x128xbf16, #tpu.memory_space<vmem>>, vector<1x1x128x128xbf16>
    %6 = vector.shape_cast %5 : vector<1x1x128x128xbf16> to vector<128x128xbf16>
    %cst_11 = arith.constant dense<0.000000e+00> : vector<224x128xf32>
    %7 = tpu.matmul %3, %6, %cst_11 {dimension_numbers = #tpu.dot_dimension_numbers<[1], [0], [0], [1], [0, 0, 1, 1], [], []>} : vector<224x128xbf16>, vector<128x128xbf16>, vector<224x128xf32> -> vector<224x128xf32>
    %8 = arith.addf %4, %7 : vector<224x128xf32>
    %c0_12 = arith.constant 0 : index
    %c0_13 = arith.constant 0 : index
    %9 = vector.load %arg5[%c0_12, %c0_13] : memref<224x128xf32, #tpu.memory_space<vmem>>, vector<224x128xf32>
    tpu.vector_store %arg5[%c0_12, %c0_13], %8 {strides = array<i32>} : memref<224x128xf32, #tpu.memory_space<vmem>>, vector<224x128xf32>,
    %c0_14 = arith.constant 0 : index
    %c0_15 = arith.constant 0 : index
    %c1 = arith.constant 1 : index
    %c0_16 = arith.constant 0 : index
    %10 = vector.load %arg2[%c0_14, %c0_15, %c1, %c0_16] : memref<1x1x272x128xbf16, #tpu.memory_space<vmem>>, vector<1x1x224x128xbf16>
    %11 = vector.shape_cast %10 : vector<1x1x224x128xbf16> to vector<224x128xbf16>
    %c0_17 = arith.constant 0 : index
    %c0_18 = arith.constant 0 : index
    %12 = vector.load %arg5[%c0_17, %c0_18] : memref<224x128xf32, #tpu.memory_space<vmem>>, vector<224x128xf32>
    %c0_19 = arith.constant 0 : index
    %c1_20 = arith.constant 1 : index
    %c0_21 = arith.constant 0 : index
    %c0_22 = arith.constant 0 : index
    %13 = vector.load %arg3[%c0_19, %c1_20, %c0_21, %c0_22] : memref<1x9x128x128xbf16, #tpu.memory_space<vmem>>, vector<1x1x128x128xbf16>
    %14 = vector.shape_cast %13 : vector<1x1x128x128xbf16> to vector<128x128xbf16>
    %cst_23 = arith.constant dense<0.000000e+00> : vector<224x128xf32>
    %15 = tpu.matmul %11, %14, %cst_23 {dimension_numbers = #tpu.dot_dimension_numbers<[1], [0], [0], [1], [0, 0, 1, 1], [], []>} : vector<224x128xbf16>, vector<128x128xbf16>, vector<224x128xf32> -> vector<224x128xf32>
    %16 = arith.addf %12, %15 : vector<224x128xf32>
    %c0_24 = arith.constant 0 : index
    %c0_25 = arith.constant 0 : index
    %17 = vector.load %arg5[%c0_24, %c0_25] : memref<224x128xf32, #tpu.memory_space<vmem>>, vector<224x128xf32>
    tpu.vector_store %arg5[%c0_24, %c0_25], %16 {strides = array<i32>} : memref<224x128xf32, #tpu.memory_space<vmem>>, vector<224x128xf32>,
    %c0_26 = arith.constant 0 : index
    %c0_27 = arith.constant 0 : index
    %c2 = arith.constant 2 : index
    %c0_28 = arith.constant 0 : index
    %18 = vector.load %arg2[%c0_26, %c0_27, %c2, %c0_28] : memref<1x1x272x128xbf16, #tpu.memory_space<vmem>>, vector<1x1x224x128xbf16>
    %19 = vector.shape_cast %18 : vector<1x1x224x128xbf16> to vector<224x128xbf16>
    %c0_29 = arith.constant 0 : index
    %c0_30 = arith.constant 0 : index
    %20 = vector.load %arg5[%c0_29, %c0_30] : memref<224x128xf32, #tpu.memory_space<vmem>>, vector<224x128xf32>
    %c0_31 = arith.constant 0 : index
    %c2_32 = arith.constant 2 : index
    %c0_33 = arith.constant 0 : index
    %c0_34 = arith.constant 0 : index
    %21 = vector.load %arg3[%c0_31, %c2_32, %c0_33, %c0_34] : memref<1x9x128x128xbf16, #tpu.memory_space<vmem>>, vector<1x1x128x128xbf16>
    %22 = vector.shape_cast %21 : vector<1x1x128x128xbf16> to vector<128x128xbf16>
    %cst_35 = arith.constant dense<0.000000e+00> : vector<224x128xf32>
    %23 = tpu.matmul %19, %22, %cst_35 {dimension_numbers = #tpu.dot_dimension_numbers<[1], [0], [0], [1], [0, 0, 1, 1], [], []>} : vector<224x128xbf16>, vector<128x128xbf16>, vector<224x128xf32> -> vector<224x128xf32>
    %24 = arith.addf %20, %23 : vector<224x128xf32>
    %c0_36 = arith.constant 0 : index
    %c0_37 = arith.constant 0 : index
    %25 = vector.load %arg5[%c0_36, %c0_37] : memref<224x128xf32, #tpu.memory_space<vmem>>, vector<224x128xf32>
    tpu.vector_store %arg5[%c0_36, %c0_37], %24 {strides = array<i32>} : memref<224x128xf32, #tpu.memory_space<vmem>>, vector<224x128xf32>,
    %c0_38 = arith.constant 0 : index
    %c0_39 = arith.constant 0 : index
    %c16 = arith.constant 16 : index
    %c0_40 = arith.constant 0 : index
    %26 = vector.load %arg2[%c0_38, %c0_39, %c16, %c0_40] : memref<1x1x272x128xbf16, #tpu.memory_space<vmem>>, vector<1x1x224x128xbf16>
    %27 = vector.shape_cast %26 : vector<1x1x224x128xbf16> to vector<224x128xbf16>
    %c0_41 = arith.constant 0 : index
    %c0_42 = arith.constant 0 : index
    %28 = vector.load %arg5[%c0_41, %c0_42] : memref<224x128xf32, #tpu.memory_space<vmem>>, vector<224x128xf32>
    %c0_43 = arith.constant 0 : index
    %c3 = arith.constant 3 : index
    %c0_44 = arith.constant 0 : index
    %c0_45 = arith.constant 0 : index
    %29 = vector.load %arg3[%c0_43, %c3, %c0_44, %c0_45] : memref<1x9x128x128xbf16, #tpu.memory_space<vmem>>, vector<1x1x128x128xbf16>
    %30 = vector.shape_cast %29 : vector<1x1x128x128xbf16> to vector<128x128xbf16>
    %cst_46 = arith.constant dense<0.000000e+00> : vector<224x128xf32>
    %31 = tpu.matmul %27, %30, %cst_46 {dimension_numbers = #tpu.dot_dimension_numbers<[1], [0], [0], [1], [0, 0, 1, 1], [], []>} : vector<224x128xbf16>, vector<128x128xbf16>, vector<224x128xf32> -> vector<224x128xf32>
    %32 = arith.addf %28, %31 : vector<224x128xf32>
    %c0_47 = arith.constant 0 : index
    %c0_48 = arith.constant 0 : index
    %33 = vector.load %arg5[%c0_47, %c0_48] : memref<224x128xf32, #tpu.memory_space<vmem>>, vector<224x128xf32>
    tpu.vector_store %arg5[%c0_47, %c0_48], %32 {strides = array<i32>} : memref<224x128xf32, #tpu.memory_space<vmem>>, vector<224x128xf32>,
    %c0_49 = arith.constant 0 : index
    %c0_50 = arith.constant 0 : index
    %c17 = arith.constant 17 : index
    %c0_51 = arith.constant 0 : index
    %34 = vector.load %arg2[%c0_49, %c0_50, %c17, %c0_51] : memref<1x1x272x128xbf16, #tpu.memory_space<vmem>>, vector<1x1x224x128xbf16>
    %35 = vector.shape_cast %34 : vector<1x1x224x128xbf16> to vector<224x128xbf16>
    %c0_52 = arith.constant 0 : index
    %c0_53 = arith.constant 0 : index
    %36 = vector.load %arg5[%c0_52, %c0_53] : memref<224x128xf32, #tpu.memory_space<vmem>>, vector<224x128xf32>
    %c0_54 = arith.constant 0 : index
    %c4 = arith.constant 4 : index
    %c0_55 = arith.constant 0 : index
    %c0_56 = arith.constant 0 : index
    %37 = vector.load %arg3[%c0_54, %c4, %c0_55, %c0_56] : memref<1x9x128x128xbf16, #tpu.memory_space<vmem>>, vector<1x1x128x128xbf16>
    %38 = vector.shape_cast %37 : vector<1x1x128x128xbf16> to vector<128x128xbf16>
    %cst_57 = arith.constant dense<0.000000e+00> : vector<224x128xf32>
    %39 = tpu.matmul %35, %38, %cst_57 {dimension_numbers = #tpu.dot_dimension_numbers<[1], [0], [0], [1], [0, 0, 1, 1], [], []>} : vector<224x128xbf16>, vector<128x128xbf16>, vector<224x128xf32> -> vector<224x128xf32>
    %40 = arith.addf %36, %39 : vector<224x128xf32>
    %c0_58 = arith.constant 0 : index
    %c0_59 = arith.constant 0 : index
    %41 = vector.load %arg5[%c0_58, %c0_59] : memref<224x128xf32, #tpu.memory_space<vmem>>, vector<224x128xf32>
    tpu.vector_store %arg5[%c0_58, %c0_59], %40 {strides = array<i32>} : memref<224x128xf32, #tpu.memory_space<vmem>>, vector<224x128xf32>,
    %c0_60 = arith.constant 0 : index
    %c0_61 = arith.constant 0 : index
    %c18 = arith.constant 18 : index
    %c0_62 = arith.constant 0 : index
    %42 = vector.load %arg2[%c0_60, %c0_61, %c18, %c0_62] : memref<1x1x272x128xbf16, #tpu.memory_space<vmem>>, vector<1x1x224x128xbf16>
    %43 = vector.shape_cast %42 : vector<1x1x224x128xbf16> to vector<224x128xbf16>
    %c0_63 = arith.constant 0 : index
    %c0_64 = arith.constant 0 : index
    %44 = vector.load %arg5[%c0_63, %c0_64] : memref<224x128xf32, #tpu.memory_space<vmem>>, vector<224x128xf32>
    %c0_65 = arith.constant 0 : index
    %c5 = arith.constant 5 : index
    %c0_66 = arith.constant 0 : index
    %c0_67 = arith.constant 0 : index
    %45 = vector.load %arg3[%c0_65, %c5, %c0_66, %c0_67] : memref<1x9x128x128xbf16, #tpu.memory_space<vmem>>, vector<1x1x128x128xbf16>
    %46 = vector.shape_cast %45 : vector<1x1x128x128xbf16> to vector<128x128xbf16>
    %cst_68 = arith.constant dense<0.000000e+00> : vector<224x128xf32>
    %47 = tpu.matmul %43, %46, %cst_68 {dimension_numbers = #tpu.dot_dimension_numbers<[1], [0], [0], [1], [0, 0, 1, 1], [], []>} : vector<224x128xbf16>, vector<128x128xbf16>, vector<224x128xf32> -> vector<224x128xf32>
    %48 = arith.addf %44, %47 : vector<224x128xf32>
    %c0_69 = arith.constant 0 : index
    %c0_70 = arith.constant 0 : index
    %49 = vector.load %arg5[%c0_69, %c0_70] : memref<224x128xf32, #tpu.memory_space<vmem>>, vector<224x128xf32>
    tpu.vector_store %arg5[%c0_69, %c0_70], %48 {strides = array<i32>} : memref<224x128xf32, #tpu.memory_space<vmem>>, vector<224x128xf32>,
    %c0_71 = arith.constant 0 : index
    %c0_72 = arith.constant 0 : index
    %c32 = arith.constant 32 : index
    %c0_73 = arith.constant 0 : index
    %50 = vector.load %arg2[%c0_71, %c0_72, %c32, %c0_73] : memref<1x1x272x128xbf16, #tpu.memory_space<vmem>>, vector<1x1x224x128xbf16>
    %51 = vector.shape_cast %50 : vector<1x1x224x128xbf16> to vector<224x128xbf16>
    %c0_74 = arith.constant 0 : index
    %c0_75 = arith.constant 0 : index
    %52 = vector.load %arg5[%c0_74, %c0_75] : memref<224x128xf32, #tpu.memory_space<vmem>>, vector<224x128xf32>
    %c0_76 = arith.constant 0 : index
    %c6 = arith.constant 6 : index
    %c0_77 = arith.constant 0 : index
    %c0_78 = arith.constant 0 : index
    %53 = vector.load %arg3[%c0_76, %c6, %c0_77, %c0_78] : memref<1x9x128x128xbf16, #tpu.memory_space<vmem>>, vector<1x1x128x128xbf16>
    %54 = vector.shape_cast %53 : vector<1x1x128x128xbf16> to vector<128x128xbf16>
    %cst_79 = arith.constant dense<0.000000e+00> : vector<224x128xf32>
    %55 = tpu.matmul %51, %54, %cst_79 {dimension_numbers = #tpu.dot_dimension_numbers<[1], [0], [0], [1], [0, 0, 1, 1], [], []>} : vector<224x128xbf16>, vector<128x128xbf16>, vector<224x128xf32> -> vector<224x128xf32>
    %56 = arith.addf %52, %55 : vector<224x128xf32>
    %c0_80 = arith.constant 0 : index
    %c0_81 = arith.constant 0 : index
    %57 = vector.load %arg5[%c0_80, %c0_81] : memref<224x128xf32, #tpu.memory_space<vmem>>, vector<224x128xf32>
    tpu.vector_store %arg5[%c0_80, %c0_81], %56 {strides = array<i32>} : memref<224x128xf32, #tpu.memory_space<vmem>>, vector<224x128xf32>,
    %c0_82 = arith.constant 0 : index
    %c0_83 = arith.constant 0 : index
    %c33 = arith.constant 33 : index
    %c0_84 = arith.constant 0 : index
    %58 = vector.load %arg2[%c0_82, %c0_83, %c33, %c0_84] : memref<1x1x272x128xbf16, #tpu.memory_space<vmem>>, vector<1x1x224x128xbf16>
    %59 = vector.shape_cast %58 : vector<1x1x224x128xbf16> to vector<224x128xbf16>
    %c0_85 = arith.constant 0 : index
    %c0_86 = arith.constant 0 : index
    %60 = vector.load %arg5[%c0_85, %c0_86] : memref<224x128xf32, #tpu.memory_space<vmem>>, vector<224x128xf32>
    %c0_87 = arith.constant 0 : index
    %c7 = arith.constant 7 : index
    %c0_88 = arith.constant 0 : index
    %c0_89 = arith.constant 0 : index
    %61 = vector.load %arg3[%c0_87, %c7, %c0_88, %c0_89] : memref<1x9x128x128xbf16, #tpu.memory_space<vmem>>, vector<1x1x128x128xbf16>
    %62 = vector.shape_cast %61 : vector<1x1x128x128xbf16> to vector<128x128xbf16>
    %cst_90 = arith.constant dense<0.000000e+00> : vector<224x128xf32>
    %63 = tpu.matmul %59, %62, %cst_90 {dimension_numbers = #tpu.dot_dimension_numbers<[1], [0], [0], [1], [0, 0, 1, 1], [], []>} : vector<224x128xbf16>, vector<128x128xbf16>, vector<224x128xf32> -> vector<224x128xf32>
    %64 = arith.addf %60, %63 : vector<224x128xf32>
    %c0_91 = arith.constant 0 : index
    %c0_92 = arith.constant 0 : index
    %65 = vector.load %arg5[%c0_91, %c0_92] : memref<224x128xf32, #tpu.memory_space<vmem>>, vector<224x128xf32>
    tpu.vector_store %arg5[%c0_91, %c0_92], %64 {strides = array<i32>} : memref<224x128xf32, #tpu.memory_space<vmem>>, vector<224x128xf32>,
    %c0_93 = arith.constant 0 : index
    %c0_94 = arith.constant 0 : index
    %c34 = arith.constant 34 : index
    %c0_95 = arith.constant 0 : index
    %66 = vector.load %arg2[%c0_93, %c0_94, %c34, %c0_95] : memref<1x1x272x128xbf16, #tpu.memory_space<vmem>>, vector<1x1x224x128xbf16>
    %67 = vector.shape_cast %66 : vector<1x1x224x128xbf16> to vector<224x128xbf16>
    %c0_96 = arith.constant 0 : index
    %c0_97 = arith.constant 0 : index
    %68 = vector.load %arg5[%c0_96, %c0_97] : memref<224x128xf32, #tpu.memory_space<vmem>>, vector<224x128xf32>
    %c0_98 = arith.constant 0 : index
    %c8 = arith.constant 8 : index
    %c0_99 = arith.constant 0 : index
    %c0_100 = arith.constant 0 : index
    %69 = vector.load %arg3[%c0_98, %c8, %c0_99, %c0_100] : memref<1x9x128x128xbf16, #tpu.memory_space<vmem>>, vector<1x1x128x128xbf16>
    %70 = vector.shape_cast %69 : vector<1x1x128x128xbf16> to vector<128x128xbf16>
    %cst_101 = arith.constant dense<0.000000e+00> : vector<224x128xf32>
    %71 = tpu.matmul %67, %70, %cst_101 {dimension_numbers = #tpu.dot_dimension_numbers<[1], [0], [0], [1], [0, 0, 1, 1], [], []>} : vector<224x128xbf16>, vector<128x128xbf16>, vector<224x128xf32> -> vector<224x128xf32>
    %72 = arith.addf %68, %71 : vector<224x128xf32>
    %c0_102 = arith.constant 0 : index
    %c0_103 = arith.constant 0 : index
    %73 = vector.load %arg5[%c0_102, %c0_103] : memref<224x128xf32, #tpu.memory_space<vmem>>, vector<224x128xf32>
    tpu.vector_store %arg5[%c0_102, %c0_103], %72 {strides = array<i32>} : memref<224x128xf32, #tpu.memory_space<vmem>>, vector<224x128xf32>,
    %c0_104 = arith.constant 0 : index
    %c0_105 = arith.constant 0 : index
    %74 = vector.load %arg5[%c0_104, %c0_105] : memref<224x128xf32, #tpu.memory_space<vmem>>, vector<224x128xf32>
    %c0_106 = arith.constant 0 : index
    %c0_107 = arith.constant 0 : index
    %c0_108 = arith.constant 0 : index
    %c0_109 = arith.constant 0 : index
    %75 = vector.load %arg4[%c0_106, %c0_107, %c0_108, %c0_109] : memref<1x1x224x128xf32, #tpu.memory_space<vmem>>, vector<1x1x224x128xf32>
    %76 = vector.shape_cast %75 : vector<1x1x224x128xf32> to vector<224x128xf32>
    %77 = vector.shape_cast %74 : vector<224x128xf32> to vector<1x1x224x128xf32>
    tpu.vector_store %arg4[%c0_106, %c0_107, %c0_108, %c0_109], %77 {strides = array<i32>} : memref<1x1x224x128xf32, #tpu.memory_space<vmem>>, vector<1x1x224x128xf32>,
    return
  }
  func.func @transform_0(%arg0: i32, %arg1: i32) -> (i32, i32, i32, i32) {
    %c0_i32 = arith.constant 0 : i32
    %c0_i32_0 = arith.constant 0 : i32
    %c0_i32_1 = arith.constant 0 : i32
    return %arg0, %arg1, %c0_i32, %c0_i32_0 : i32, i32, i32, i32
  }
  func.func @transform_1(%arg0: i32, %arg1: i32) -> (i32, i32, i32, i32) {
    %c0_i32 = arith.constant 0 : i32
    %c0_i32_0 = arith.constant 0 : i32
    %c0_i32_1 = arith.constant 0 : i32
    %c0_i32_2 = arith.constant 0 : i32
    return %arg0, %c0_i32, %c0_i32_0, %c0_i32_1 : i32, i32, i32, i32
  }
  func.func @transform_2(%arg0: i32, %arg1: i32) -> (i32, i32, i32, i32) {
    %c0_i32 = arith.constant 0 : i32
    %c0_i32_0 = arith.constant 0 : i32
    %c0_i32_1 = arith.constant 0 : i32
    return %arg0, %arg1, %c0_i32, %c0_i32_0 : i32, i32, i32, i32
  }
}

</mosaic_0001>

<llo_original>
// kernel: tpu_custom_call.1
$region0: #{tpu_custom_call.1}
  #allocation0 [shape = 'u32[]', space=smem, size = 0x4, offset = 0x4, fixed_abs, tag = 'smem constant byte address 0x4 - core index']
  #allocation1 [shape = 'u32[144,128]{1,0:T(1,128)}', space=vmem, size = 0x12000, scoped, tag = 'internal scratch']
  #allocation2 [shape = 'f32[224,128]{1,0:T(8,128)}', space=vmem, size = 0x1c000, scoped, tag = 'scratch operand']
  %s0 = inlined_call_operand.hbm [shape: bf16[6,2,272,128], index: 0, kind: input, shape index: {}]
  %s1 = inlined_call_operand.hbm [shape: bf16[6,9,128,128], index: 1, kind: input, shape index: {}]
  %s2 = inlined_call_operand.hbm [shape: f32[6,2,224,128], index: 2, kind: output, shape index: {}]
  %s3 = sld [smem:[#allocation0]]
  $region49: #{tpu_custom_call.1} parent=0
    _
  %s5 = ssub.s32 1, %s3
  %s6 = scalar_select 0, %s5, %s3
  $region1: #{tpu_custom_call.1} parent=0
    #allocation3 [shape = 'u8[139264]{0}', space=vmem, size = 0x22000, scoped, tag = 'input window, operand 0']
    #allocation4 [shape = 's32[2]{0}', space=sflag, size = 0x8, scoped, tag = 'scoped memory for tpu_custom_call.1']
    #allocation5 [shape = 's32[2]{0}', space=sflag, size = 0x8, scoped, tag = 'scoped memory for tpu_custom_call.1']
    #allocation6 [shape = 'u8[589824]{0}', space=vmem, size = 0x90000, scoped, tag = 'input window, operand 1']
    #allocation7 [shape = 's32[2]{0}', space=sflag, size = 0x8, scoped, tag = 'scoped memory for tpu_custom_call.1']
    #allocation8 [shape = 'u8[229376]{0}', space=vmem, size = 0x38000, scoped, tag = 'output window, operand 0']
    %7 = vsyncpa [#allocation4], 0
    %s8 = scalar_lea.sflag [#allocation4], 1
    %9 = vsyncpa %s8, 0
    %10 = vsyncpa [#allocation7], 0
    %s11 = scalar_lea.sflag [#allocation7], 1
    %12 = vsyncpa %s11, 0
    %13 = vsyncpa [#allocation5], 0
    %s14 = scalar_lea.sflag [#allocation5], 1
    %15 = vsyncpa %s14, 0
    loop: start=0, step=1, limit=14
    $region2: #{tpu_custom_call.1} parent=1 // loop_pre_header
      _
    $region3: #{tpu_custom_call.1} parent=1 // loop_header
      %s17 = sphi 0, %s21
      %p18 = scmp.ge.s32.totalorder %s17, 14
      %s24 = sphi 0, %s36
      %s25 = sphi 0, %s32
      %s26 = sphi 0, %s24
      %s27 = sphi 0, %s25
      %s28 = sphi 0, %s26
      %s29 = sphi 0, %s27
      %s41 = sphi 0, %s43
      %s44 = sphi 0, %s41
      %s45 = sphi 0, %s44
      %s61 = sphi 0, %s45
      %s67 = sphi 0, %s69
      %s70 = sphi 0, %s67
      %s71 = sphi 0, %s70
      %s87 = sphi 0, %s71
      %s95 = sphi 0, %s97
      %s98 = sphi 0, %s95
      %s99 = sphi 0, %s98
      %s115 = sphi 0, %s99
    $region4: #{tpu_custom_call.1} parent=1 // loop_header_branch
      %20 = sbr.rel (%p18) target = $region8
    $region5: #{tpu_custom_call.1} parent=1 // loop_body
      %s22 = ssub.s32 %s17, 1
      %s23 = ssub.s32 %s17, 2
      %s30 = sadd.s32 1, %s25
      %p31 = scmp.ge.s32.totalorder %s30, 2
      %s32 = scalar_select %p31, 0, %s30
      %s33 = sadd.s32 1, %s24
      %s34 = scalar_select %p31, %s33, %s24
      %p35 = scmp.ge.s32.totalorder %s34, 6
      %s36 = scalar_select %p35, 0, %s34
      %s37 = ssub.s32 %s24, %s36
      %s38 = ssub.s32 %s25, %s32
      %s39 = sor.u32 %s37, %s38
      %p40 = scmp.eq.s32.totalorder %s39, 0
      %s42 = sadd.s32 %s41, 1
      %s43 = scalar_select %p40, %s41, %s42
      %p46 = pneg %p40
      %p47 = scmp.eq.s32.totalorder %s17, 11
      %p48 = por %p46, %p47
      %p49 = scmp.ne.s32.totalorder %s41, %s44
      %p50 = scmp.eq.s32.totalorder %s17, 0
      %p51 = por %p49, %p50
      %p52 = scmp.ne.s32.totalorder %s41, %s44
      %p53 = scmp.eq.s32.totalorder %s22, 11
      %p54 = por %p52, %p53
      %p55 = scmp.ne.s32.totalorder %s44, %s45
      %p56 = scmp.eq.s32.totalorder %s22, 0
      %p57 = por %p55, %p56
      %p58 = scmp.ne.s32.totalorder %s44, %s45
      %p59 = scmp.eq.s32.totalorder %s23, 11
      %p60 = por %p58, %p59
      %p62 = scmp.ne.s32.totalorder %s45, %s61
      %p63 = scmp.eq.s32.totalorder %s23, 0
      %p64 = por %p62, %p63
      %s65 = ssub.s32 %s24, %s36
      %p66 = scmp.eq.s32.totalorder %s65, 0
      %s68 = sadd.s32 %s67, 1
      %s69 = scalar_select %p66, %s67, %s68
      %p72 = pneg %p66
      %p73 = scmp.eq.s32.totalorder %s17, 11
      %p74 = por %p72, %p73
      %p75 = scmp.ne.s32.totalorder %s67, %s70
      %p76 = scmp.eq.s32.totalorder %s17, 0
      %p77 = por %p75, %p76
      %p78 = scmp.ne.s32.totalorder %s67, %s70
      %p79 = scmp.eq.s32.totalorder %s22, 11
      %p80 = por %p78, %p79
      %p81 = scmp.ne.s32.totalorder %s70, %s71
      %p82 = scmp.eq.s32.totalorder %s22, 0
      %p83 = por %p81, %p82
      %p84 = scmp.ne.s32.totalorder %s70, %s71
      %p85 = scmp.eq.s32.totalorder %s23, 11
      %p86 = por %p84, %p85
      %p88 = scmp.ne.s32.totalorder %s71, %s87
      %p89 = scmp.eq.s32.totalorder %s23, 0
      %p90 = por %p88, %p89
      %s91 = ssub.s32 %s24, %s36
      %s92 = ssub.s32 %s25, %s32
      %s93 = sor.u32 %s91, %s92
      %p94 = scmp.eq.s32.totalorder %s93, 0
      %s96 = sadd.s32 %s95, 1
      %s97 = scalar_select %p94, %s95, %s96
      %p100 = pneg %p94
      %p101 = scmp.eq.s32.totalorder %s17, 11
      %p102 = por %p100, %p101
      %p103 = scmp.ne.s32.totalorder %s95, %s98
      %p104 = scmp.eq.s32.totalorder %s17, 0
      %p105 = por %p103, %p104
      %p106 = scmp.ne.s32.totalorder %s95, %s98
      %p107 = scmp.eq.s32.totalorder %s22, 11
      %p108 = por %p106, %p107
      %p109 = scmp.ne.s32.totalorder %s98, %s99
      %p110 = scmp.eq.s32.totalorder %s22, 0
      %p111 = por %p109, %p110
      %p112 = scmp.ne.s32.totalorder %s98, %s99
      %p113 = scmp.eq.s32.totalorder %s23, 11
      %p114 = por %p112, %p113
      %p116 = scmp.ne.s32.totalorder %s99, %s115
      %p117 = scmp.eq.s32.totalorder %s23, 0
      %p118 = por %p116, %p117
      %p119 = scmp.le.s32.totalorder 1, %s17
      %p120 = scmp.lt.s32.totalorder %s17, 13
      %p121 = pnand %p119, %p120
      %p122 = pneg %p121
      // Predicated region
      $region9: #{tpu_custom_call.1} parent=5 // pred_check
        _
      $region10: #{tpu_custom_call.1} parent=5 // pred_check_branch
        %124 = sbr.rel (%p121) target = $region12
      $region11: #{tpu_custom_call.1} parent=5 // pred_region
        %s125 = ssub.s32 %s17, 1
      $region12: #{tpu_custom_call.1} parent=5 // pred_fallthru
        _
      %p126 = scmp.lt.s32.totalorder %s17, 12
      // Predicated region
      $region13: #{tpu_custom_call.1} parent=5 // pred_check
        %p127 = pneg %p126
      $region14: #{tpu_custom_call.1} parent=5 // pred_check_branch
        %129 = sbr.rel (%p127) target = $region16
      $region15: #{tpu_custom_call.1} parent=5 // pred_region
        // Predicated region
        $region17: #{tpu_custom_call.1} parent=15 // pred_check
          %p130 = pneg %p51
        $region18: #{tpu_custom_call.1} parent=15 // pred_check_branch
          %132 = sbr.rel (%p130) target = $region20
        $region19: #{tpu_custom_call.1} parent=15 // pred_region
          %s133 = sand.u32 %s41, 1
          %s134 = scalar_lea.sflag [#allocation4], %s133
          %s135 = sand.u32 %s41, 1
          %s136 = smul.addr %s135, 136
          %s137 = scalar_lea.vmem [#allocation3], %s136
          %s139 = ssub.s32 2176, 2176
          %140 = vsyncadd %s134, %s139
          %s141 = smul.addr %s25, 34
          %s142 = smul.addr %s24, 68
          %s143 = sadd.s32 %s141, %s142
          %s144 = smul.addr %s143, 64
          %s145 = scalar_lea.hbm %s0, %s144
          %s146 = sshll.u32 %s137, 4
          %s147 = int_to_ptr.vmem [resolvable:$true] %s146
          %152 = dma.hbm_to_vmem [thread:$0]  %s145, 2176, %s147, %s134, 64, 64, 4
        $region20: #{tpu_custom_call.1} parent=15 // pred_fallthru
          _
        // Predicated region
        $region21: #{tpu_custom_call.1} parent=15 // pred_check
          %p153 = pneg %p77
        $region22: #{tpu_custom_call.1} parent=15 // pred_check_branch
          %155 = sbr.rel (%p153) target = $region24
        $region23: #{tpu_custom_call.1} parent=15 // pred_region
          %s156 = sand.u32 %s67, 1
          %s157 = scalar_lea.sflag [#allocation7], %s156
          %s158 = sand.u32 %s67, 1
          %s159 = smul.addr %s158, 576
          %s160 = scalar_lea.vmem [#allocation6], %s159
          %s162 = ssub.s32 9216, 9216
          %163 = vsyncadd %s157, %s162
          %s164 = smul.addr %s24, 144
          %s165 = smul.addr %s164, 64
          %s166 = scalar_lea.hbm %s1, %s165
          %s167 = sshll.u32 %s160, 4
          %s168 = int_to_ptr.vmem [resolvable:$true] %s167
          %173 = dma.hbm_to_vmem [thread:$0]  %s166, 9216, %s168, %s157, 64, 64, 4
        $region24: #{tpu_custom_call.1} parent=15 // pred_fallthru
          _
      $region16: #{tpu_custom_call.1} parent=5 // pred_fallthru
        _
      %p174 = scmp.le.s32.totalorder 1, %s17
      %p175 = scmp.lt.s32.totalorder %s17, 13
      %p176 = pnand %p174, %p175
      %p177 = pneg %p176
      // Predicated region
      $region25: #{tpu_custom_call.1} parent=5 // pred_check
        _
      $region26: #{tpu_custom_call.1} parent=5 // pred_check_branch
        %179 = sbr.rel (%p176) target = $region28
      $region27: #{tpu_custom_call.1} parent=5 // pred_region
        %s180 = ssub.s32 %s17, 1
        %s181 = sand.u32 %s44, 1
        %s182 = scalar_lea.sflag [#allocation4], %s181
        %s183 = sand.u32 %s44, 1
        %s184 = smul.addr %s183, 136
        %s185 = scalar_lea.vmem [#allocation3], %s184
        // Predicated region
        $region29: #{tpu_custom_call.1} parent=27 // pred_check
          %p186 = pneg %p57
        $region30: #{tpu_custom_call.1} parent=27 // pred_check_branch
          %188 = sbr.rel (%p186) target = $region32
        $region31: #{tpu_custom_call.1} parent=27 // pred_region
          %189 = dma.done %s182, 2176
        $region32: #{tpu_custom_call.1} parent=27 // pred_fallthru
          _
        %s190 = sand.u32 %s70, 1
        %s191 = scalar_lea.sflag [#allocation7], %s190
        %s192 = sand.u32 %s70, 1
        %s193 = smul.addr %s192, 576
        %s194 = scalar_lea.vmem [#allocation6], %s193
        // Predicated region
        $region33: #{tpu_custom_call.1} parent=27 // pred_check
          %p195 = pneg %p83
        $region34: #{tpu_custom_call.1} parent=27 // pred_check_branch
          %197 = sbr.rel (%p195) target = $region36
        $region35: #{tpu_custom_call.1} parent=27 // pred_region
          %198 = dma.done %s191, 9216
        $region36: #{tpu_custom_call.1} parent=27 // pred_fallthru
          _
        %s199 = sand.u32 %s44, 1
        %s200 = scalar_lea.sflag [#allocation4], %s199
        %s201 = sand.u32 %s44, 1
        %s202 = smul.addr %s201, 136
        %s203 = scalar_lea.vmem [#allocation3], %s202
        %p204 = pneg %p57
        %p205 = pneg %p54
        %s206 = sand.u32 %s70, 1
        %s207 = scalar_lea.sflag [#allocation7], %s206
        %s208 = sand.u32 %s70, 1
        %s209 = smul.addr %s208, 576
        %s210 = scalar_lea.vmem [#allocation6], %s209
        %p211 = pneg %p83
        %p212 = pneg %p80
        %p213 = pneg %p111
        %p214 = pneg %p108
        %s215 = sand.u32 %s98, 1
        %s216 = scalar_lea.sflag [#allocation5], %s215
        %s217 = sand.u32 %s98, 1
        %s218 = smul.addr %s217, 224
        %s219 = scalar_lea.vmem [#allocation8], %s218
        %221 = vst [vmem:[#allocation2] sm:$0xff] 0.0
        %222 = vst [vmem:[#allocation2 + $0x8] sm:$0xff] 0.0
        %223 = vst [vmem:[#allocation2 + $0x10] sm:$0xff] 0.0
        %224 = vst [vmem:[#allocation2 + $0x18] sm:$0xff] 0.0
        %225 = vst [vmem:[#allocation2 + $0x20] sm:$0xff] 0.0
        %226 = vst [vmem:[#allocation2 + $0x28] sm:$0xff] 0.0
        %227 = vst [vmem:[#allocation2 + $0x30] sm:$0xff] 0.0
        %228 = vst [vmem:[#allocation2 + $0x38] sm:$0xff] 0.0
        %229 = vst [vmem:[#allocation2 + $0x40] sm:$0xff] 0.0
        %230 = vst [vmem:[#allocation2 + $0x48] sm:$0xff] 0.0
        %231 = vst [vmem:[#allocation2 + $0x50] sm:$0xff] 0.0
        %232 = vst [vmem:[#allocation2 + $0x58] sm:$0xff] 0.0
        %233 = vst [vmem:[#allocation2 + $0x60] sm:$0xff] 0.0
        %234 = vst [vmem:[#allocation2 + $0x68] sm:$0xff] 0.0
        %235 = vst [vmem:[#allocation2 + $0x70] sm:$0xff] 0.0
        %236 = vst [vmem:[#allocation2 + $0x78] sm:$0xff] 0.0
        %237 = vst [vmem:[#allocation2 + $0x80] sm:$0xff] 0.0
        %238 = vst [vmem:[#allocation2 + $0x88] sm:$0xff] 0.0
        %239 = vst [vmem:[#allocation2 + $0x90] sm:$0xff] 0.0
        %240 = vst [vmem:[#allocation2 + $0x98] sm:$0xff] 0.0
        %241 = vst [vmem:[#allocation2 + $0xa0] sm:$0xff] 0.0
        %242 = vst [vmem:[#allocation2 + $0xa8] sm:$0xff] 0.0
        %243 = vst [vmem:[#allocation2 + $0xb0] sm:$0xff] 0.0
        %244 = vst [vmem:[#allocation2 + $0xb8] sm:$0xff] 0.0
        %245 = vst [vmem:[#allocation2 + $0xc0] sm:$0xff] 0.0
        %246 = vst [vmem:[#allocation2 + $0xc8] sm:$0xff] 0.0
        %247 = vst [vmem:[#allocation2 + $0xd0] sm:$0xff] 0.0
        %248 = vst [vmem:[#allocation2 + $0xd8] sm:$0xff] 0.0
        %v249 = vld [vmem:[%s185] sm:$0xf]
        %v250 = vld [vmem:[%s185 + $0x4] sm:$0xf]
        %v251 = vld [vmem:[%s185 + $0x8] sm:$0xf]
        %v252 = vld [vmem:[%s185 + $0xc] sm:$0xf]
        %v253 = vld [vmem:[%s185 + $0x10] sm:$0xf]
        %v254 = vld [vmem:[%s185 + $0x14] sm:$0xf]
        %v255 = vld [vmem:[%s185 + $0x18] sm:$0xf]
        %v256 = vld [vmem:[%s185 + $0x1c] sm:$0xf]
        %v257 = vld [vmem:[%s185 + $0x20] sm:$0xf]
        %v258 = vld [vmem:[%s185 + $0x24] sm:$0xf]
        %v259 = vld [vmem:[%s185 + $0x28] sm:$0xf]
        %v260 = vld [vmem:[%s185 + $0x2c] sm:$0xf]
        %v261 = vld [vmem:[%s185 + $0x30] sm:$0xf]
        %v262 = vld [vmem:[%s185 + $0x34] sm:$0xf]
        %v263 = vld [vmem:[%s185 + $0x38] sm:$0xf]
        %v264 = vld [vmem:[%s185 + $0x3c] sm:$0xf]
        %v265 = vld [vmem:[%s185 + $0x40] sm:$0xf]
        %v266 = vld [vmem:[%s185 + $0x44] sm:$0xf]
        %v267 = vld [vmem:[%s185 + $0x48] sm:$0xf]
        %v268 = vld [vmem:[%s185 + $0x4c] sm:$0xf]
        %v269 = vld [vmem:[%s185 + $0x50] sm:$0xf]
        %v270 = vld [vmem:[%s185 + $0x54] sm:$0xf]
        %v271 = vld [vmem:[%s185 + $0x58] sm:$0xf]
        %v272 = vld [vmem:[%s185 + $0x5c] sm:$0xf]
        %v273 = vld [vmem:[%s185 + $0x60] sm:$0xf]
        %v274 = vld [vmem:[%s185 + $0x64] sm:$0xf]
        %v275 = vld [vmem:[%s185 + $0x68] sm:$0xf]
        %v276 = vld [vmem:[%s185 + $0x6c] sm:$0xf]
        %v277 = vld [vmem:[#allocation2] sm:$0xff]
        %v278 = vld [vmem:[#allocation2 + $0x8] sm:$0xff]
        %v279 = vld [vmem:[#allocation2 + $0x10] sm:$0xff]
        %v280 = vld [vmem:[#allocation2 + $0x18] sm:$0xff]
        %v281 = vld [vmem:[#allocation2 + $0x20] sm:$0xff]
        %v282 = vld [vmem:[#allocation2 + $0x28] sm:$0xff]
        %v283 = vld [vmem:[#allocation2 + $0x30] sm:$0xff]
        %v284 = vld [vmem:[#allocation2 + $0x38] sm:$0xff]
        %v285 = vld [vmem:[#allocation2 + $0x40] sm:$0xff]
        %v286 = vld [vmem:[#allocation2 + $0x48] sm:$0xff]
        %v287 = vld [vmem:[#allocation2 + $0x50] sm:$0xff]
        %v288 = vld [vmem:[#allocation2 + $0x58] sm:$0xff]
        %v289 = vld [vmem:[#allocation2 + $0x60] sm:$0xff]
        %v290 = vld [vmem:[#allocation2 + $0x68] sm:$0xff]
        %v291 = vld [vmem:[#allocation2 + $0x70] sm:$0xff]
        %v292 = vld [vmem:[#allocation2 + $0x78] sm:$0xff]
        %v293 = vld [vmem:[#allocation2 + $0x80] sm:$0xff]
        %v294 = vld [vmem:[#allocation2 + $0x88] sm:$0xff]
        %v295 = vld [vmem:[#allocation2 + $0x90] sm:$0xff]
        %v296 = vld [vmem:[#allocation2 + $0x98] sm:$0xff]
        %v297 = vld [vmem:[#allocation2 + $0xa0] sm:$0xff]
        %v298 = vld [vmem:[#allocation2 + $0xa8] sm:$0xff]
        %v299 = vld [vmem:[#allocation2 + $0xb0] sm:$0xff]
        %v300 = vld [vmem:[#allocation2 + $0xb8] sm:$0xff]
        %v301 = vld [vmem:[#allocation2 + $0xc0] sm:$0xff]
        %v302 = vld [vmem:[#allocation2 + $0xc8] sm:$0xff]
        %v303 = vld [vmem:[#allocation2 + $0xd0] sm:$0xff]
        %v304 = vld [vmem:[#allocation2 + $0xd8] sm:$0xff]
        %v305 = vld [vmem:[%s194] sm:$0xf]
        %v306 = vld [vmem:[%s194 + $0x4] sm:$0xf]
        %v307 = vld [vmem:[%s194 + $0x8] sm:$0xf]
        %v308 = vld [vmem:[%s194 + $0xc] sm:$0xf]
        %v309 = vld [vmem:[%s194 + $0x10] sm:$0xf]
        %v310 = vld [vmem:[%s194 + $0x14] sm:$0xf]
        %v311 = vld [vmem:[%s194 + $0x18] sm:$0xf]
        %v312 = vld [vmem:[%s194 + $0x1c] sm:$0xf]
        %v313 = vld [vmem:[%s194 + $0x20] sm:$0xf]
        %v314 = vld [vmem:[%s194 + $0x24] sm:$0xf]
        %v315 = vld [vmem:[%s194 + $0x28] sm:$0xf]
        %v316 = vld [vmem:[%s194 + $0x2c] sm:$0xf]
        %v317 = vld [vmem:[%s194 + $0x30] sm:$0xf]
        %v318 = vld [vmem:[%s194 + $0x34] sm:$0xf]
        %v319 = vld [vmem:[%s194 + $0x38] sm:$0xf]
        %v320 = vld [vmem:[%s194 + $0x3c] sm:$0xf]
        %v349 = vunpack.c.l.b16 %v249
        %v350 = vunpack.c.l.b16 %v250
        %v351 = vunpack.c.l.b16 %v251
        %v352 = vunpack.c.l.b16 %v252
        %v353 = vunpack.c.l.b16 %v253
        %v354 = vunpack.c.l.b16 %v254
        %v355 = vunpack.c.l.b16 %v255
        %v356 = vunpack.c.l.b16 %v256
        %v357 = vunpack.c.l.b16 %v257
        %v358 = vunpack.c.l.b16 %v258
        %v359 = vunpack.c.l.b16 %v259
        %v360 = vunpack.c.l.b16 %v260
        %v361 = vunpack.c.l.b16 %v261
        %v362 = vunpack.c.l.b16 %v262
        %v363 = vunpack.c.l.b16 %v263
        %v364 = vunpack.c.l.b16 %v264
        %v365 = vunpack.c.l.b16 %v265
        %v366 = vunpack.c.l.b16 %v266
        %v367 = vunpack.c.l.b16 %v267
        %v368 = vunpack.c.l.b16 %v268
        %v369 = vunpack.c.l.b16 %v269
        %v370 = vunpack.c.l.b16 %v270
        %v371 = vunpack.c.l.b16 %v271
        %v372 = vunpack.c.l.b16 %v272
        %v373 = vunpack.c.l.b16 %v273
        %v374 = vunpack.c.l.b16 %v274
        %v375 = vunpack.c.l.b16 %v275
        %v376 = vunpack.c.l.b16 %v276
        %v377 = vpack.c.b16 %v350, %v349
        %v378 = vpack.c.b16 %v352, %v351
        %v379 = vpack.c.b16 %v354, %v353
        %v380 = vpack.c.b16 %v356, %v355
        %v381 = vpack.c.b16 %v358, %v357
        %v382 = vpack.c.b16 %v360, %v359
        %v383 = vpack.c.b16 %v362, %v361
        %v384 = vpack.c.b16 %v364, %v363
        %v385 = vpack.c.b16 %v366, %v365
        %v386 = vpack.c.b16 %v368, %v367
        %v387 = vpack.c.b16 %v370, %v369
        %v388 = vpack.c.b16 %v372, %v371
        %v389 = vpack.c.b16 %v374, %v373
        %v390 = vpack.c.b16 %v376, %v375
        %v421 = vunpack.c.l.b16 %v305
        %v422 = vunpack.c.l.b16 %v306
        %v423 = vunpack.c.l.b16 %v307
        %v424 = vunpack.c.l.b16 %v308
        %v425 = vunpack.c.l.b16 %v309
        %v426 = vunpack.c.l.b16 %v310
        %v427 = vunpack.c.l.b16 %v311
        %v428 = vunpack.c.l.b16 %v312
        %v429 = vunpack.c.l.b16 %v313
        %v430 = vunpack.c.l.b16 %v314
        %v431 = vunpack.c.l.b16 %v315
        %v432 = vunpack.c.l.b16 %v316
        %v433 = vunpack.c.l.b16 %v317
        %v434 = vunpack.c.l.b16 %v318
        %v435 = vunpack.c.l.b16 %v319
        %v436 = vunpack.c.l.b16 %v320
        %v437 = vpack.c.b16 %v422, %v421
        %v438 = vpack.c.b16 %v424, %v423
        %v439 = vpack.c.b16 %v426, %v425
        %v440 = vpack.c.b16 %v428, %v427
        %v441 = vpack.c.b16 %v430, %v429
        %v442 = vpack.c.b16 %v432, %v431
        %v443 = vpack.c.b16 %v434, %v433
        %v444 = vpack.c.b16 %v436, %v435
        %453 = vmatprep.subr.bf16.mxu0 0
        %454 = vmatpush1.bf16.msra.mxu0 %v437
        %455 = vmatprep.subr.bf16.mxu0 0
        %456 = vmatpush1.bf16.msra.mxu0 %v438
        %457 = vmatprep.subr.bf16.mxu0 0
        %458 = vmatpush1.bf16.msra.mxu0 %v439
        %459 = vmatprep.subr.bf16.mxu0 0
        %460 = vmatpush1.bf16.msra.mxu0 %v440
        %461 = vmatprep.subr.bf16.mxu0 0
        %462 = vmatpush1.bf16.msra.mxu0 %v441
        %463 = vmatprep.subr.bf16.mxu0 0
        %464 = vmatpush1.bf16.msra.mxu0 %v442
        %465 = vmatprep.subr.bf16.mxu0 0
        %466 = vmatpush1.bf16.msra.mxu0 %v443
        %467 = vmatprep.subr.bf16.mxu0 0
        %468 = vmatpush1.bf16.msra.mxu0 %v444
        %469 = vmatprep.subr.bf16.mxu0 0
        %470 = vmatpush1.bf16.msra.mxu0 0
        %471 = vmatprep.subr.bf16.mxu0 0
        %472 = vmatpush1.bf16.msra.mxu0 0
        %473 = vmatprep.subr.bf16.mxu0 0
        %474 = vmatpush1.bf16.msra.mxu0 0
        %475 = vmatprep.subr.bf16.mxu0 0
        %476 = vmatpush1.bf16.msra.mxu0 0
        %477 = vmatprep.subr.bf16.mxu0 0
        %478 = vmatpush1.bf16.msra.mxu0 0
        %479 = vmatprep.subr.bf16.mxu0 0
        %480 = vmatpush1.bf16.msra.mxu0 0
        %481 = vmatprep.subr.bf16.mxu0 0
        %482 = vmatpush1.bf16.msra.mxu0 0
        %483 = vmatprep.subr.bf16.mxu0 0
        %484 = vmatpush1.bf16.msra.mxu0 0
        %485 = vmatprep.mubr.bf16.mxu0 0
        %486 = vmatmul.mubr.bf16.gmra.mrb[0].mxu0 %v377
        %v487 = vpop.f32.mrb[0].mxu0
        %v488 = vadd.f32 0.0, %v487
        %v489 = vpop.f32.mrb[0].mxu0
        %v490 = vpop.f32.mrb[0].mxu0
        %v491 = vadd.f32 0.0, %v490
        %v492 = vpop.f32.mrb[0].mxu0
        %493 = vmatprep.mubr.bf16.mxu0 0
        %494 = vmatmul.mubr.bf16.gmra.mrb[0].mxu0 %v378
        %v495 = vpop.f32.mrb[0].mxu0
        %v496 = vadd.f32 0.0, %v495
        %v497 = vpop.f32.mrb[0].mxu0
        %v498 = vpop.f32.mrb[0].mxu0
        %v499 = vadd.f32 0.0, %v498
        %v500 = vpop.f32.mrb[0].mxu0
        %501 = vmatprep.mubr.bf16.mxu0 0
        %502 = vmatmul.mubr.bf16.gmra.mrb[0].mxu0 %v379
        %v503 = vpop.f32.mrb[0].mxu0
        %v504 = vadd.f32 0.0, %v503
        %v505 = vpop.f32.mrb[0].mxu0
        %v506 = vpop.f32.mrb[0].mxu0
        %v507 = vadd.f32 0.0, %v506
        %v508 = vpop.f32.mrb[0].mxu0
        %509 = vmatprep.mubr.bf16.mxu0 0
        %510 = vmatmul.mubr.bf16.gmra.mrb[0].mxu0 %v380
        %v511 = vpop.f32.mrb[0].mxu0
        %v512 = vadd.f32 0.0, %v511
        %v513 = vpop.f32.mrb[0].mxu0
        %v514 = vpop.f32.mrb[0].mxu0
        %v515 = vadd.f32 0.0, %v514
        %v516 = vpop.f32.mrb[0].mxu0
        %517 = vmatprep.mubr.bf16.mxu0 0
        %518 = vmatmul.mubr.bf16.gmra.mrb[0].mxu0 %v381
        %v519 = vpop.f32.mrb[0].mxu0
        %v520 = vadd.f32 0.0, %v519
        %v521 = vpop.f32.mrb[0].mxu0
        %v522 = vpop.f32.mrb[0].mxu0
        %v523 = vadd.f32 0.0, %v522
        %v524 = vpop.f32.mrb[0].mxu0
        %525 = vmatprep.mubr.bf16.mxu0 0
        %526 = vmatmul.mubr.bf16.gmra.mrb[0].mxu0 %v382
        %v527 = vpop.f32.mrb[0].mxu0
        %v528 = vadd.f32 0.0, %v527
        %v529 = vpop.f32.mrb[0].mxu0
        %v530 = vpop.f32.mrb[0].mxu0
        %v531 = vadd.f32 0.0, %v530
        %v532 = vpop.f32.mrb[0].mxu0
        %533 = vmatprep.mubr.bf16.mxu0 0
        %534 = vmatmul.mubr.bf16.gmra.mrb[0].mxu0 %v383
        %v535 = vpop.f32.mrb[0].mxu0
        %v536 = vadd.f32 0.0, %v535
        %v537 = vpop.f32.mrb[0].mxu0
        %v538 = vpop.f32.mrb[0].mxu0
        %v539 = vadd.f32 0.0, %v538
        %v540 = vpop.f32.mrb[0].mxu0
        %541 = vmatprep.mubr.bf16.mxu0 0
        %542 = vmatmul.mubr.bf16.gmra.mrb[0].mxu0 %v384
        %v543 = vpop.f32.mrb[0].mxu0
        %v544 = vadd.f32 0.0, %v543
        %v545 = vpop.f32.mrb[0].mxu0
        %v546 = vpop.f32.mrb[0].mxu0
        %v547 = vadd.f32 0.0, %v546
        %v548 = vpop.f32.mrb[0].mxu0
        %549 = vmatprep.mubr.bf16.mxu0 0
        %550 = vmatmul.mubr.bf16.gmra.mrb[0].mxu0 %v385
        %v551 = vpop.f32.mrb[0].mxu0
        %v552 = vadd.f32 0.0, %v551
        %v553 = vpop.f32.mrb[0].mxu0
        %v554 = vpop.f32.mrb[0].mxu0
        %v555 = vadd.f32 0.0, %v554
        %v556 = vpop.f32.mrb[0].mxu0
        %557 = vmatprep.mubr.bf16.mxu0 0
        %558 = vmatmul.mubr.bf16.gmra.mrb[0].mxu0 %v386
        %v559 = vpop.f32.mrb[0].mxu0
        %v560 = vadd.f32 0.0, %v559
        %v561 = vpop.f32.mrb[0].mxu0
        %v562 = vpop.f32.mrb[0].mxu0
        %v563 = vadd.f32 0.0, %v562
        %v564 = vpop.f32.mrb[0].mxu0
        %565 = vmatprep.mubr.bf16.mxu0 0
        %566 = vmatmul.mubr.bf16.gmra.mrb[0].mxu0 %v387
        %v567 = vpop.f32.mrb[0].mxu0
        %v568 = vadd.f32 0.0, %v567
        %v569 = vpop.f32.mrb[0].mxu0
        %v570 = vpop.f32.mrb[0].mxu0
        %v571 = vadd.f32 0.0, %v570
        %v572 = vpop.f32.mrb[0].mxu0
        %573 = vmatprep.mubr.bf16.mxu0 0
        %574 = vmatmul.mubr.bf16.gmra.mrb[0].mxu0 %v388
        %v575 = vpop.f32.mrb[0].mxu0
        %v576 = vadd.f32 0.0, %v575
        %v577 = vpop.f32.mrb[0].mxu0
        %v578 = vpop.f32.mrb[0].mxu0
        %v579 = vadd.f32 0.0, %v578
        %v580 = vpop.f32.mrb[0].mxu0
        %581 = vmatprep.mubr.bf16.mxu0 0
        %582 = vmatmul.mubr.bf16.gmra.mrb[0].mxu0 %v389
        %v583 = vpop.f32.mrb[0].mxu0
        %v584 = vadd.f32 0.0, %v583
        %v585 = vpop.f32.mrb[0].mxu0
        %v586 = vpop.f32.mrb[0].mxu0
        %v587 = vadd.f32 0.0, %v586
        %v588 = vpop.f32.mrb[0].mxu0
        %589 = vmatprep.mubr.bf16.mxu0 0
        %590 = vmatmul.mubr.bf16.gmra.mrb[0].mxu0 %v390
        %v591 = vpop.f32.mrb[0].mxu0
        %v592 = vadd.f32 0.0, %v591
        %v593 = vpop.f32.mrb[0].mxu0
        %v594 = vpop.f32.mrb[0].mxu0
        %v595 = vadd.f32 0.0, %v594
        %v596 = vpop.f32.mrb[0].mxu0
        %597 = vdwg.mxu0
        %v598 = vadd.f32 %v277, %v488
        %v599 = vadd.f32 %v278, %v491
        %v600 = vadd.f32 %v279, %v496
        %v601 = vadd.f32 %v280, %v499
        %v602 = vadd.f32 %v281, %v504
        %v603 = vadd.f32 %v282, %v507
        %v604 = vadd.f32 %v283, %v512
        %v605 = vadd.f32 %v284, %v515
        %v606 = vadd.f32 %v285, %v520
        %v607 = vadd.f32 %v286, %v523
        %v608 = vadd.f32 %v287, %v528
        %v609 = vadd.f32 %v288, %v531
        %v610 = vadd.f32 %v289, %v536
        %v611 = vadd.f32 %v290, %v539
        %v612 = vadd.f32 %v291, %v544
        %v613 = vadd.f32 %v292, %v547
        %v614 = vadd.f32 %v293, %v552
        %v615 = vadd.f32 %v294, %v555
        %v616 = vadd.f32 %v295, %v560
        %v617 = vadd.f32 %v296, %v563
        %v618 = vadd.f32 %v297, %v568
        %v619 = vadd.f32 %v298, %v571
        %v620 = vadd.f32 %v299, %v576
        %v621 = vadd.f32 %v300, %v579
        %v622 = vadd.f32 %v301, %v584
        %v623 = vadd.f32 %v302, %v587
        %v624 = vadd.f32 %v303, %v592
        %v625 = vadd.f32 %v304, %v595
        %626 = vst [vmem:[#allocation2] sm:$0xff] %v598
        %627 = vst [vmem:[#allocation2 + $0x8] sm:$0xff] %v599
        %628 = vst [vmem:[#allocation2 + $0x10] sm:$0xff] %v600
        %629 = vst [vmem:[#allocation2 + $0x18] sm:$0xff] %v601
        %630 = vst [vmem:[#allocation2 + $0x20] sm:$0xff] %v602
        %631 = vst [vmem:[#allocation2 + $0x28] sm:$0xff] %v603
        %632 = vst [vmem:[#allocation2 + $0x30] sm:$0xff] %v604
        %633 = vst [vmem:[#allocation2 + $0x38] sm:$0xff] %v605
        %634 = vst [vmem:[#allocation2 + $0x40] sm:$0xff] %v606
        %635 = vst [vmem:[#allocation2 + $0x48] sm:$0xff] %v607
        %636 = vst [vmem:[#allocation2 + $0x50] sm:$0xff] %v608
        %637 = vst [vmem:[#allocation2 + $0x58] sm:$0xff] %v609
        %638 = vst [vmem:[#allocation2 + $0x60] sm:$0xff] %v610
        %639 = vst [vmem:[#allocation2 + $0x68] sm:$0xff] %v611
        %640 = vst [vmem:[#allocation2 + $0x70] sm:$0xff] %v612
        %641 = vst [vmem:[#allocation2 + $0x78] sm:$0xff] %v613
        %642 = vst [vmem:[#allocation2 + $0x80] sm:$0xff] %v614
        %643 = vst [vmem:[#allocation2 + $0x88] sm:$0xff] %v615
        %644 = vst [vmem:[#allocation2 + $0x90] sm:$0xff] %v616
        %645 = vst [vmem:[#allocation2 + $0x98] sm:$0xff] %v617
        %646 = vst [vmem:[#allocation2 + $0xa0] sm:$0xff] %v618
        %647 = vst [vmem:[#allocation2 + $0xa8] sm:$0xff] %v619
        %648 = vst [vmem:[#allocation2 + $0xb0] sm:$0xff] %v620
        %649 = vst [vmem:[#allocation2 + $0xb8] sm:$0xff] %v621
        %650 = vst [vmem:[#allocation2 + $0xc0] sm:$0xff] %v622
        %651 = vst [vmem:[#allocation2 + $0xc8] sm:$0xff] %v623
        %652 = vst [vmem:[#allocation2 + $0xd0] sm:$0xff] %v624
        %653 = vst [vmem:[#allocation2 + $0xd8] sm:$0xff] %v625
        %v654 = vld [vmem:[%s185] sm:$0xf]
        %v655 = vld [vmem:[%s185 + $0x4] sm:$0xf]
        %v656 = vld [vmem:[%s185 + $0x8] sm:$0xf]
        %v657 = vld [vmem:[%s185 + $0xc] sm:$0xf]
        %v658 = vld [vmem:[%s185 + $0x10] sm:$0xf]
        %v659 = vld [vmem:[%s185 + $0x14] sm:$0xf]
        %v660 = vld [vmem:[%s185 + $0x18] sm:$0xf]
        %v661 = vld [vmem:[%s185 + $0x1c] sm:$0xf]
        %v662 = vld [vmem:[%s185 + $0x20] sm:$0xf]
        %v663 = vld [vmem:[%s185 + $0x24] sm:$0xf]
        %v664 = vld [vmem:[%s185 + $0x28] sm:$0xf]
        %v665 = vld [vmem:[%s185 + $0x2c] sm:$0xf]
        %v666 = vld [vmem:[%s185 + $0x30] sm:$0xf]
        %v667 = vld [vmem:[%s185 + $0x34] sm:$0xf]
        %v668 = vld [vmem:[%s185 + $0x38] sm:$0xf]
        %v669 = vld [vmem:[%s185 + $0x3c] sm:$0xf]
        %v670 = vld [vmem:[%s185 + $0x40] sm:$0xf]
        %v671 = vld [vmem:[%s185 + $0x44] sm:$0xf]
        %v672 = vld [vmem:[%s185 + $0x48] sm:$0xf]
        %v673 = vld [vmem:[%s185 + $0x4c] sm:$0xf]
        %v674 = vld [vmem:[%s185 + $0x50] sm:$0xf]
        %v675 = vld [vmem:[%s185 + $0x54] sm:$0xf]
        %v676 = vld [vmem:[%s185 + $0x58] sm:$0xf]
        %v677 = vld [vmem:[%s185 + $0x5c] sm:$0xf]
        %v678 = vld [vmem:[%s185 + $0x60] sm:$0xf]
        %v679 = vld [vmem:[%s185 + $0x64] sm:$0xf]
        %v680 = vld [vmem:[%s185 + $0x68] sm:$0xf]
        %v681 = vld [vmem:[%s185 + $0x6c] sm:$0xf]
        %v682 = vld [vmem:[%s185 + $0x70] sm:$0x1]
        %v683 = vld [vmem:[#allocation2] sm:$0xff]
        %v684 = vld [vmem:[#allocation2 + $0x8] sm:$0xff]
        %v685 = vld [vmem:[#allocation2 + $0x10] sm:$0xff]
        %v686 = vld [vmem:[#allocation2 + $0x18] sm:$0xff]
        %v687 = vld [vmem:[#allocation2 + $0x20] sm:$0xff]
        %v688 = vld [vmem:[#allocation2 + $0x28] sm:$0xff]
        %v689 = vld [vmem:[#allocation2 + $0x30] sm:$0xff]
        %v690 = vld [vmem:[#allocation2 + $0x38] sm:$0xff]
        %v691 = vld [vmem:[#allocation2 + $0x40] sm:$0xff]
        %v692 = vld [vmem:[#allocation2 + $0x48] sm:$0xff]
        %v693 = vld [vmem:[#allocation2 + $0x50] sm:$0xff]
        %v694 = vld [vmem:[#allocation2 + $0x58] sm:$0xff]
        %v695 = vld [vmem:[#allocation2 + $0x60] sm:$0xff]
        %v696 = vld [vmem:[#allocation2 + $0x68] sm:$0xff]
        %v697 = vld [vmem:[#allocation2 + $0x70] sm:$0xff]
        %v698 = vld [vmem:[#allocation2 + $0x78] sm:$0xff]
        %v699 = vld [vmem:[#allocation2 + $0x80] sm:$0xff]
        %v700 = vld [vmem:[#allocation2 + $0x88] sm:$0xff]
        %v701 = vld [vmem:[#allocation2 + $0x90] sm:$0xff]
        %v702 = vld [vmem:[#allocation2 + $0x98] sm:$0xff]
        %v703 = vld [vmem:[#allocation2 + $0xa0] sm:$0xff]
        %v704 = vld [vmem:[#allocation2 + $0xa8] sm:$0xff]
        %v705 = vld [vmem:[#allocation2 + $0xb0] sm:$0xff]
        %v706 = vld [vmem:[#allocation2 + $0xb8] sm:$0xff]
        %v707 = vld [vmem:[#allocation2 + $0xc0] sm:$0xff]
        %v708 = vld [vmem:[#allocation2 + $0xc8] sm:$0xff]
        %v709 = vld [vmem:[#allocation2 + $0xd0] sm:$0xff]
        %v710 = vld [vmem:[#allocation2 + $0xd8] sm:$0xff]
        %s711 = scalar_lea.vmem %s194, 64 [#allocation6]
        %v712 = vld [vmem:[%s711] sm:$0xf]
        %v713 = vld [vmem:[%s711 + $0x4] sm:$0xf]
        %v714 = vld [vmem:[%s711 + $0x8] sm:$0xf]
        %v715 = vld [vmem:[%s711 + $0xc] sm:$0xf]
        %v716 = vld [vmem:[%s711 + $0x10] sm:$0xf]
        %v717 = vld [vmem:[%s711 + $0x14] sm:$0xf]
        %v718 = vld [vmem:[%s711 + $0x18] sm:$0xf]
        %v719 = vld [vmem:[%s711 + $0x1c] sm:$0xf]
        %v720 = vld [vmem:[%s711 + $0x20] sm:$0xf]
        %v721 = vld [vmem:[%s711 + $0x24] sm:$0xf]
        %v722 = vld [vmem:[%s711 + $0x28] sm:$0xf]
        %v723 = vld [vmem:[%s711 + $0x2c] sm:$0xf]
        %v724 = vld [vmem:[%s711 + $0x30] sm:$0xf]
        %v725 = vld [vmem:[%s711 + $0x34] sm:$0xf]
        %v726 = vld [vmem:[%s711 + $0x38] sm:$0xf]
        %v727 = vld [vmem:[%s711 + $0x3c] sm:$0xf]
        %v757 = vunpack.c.l.b16 %v654
        %v758 = vunpack.c.l.b16 %v655
        %v759 = vunpack.c.l.b16 %v656
        %v760 = vunpack.c.l.b16 %v657
        %v761 = vunpack.c.l.b16 %v658
        %v762 = vunpack.c.l.b16 %v659
        %v763 = vunpack.c.l.b16 %v660
        %v764 = vunpack.c.l.b16 %v661
        %v765 = vunpack.c.l.b16 %v662
        %v766 = vunpack.c.l.b16 %v663
        %v767 = vunpack.c.l.b16 %v664
        %v768 = vunpack.c.l.b16 %v665
        %v769 = vunpack.c.l.b16 %v666
        %v770 = vunpack.c.l.b16 %v667
        %v771 = vunpack.c.l.b16 %v668
        %v772 = vunpack.c.l.b16 %v669
        %v773 = vunpack.c.l.b16 %v670
        %v774 = vunpack.c.l.b16 %v671
        %v775 = vunpack.c.l.b16 %v672
        %v776 = vunpack.c.l.b16 %v673
        %v777 = vunpack.c.l.b16 %v674
        %v778 = vunpack.c.l.b16 %v675
        %v779 = vunpack.c.l.b16 %v676
        %v780 = vunpack.c.l.b16 %v677
        %v781 = vunpack.c.l.b16 %v678
        %v782 = vunpack.c.l.b16 %v679
        %v783 = vunpack.c.l.b16 %v680
        %v784 = vunpack.c.l.b16 %v681
        %v785 = vunpack.c.l.b16 %v682
        %v786 = vpack.c.b16 %v758, %v757
        %v787 = vpack.c.b16 %v760, %v759
        %v788 = vpack.c.b16 %v762, %v761
        %v789 = vpack.c.b16 %v764, %v763
        %v790 = vpack.c.b16 %v766, %v765
        %v791 = vpack.c.b16 %v768, %v767
        %v792 = vpack.c.b16 %v770, %v769
        %v793 = vpack.c.b16 %v772, %v771
        %v794 = vpack.c.b16 %v774, %v773
        %v795 = vpack.c.b16 %v776, %v775
        %v796 = vpack.c.b16 %v778, %v777
        %v797 = vpack.c.b16 %v780, %v779
        %v798 = vpack.c.b16 %v782, %v781
        %v799 = vpack.c.b16 %v784, %v783
        %v800 = vpack.c.b16 %v785, %v785
        %vm801 = vsmask.f32 7424
        %v803 = vshrl.u32 %v786, 16
        %v805 = vshll.u32 %v786, 16
        %v807 = vrot.slane %v805, 1
        %v808 = vor.u32 %v803, %v807
        %v810 = vshll.u32 %v787, 16
        %v812 = vrot.slane %v810, 1
        %v813 = vsel %vm801, %v808, %v812
        %v814 = vshrl.u32 %v787, 16
        %v816 = vor.u32 %v814, %v812
        %v818 = vshll.u32 %v788, 16
        %v820 = vrot.slane %v818, 1
        %v821 = vsel %vm801, %v816, %v820
        %v822 = vshrl.u32 %v788, 16
        %v824 = vor.u32 %v822, %v820
        %v826 = vshll.u32 %v789, 16
        %v828 = vrot.slane %v826, 1
        %v829 = vsel %vm801, %v824, %v828
        %v830 = vshrl.u32 %v789, 16
        %v832 = vor.u32 %v830, %v828
        %v834 = vshll.u32 %v790, 16
        %v836 = vrot.slane %v834, 1
        %v837 = vsel %vm801, %v832, %v836
        %v838 = vshrl.u32 %v790, 16
        %v840 = vor.u32 %v838, %v836
        %v842 = vshll.u32 %v791, 16
        %v844 = vrot.slane %v842, 1
        %v845 = vsel %vm801, %v840, %v844
        %v846 = vshrl.u32 %v791, 16
        %v848 = vor.u32 %v846, %v844
        %v850 = vshll.u32 %v792, 16
        %v852 = vrot.slane %v850, 1
        %v853 = vsel %vm801, %v848, %v852
        %v854 = vshrl.u32 %v792, 16
        %v856 = vor.u32 %v854, %v852
        %v858 = vshll.u32 %v793, 16
        %v860 = vrot.slane %v858, 1
        %v861 = vsel %vm801, %v856, %v860
        %v862 = vshrl.u32 %v793, 16
        %v864 = vor.u32 %v862, %v860
        %v866 = vshll.u32 %v794, 16
        %v868 = vrot.slane %v866, 1
        %v869 = vsel %vm801, %v864, %v868
        %v870 = vshrl.u32 %v794, 16
        %v872 = vor.u32 %v870, %v868
        %v874 = vshll.u32 %v795, 16
        %v876 = vrot.slane %v874, 1
        %v877 = vsel %vm801, %v872, %v876
        %v878 = vshrl.u32 %v795, 16
        %v880 = vor.u32 %v878, %v876
        %v882 = vshll.u32 %v796, 16
        %v884 = vrot.slane %v882, 1
        %v885 = vsel %vm801, %v880, %v884
        %v886 = vshrl.u32 %v796, 16
        %v888 = vor.u32 %v886, %v884
        %v890 = vshll.u32 %v797, 16
        %v892 = vrot.slane %v890, 1
        %v893 = vsel %vm801, %v888, %v892
        %v894 = vshrl.u32 %v797, 16
        %v896 = vor.u32 %v894, %v892
        %v898 = vshll.u32 %v798, 16
        %v900 = vrot.slane %v898, 1
        %v901 = vsel %vm801, %v896, %v900
        %v902 = vshrl.u32 %v798, 16
        %v904 = vor.u32 %v902, %v900
        %v906 = vshll.u32 %v799, 16
        %v908 = vrot.slane %v906, 1
        %v909 = vsel %vm801, %v904, %v908
        %v910 = vshrl.u32 %v799, 16
        %v912 = vor.u32 %v910, %v908
        %v914 = vshll.u32 %v800, 16
        %v916 = vrot.slane %v914, 1
        %v917 = vsel %vm801, %v912, %v916
        %v948 = vunpack.c.l.b16 %v712
        %v949 = vunpack.c.l.b16 %v713
        %v950 = vunpack.c.l.b16 %v714
        %v951 = vunpack.c.l.b16 %v715
        %v952 = vunpack.c.l.b16 %v716
        %v953 = vunpack.c.l.b16 %v717
        %v954 = vunpack.c.l.b16 %v718
        %v955 = vunpack.c.l.b16 %v719
        %v956 = vunpack.c.l.b16 %v720
        %v957 = vunpack.c.l.b16 %v721
        %v958 = vunpack.c.l.b16 %v722
        %v959 = vunpack.c.l.b16 %v723
        %v960 = vunpack.c.l.b16 %v724
        %v961 = vunpack.c.l.b16 %v725
        %v962 = vunpack.c.l.b16 %v726
        %v963 = vunpack.c.l.b16 %v727
        %v964 = vpack.c.b16 %v949, %v948
        %v965 = vpack.c.b16 %v951, %v950
        %v966 = vpack.c.b16 %v953, %v952
        %v967 = vpack.c.b16 %v955, %v954
        %v968 = vpack.c.b16 %v957, %v956
        %v969 = vpack.c.b16 %v959, %v958
        %v970 = vpack.c.b16 %v961, %v960
        %v971 = vpack.c.b16 %v963, %v962
        %980 = vmatprep.subr.bf16.mxu0 0
        %981 = vmatpush1.bf16.msra.mxu0 %v964
        %982 = vmatprep.subr.bf16.mxu0 0
        %983 = vmatpush1.bf16.msra.mxu0 %v965
        %984 = vmatprep.subr.bf16.mxu0 0
        %985 = vmatpush1.bf16.msra.mxu0 %v966
        %986 = vmatprep.subr.bf16.mxu0 0
        %987 = vmatpush1.bf16.msra.mxu0 %v967
        %988 = vmatprep.subr.bf16.mxu0 0
        %989 = vmatpush1.bf16.msra.mxu0 %v968
        %990 = vmatprep.subr.bf16.mxu0 0
        %991 = vmatpush1.bf16.msra.mxu0 %v969
        %992 = vmatprep.subr.bf16.mxu0 0
        %993 = vmatpush1.bf16.msra.mxu0 %v970
        %994 = vmatprep.subr.bf16.mxu0 0
        %995 = vmatpush1.bf16.msra.mxu0 %v971
        %996 = vmatprep.subr.bf16.mxu0 0
        %997 = vmatpush1.bf16.msra.mxu0 0
        %998 = vmatprep.subr.bf16.mxu0 0
        %999 = vmatpush1.bf16.msra.mxu0 0
        %1000 = vmatprep.subr.bf16.mxu0 0
        %1001 = vmatpush1.bf16.msra.mxu0 0
        %1002 = vmatprep.subr.bf16.mxu0 0
        %1003 = vmatpush1.bf16.msra.mxu0 0
        %1004 = vmatprep.subr.bf16.mxu0 0
        %1005 = vmatpush1.bf16.msra.mxu0 0
        %1006 = vmatprep.subr.bf16.mxu0 0
        %1007 = vmatpush1.bf16.msra.mxu0 0
        %1008 = vmatprep.subr.bf16.mxu0 0
        %1009 = vmatpush1.bf16.msra.mxu0 0
        %1010 = vmatprep.subr.bf16.mxu0 0
        %1011 = vmatpush1.bf16.msra.mxu0 0
        %1012 = vmatprep.mubr.bf16.mxu0 0
        %1013 = vmatmul.mubr.bf16.gmra.mrb[0].mxu0 %v813
        %v1014 = vpop.f32.mrb[0].mxu0
        %v1015 = vadd.f32 0.0, %v1014
        %v1016 = vpop.f32.mrb[0].mxu0
        %v1017 = vpop.f32.mrb[0].mxu0
        %v1018 = vadd.f32 0.0, %v1017
        %v1019 = vpop.f32.mrb[0].mxu0
        %1020 = vmatprep.mubr.bf16.mxu0 0
        %1021 = vmatmul.mubr.bf16.gmra.mrb[0].mxu0 %v821
        %v1022 = vpop.f32.mrb[0].mxu0
        %v1023 = vadd.f32 0.0, %v1022
        %v1024 = vpop.f32.mrb[0].mxu0
        %v1025 = vpop.f32.mrb[0].mxu0
        %v1026 = vadd.f32 0.0, %v1025
        %v1027 = vpop.f32.mrb[0].mxu0
        %1028 = vmatprep.mubr.bf16.mxu0 0
        %1029 = vmatmul.mubr.bf16.gmra.mrb[0].mxu0 %v829
        %v1030 = vpop.f32.mrb[0].mxu0
        %v1031 = vadd.f32 0.0, %v1030
        %v1032 = vpop.f32.mrb[0].mxu0
        %v1033 = vpop.f32.mrb[0].mxu0
        %v1034 = vadd.f32 0.0, %v1033
        %v1035 = vpop.f32.mrb[0].mxu0
        %1036 = vmatprep.mubr.bf16.mxu0 0
        %1037 = vmatmul.mubr.bf16.gmra.mrb[0].mxu0 %v837
        %v1038 = vpop.f32.mrb[0].mxu0
        %v1039 = vadd.f32 0.0, %v1038
        %v1040 = vpop.f32.mrb[0].mxu0
        %v1041 = vpop.f32.mrb[0].mxu0
        %v1042 = vadd.f32 0.0, %v1041
        %v1043 = vpop.f32.mrb[0].mxu0
        %1044 = vmatprep.mubr.bf16.mxu0 0
        %1045 = vmatmul.mubr.bf16.gmra.mrb[0].mxu0 %v845
        %v1046 = vpop.f32.mrb[0].mxu0
        %v1047 = vadd.f32 0.0, %v1046
        %v1048 = vpop.f32.mrb[0].mxu0
        %v1049 = vpop.f32.mrb[0].mxu0
        %v1050 = vadd.f32 0.0, %v1049
        %v1051 = vpop.f32.mrb[0].mxu0
        %1052 = vmatprep.mubr.bf16.mxu0 0
        %1053 = vmatmul.mubr.bf16.gmra.mrb[0].mxu0 %v853
        %v1054 = vpop.f32.mrb[0].mxu0
        %v1055 = vadd.f32 0.0, %v1054
        %v1056 = vpop.f32.mrb[0].mxu0
        %v1057 = vpop.f32.mrb[0].mxu0
        %v1058 = vadd.f32 0.0, %v1057
        %v1059 = vpop.f32.mrb[0].mxu0
        %1060 = vmatprep.mubr.bf16.mxu0 0
        %1061 = vmatmul.mubr.bf16.gmra.mrb[0].mxu0 %v861
        %v1062 = vpop.f32.mrb[0].mxu0
        %v1063 = vadd.f32 0.0, %v1062
        %v1064 = vpop.f32.mrb[0].mxu0
        %v1065 = vpop.f32.mrb[0].mxu0
        %v1066 = vadd.f32 0.0, %v1065
        %v1067 = vpop.f32.mrb[0].mxu0
        %1068 = vmatprep.mubr.bf16.mxu0 0
        %1069 = vmatmul.mubr.bf16.gmra.mrb[0].mxu0 %v869
        %v1070 = vpop.f32.mrb[0].mxu0
        %v1071 = vadd.f32 0.0, %v1070
        %v1072 = vpop.f32.mrb[0].mxu0
        %v1073 = vpop.f32.mrb[0].mxu0
        %v1074 = vadd.f32 0.0, %v1073
        %v1075 = vpop.f32.mrb[0].mxu0
        %1076 = vmatprep.mubr.bf16.mxu0 0
        %1077 = vmatmul.mubr.bf16.gmra.mrb[0].mxu0 %v877
        %v1078 = vpop.f32.mrb[0].mxu0
        %v1079 = vadd.f32 0.0, %v1078
        %v1080 = vpop.f32.mrb[0].mxu0
        %v1081 = vpop.f32.mrb[0].mxu0
        %v1082 = vadd.f32 0.0, %v1081
        %v1083 = vpop.f32.mrb[0].mxu0
        %1084 = vmatprep.mubr.bf16.mxu0 0
        %1085 = vmatmul.mubr.bf16.gmra.mrb[0].mxu0 %v885
        %v1086 = vpop.f32.mrb[0].mxu0
        %v1087 = vadd.f32 0.0, %v1086
        %v1088 = vpop.f32.mrb[0].mxu0
        %v1089 = vpop.f32.mrb[0].mxu0
        %v1090 = vadd.f32 0.0, %v1089
        %v1091 = vpop.f32.mrb[0].mxu0
        %1092 = vmatprep.mubr.bf16.mxu0 0
        %1093 = vmatmul.mubr.bf16.gmra.mrb[0].mxu0 %v893
        %v1094 = vpop.f32.mrb[0].mxu0
        %v1095 = vadd.f32 0.0, %v1094
        %v1096 = vpop.f32.mrb[0].mxu0
        %v1097 = vpop.f32.mrb[0].mxu0
        %v1098 = vadd.f32 0.0, %v1097
        %v1099 = vpop.f32.mrb[0].mxu0
        %1100 = vmatprep.mubr.bf16.mxu0 0
        %1101 = vmatmul.mubr.bf16.gmra.mrb[0].mxu0 %v901
        %v1102 = vpop.f32.mrb[0].mxu0
        %v1103 = vadd.f32 0.0, %v1102
        %v1104 = vpop.f32.mrb[0].mxu0
        %v1105 = vpop.f32.mrb[0].mxu0
        %v1106 = vadd.f32 0.0, %v1105
        %v1107 = vpop.f32.mrb[0].mxu0
        %1108 = vmatprep.mubr.bf16.mxu0 0
        %1109 = vmatmul.mubr.bf16.gmra.mrb[0].mxu0 %v909
        %v1110 = vpop.f32.mrb[0].mxu0
        %v1111 = vadd.f32 0.0, %v1110
        %v1112 = vpop.f32.mrb[0].mxu0
        %v1113 = vpop.f32.mrb[0].mxu0
        %v1114 = vadd.f32 0.0, %v1113
        %v1115 = vpop.f32.mrb[0].mxu0
        %1116 = vmatprep.mubr.bf16.mxu0 0
        %1117 = vmatmul.mubr.bf16.gmra.mrb[0].mxu0 %v917
        %v1118 = vpop.f32.mrb[0].mxu0
        %v1119 = vadd.f32 0.0, %v1118
        %v1120 = vpop.f32.mrb[0].mxu0
        %v1121 = vpop.f32.mrb[0].mxu0
        %v1122 = vadd.f32 0.0, %v1121
        %v1123 = vpop.f32.mrb[0].mxu0
        %1124 = vdwg.mxu0
        %v1125 = vadd.f32 %v683, %v1015
        %v1126 = vadd.f32 %v684, %v1018
        %v1127 = vadd.f32 %v685, %v1023
        %v1128 = vadd.f32 %v686, %v1026
        %v1129 = vadd.f32 %v687, %v1031
        %v1130 = vadd.f32 %v688, %v1034
        %v1131 = vadd.f32 %v689, %v1039
        %v1132 = vadd.f32 %v690, %v1042
        %v1133 = vadd.f32 %v691, %v1047
        %v1134 = vadd.f32 %v692, %v1050
        %v1135 = vadd.f32 %v693, %v1055
        %v1136 = vadd.f32 %v694, %v1058
        %v1137 = vadd.f32 %v695, %v1063
        %v1138 = vadd.f32 %v696, %v1066
        %v1139 = vadd.f32 %v697, %v1071
        %v1140 = vadd.f32 %v698, %v1074
        %v1141 = vadd.f32 %v699, %v1079
        %v1142 = vadd.f32 %v700, %v1082
        %v1143 = vadd.f32 %v701, %v1087
        %v1144 = vadd.f32 %v702, %v1090
        %v1145 = vadd.f32 %v703, %v1095
        %v1146 = vadd.f32 %v704, %v1098
        %v1147 = vadd.f32 %v705, %v1103
        %v1148 = vadd.f32 %v706, %v1106
        %v1149 = vadd.f32 %v707, %v1111
        %v1150 = vadd.f32 %v708, %v1114
        %v1151 = vadd.f32 %v709, %v1119
        %v1152 = vadd.f32 %v710, %v1122
        %1153 = vst [vmem:[#allocation2] sm:$0xff] %v1125
        %1154 = vst [vmem:[#allocation2 + $0x8] sm:$0xff] %v1126
        %1155 = vst [vmem:[#allocation2 + $0x10] sm:$0xff] %v1127
        %1156 = vst [vmem:[#allocation2 + $0x18] sm:$0xff] %v1128
        %1157 = vst [vmem:[#allocation2 + $0x20] sm:$0xff] %v1129
        %1158 = vst [vmem:[#allocation2 + $0x28] sm:$0xff] %v1130
        %1159 = vst [vmem:[#allocation2 + $0x30] sm:$0xff] %v1131
        %1160 = vst [vmem:[#allocation2 + $0x38] sm:$0xff] %v1132
        %1161 = vst [vmem:[#allocation2 + $0x40] sm:$0xff] %v1133
        %1162 = vst [vmem:[#allocation2 + $0x48] sm:$0xff] %v1134
        %1163 = vst [vmem:[#allocation2 + $0x50] sm:$0xff] %v1135
        %1164 = vst [vmem:[#allocation2 + $0x58] sm:$0xff] %v1136
        %1165 = vst [vmem:[#allocation2 + $0x60] sm:$0xff] %v1137
        %1166 = vst [vmem:[#allocation2 + $0x68] sm:$0xff] %v1138
        %1167 = vst [vmem:[#allocation2 + $0x70] sm:$0xff] %v1139
        %1168 = vst [vmem:[#allocation2 + $0x78] sm:$0xff] %v1140
        %1169 = vst [vmem:[#allocation2 + $0x80] sm:$0xff] %v1141
        %1170 = vst [vmem:[#allocation2 + $0x88] sm:$0xff] %v1142
        %1171 = vst [vmem:[#allocation2 + $0x90] sm:$0xff] %v1143
        %1172 = vst [vmem:[#allocation2 + $0x98] sm:$0xff] %v1144
        %1173 = vst [vmem:[#allocation2 + $0xa0] sm:$0xff] %v1145
        %1174 = vst [vmem:[#allocation2 + $0xa8] sm:$0xff] %v1146
        %1175 = vst [vmem:[#allocation2 + $0xb0] sm:$0xff] %v1147
        %1176 = vst [vmem:[#allocation2 + $0xb8] sm:$0xff] %v1148
        %1177 = vst [vmem:[#allocation2 + $0xc0] sm:$0xff] %v1149
        %1178 = vst [vmem:[#allocation2 + $0xc8] sm:$0xff] %v1150
        %1179 = vst [vmem:[#allocation2 + $0xd0] sm:$0xff] %v1151
        %1180 = vst [vmem:[#allocation2 + $0xd8] sm:$0xff] %v1152
        %v1181 = vld [vmem:[%s185] sm:$0xe]
        %v1182 = vld [vmem:[%s185 + $0x4] sm:$0xf]
        %v1183 = vld [vmem:[%s185 + $0x8] sm:$0xf]
        %v1184 = vld [vmem:[%s185 + $0xc] sm:$0xf]
        %v1185 = vld [vmem:[%s185 + $0x10] sm:$0xf]
        %v1186 = vld [vmem:[%s185 + $0x14] sm:$0xf]
        %v1187 = vld [vmem:[%s185 + $0x18] sm:$0xf]
        %v1188 = vld [vmem:[%s185 + $0x1c] sm:$0xf]
        %v1189 = vld [vmem:[%s185 + $0x20] sm:$0xf]
        %v1190 = vld [vmem:[%s185 + $0x24] sm:$0xf]
        %v1191 = vld [vmem:[%s185 + $0x28] sm:$0xf]
        %v1192 = vld [vmem:[%s185 + $0x2c] sm:$0xf]
        %v1193 = vld [vmem:[%s185 + $0x30] sm:$0xf]
        %v1194 = vld [vmem:[%s185 + $0x34] sm:$0xf]
        %v1195 = vld [vmem:[%s185 + $0x38] sm:$0xf]
        %v1196 = vld [vmem:[%s185 + $0x3c] sm:$0xf]
        %v1197 = vld [vmem:[%s185 + $0x40] sm:$0xf]
        %v1198 = vld [vmem:[%s185 + $0x44] sm:$0xf]
        %v1199 = vld [vmem:[%s185 + $0x48] sm:$0xf]
        %v1200 = vld [vmem:[%s185 + $0x4c] sm:$0xf]
        %v1201 = vld [vmem:[%s185 + $0x50] sm:$0xf]
        %v1202 = vld [vmem:[%s185 + $0x54] sm:$0xf]
        %v1203 = vld [vmem:[%s185 + $0x58] sm:$0xf]
        %v1204 = vld [vmem:[%s185 + $0x5c] sm:$0xf]
        %v1205 = vld [vmem:[%s185 + $0x60] sm:$0xf]
        %v1206 = vld [vmem:[%s185 + $0x64] sm:$0xf]
        %v1207 = vld [vmem:[%s185 + $0x68] sm:$0xf]
        %v1208 = vld [vmem:[%s185 + $0x6c] sm:$0xf]
        %v1209 = vld [vmem:[%s185 + $0x70] sm:$0x1]
        %v1210 = vld [vmem:[#allocation2] sm:$0xff]
        %v1211 = vld [vmem:[#allocation2 + $0x8] sm:$0xff]
        %v1212 = vld [vmem:[#allocation2 + $0x10] sm:$0xff]
        %v1213 = vld [vmem:[#allocation2 + $0x18] sm:$0xff]
        %v1214 = vld [vmem:[#allocation2 + $0x20] sm:$0xff]
        %v1215 = vld [vmem:[#allocation2 + $0x28] sm:$0xff]
        %v1216 = vld [vmem:[#allocation2 + $0x30] sm:$0xff]
        %v1217 = vld [vmem:[#allocation2 + $0x38] sm:$0xff]
        %v1218 = vld [vmem:[#allocation2 + $0x40] sm:$0xff]
        %v1219 = vld [vmem:[#allocation2 + $0x48] sm:$0xff]
        %v1220 = vld [vmem:[#allocation2 + $0x50] sm:$0xff]
        %v1221 = vld [vmem:[#allocation2 + $0x58] sm:$0xff]
        %v1222 = vld [vmem:[#allocation2 + $0x60] sm:$0xff]
        %v1223 = vld [vmem:[#allocation2 + $0x68] sm:$0xff]
        %v1224 = vld [vmem:[#allocation2 + $0x70] sm:$0xff]
        %v1225 = vld [vmem:[#allocation2 + $0x78] sm:$0xff]
        %v1226 = vld [vmem:[#allocation2 + $0x80] sm:$0xff]
        %v1227 = vld [vmem:[#allocation2 + $0x88] sm:$0xff]
        %v1228 = vld [vmem:[#allocation2 + $0x90] sm:$0xff]
        %v1229 = vld [vmem:[#allocation2 + $0x98] sm:$0xff]
        %v1230 = vld [vmem:[#allocation2 + $0xa0] sm:$0xff]
        %v1231 = vld [vmem:[#allocation2 + $0xa8] sm:$0xff]
        %v1232 = vld [vmem:[#allocation2 + $0xb0] sm:$0xff]
        %v1233 = vld [vmem:[#allocation2 + $0xb8] sm:$0xff]
        %v1234 = vld [vmem:[#allocation2 + $0xc0] sm:$0xff]
        %v1235 = vld [vmem:[#allocation2 + $0xc8] sm:$0xff]
        %v1236 = vld [vmem:[#allocation2 + $0xd0] sm:$0xff]
        %v1237 = vld [vmem:[#allocation2 + $0xd8] sm:$0xff]
        %s1238 = scalar_lea.vmem %s194, 128 [#allocation6]
        %v1239 = vld [vmem:[%s1238] sm:$0xf]
        %v1240 = vld [vmem:[%s1238 + $0x4] sm:$0xf]
        %v1241 = vld [vmem:[%s1238 + $0x8] sm:$0xf]
        %v1242 = vld [vmem:[%s1238 + $0xc] sm:$0xf]
        %v1243 = vld [vmem:[%s1238 + $0x10] sm:$0xf]
        %v1244 = vld [vmem:[%s1238 + $0x14] sm:$0xf]
        %v1245 = vld [vmem:[%s1238 + $0x18] sm:$0xf]
        %v1246 = vld [vmem:[%s1238 + $0x1c] sm:$0xf]
        %v1247 = vld [vmem:[%s1238 + $0x20] sm:$0xf]
        %v1248 = vld [vmem:[%s1238 + $0x24] sm:$0xf]
        %v1249 = vld [vmem:[%s1238 + $0x28] sm:$0xf]
        %v1250 = vld [vmem:[%s1238 + $0x2c] sm:$0xf]
        %v1251 = vld [vmem:[%s1238 + $0x30] sm:$0xf]
        %v1252 = vld [vmem:[%s1238 + $0x34] sm:$0xf]
        %v1253 = vld [vmem:[%s1238 + $0x38] sm:$0xf]
        %v1254 = vld [vmem:[%s1238 + $0x3c] sm:$0xf]
        %v1284 = vunpack.c.l.b16 %v1181
        %v1285 = vunpack.c.l.b16 %v1182
        %v1286 = vunpack.c.l.b16 %v1183
        %v1287 = vunpack.c.l.b16 %v1184
        %v1288 = vunpack.c.l.b16 %v1185
        %v1289 = vunpack.c.l.b16 %v1186
        %v1290 = vunpack.c.l.b16 %v1187
        %v1291 = vunpack.c.l.b16 %v1188
        %v1292 = vunpack.c.l.b16 %v1189
        %v1293 = vunpack.c.l.b16 %v1190
        %v1294 = vunpack.c.l.b16 %v1191
        %v1295 = vunpack.c.l.b16 %v1192
        %v1296 = vunpack.c.l.b16 %v1193
        %v1297 = vunpack.c.l.b16 %v1194
        %v1298 = vunpack.c.l.b16 %v1195
        %v1299 = vunpack.c.l.b16 %v1196
        %v1300 = vunpack.c.l.b16 %v1197
        %v1301 = vunpack.c.l.b16 %v1198
        %v1302 = vunpack.c.l.b16 %v1199
        %v1303 = vunpack.c.l.b16 %v1200
        %v1304 = vunpack.c.l.b16 %v1201
        %v1305 = vunpack.c.l.b16 %v1202
        %v1306 = vunpack.c.l.b16 %v1203
        %v1307 = vunpack.c.l.b16 %v1204
        %v1308 = vunpack.c.l.b16 %v1205
        %v1309 = vunpack.c.l.b16 %v1206
        %v1310 = vunpack.c.l.b16 %v1207
        %v1311 = vunpack.c.l.b16 %v1208
        %v1312 = vunpack.c.l.b16 %v1209
        %v1313 = vpack.c.b16 %v1285, %v1284
        %v1314 = vpack.c.b16 %v1287, %v1286
        %v1315 = vpack.c.b16 %v1289, %v1288
        %v1316 = vpack.c.b16 %v1291, %v1290
        %v1317 = vpack.c.b16 %v1293, %v1292
        %v1318 = vpack.c.b16 %v1295, %v1294
        %v1319 = vpack.c.b16 %v1297, %v1296
        %v1320 = vpack.c.b16 %v1299, %v1298
        %v1321 = vpack.c.b16 %v1301, %v1300
        %v1322 = vpack.c.b16 %v1303, %v1302
        %v1323 = vpack.c.b16 %v1305, %v1304
        %v1324 = vpack.c.b16 %v1307, %v1306
        %v1325 = vpack.c.b16 %v1309, %v1308
        %v1326 = vpack.c.b16 %v1311, %v1310
        %v1327 = vpack.c.b16 %v1312, %v1312
        %vm1328 = vcmask 1046528
        %v1329 = vrot.slane %v1313, 1
        %v1330 = vrot.slane %v1314, 1
        %v1331 = vsel %vm1328, %v1329, %v1330
        %v1332 = vrot.slane %v1315, 1
        %v1333 = vsel %vm1328, %v1330, %v1332
        %v1334 = vrot.slane %v1316, 1
        %v1335 = vsel %vm1328, %v1332, %v1334
        %v1336 = vrot.slane %v1317, 1
        %v1337 = vsel %vm1328, %v1334, %v1336
        %v1338 = vrot.slane %v1318, 1
        %v1339 = vsel %vm1328, %v1336, %v1338
        %v1340 = vrot.slane %v1319, 1
        %v1341 = vsel %vm1328, %v1338, %v1340
        %v1342 = vrot.slane %v1320, 1
        %v1343 = vsel %vm1328, %v1340, %v1342
        %v1344 = vrot.slane %v1321, 1
        %v1345 = vsel %vm1328, %v1342, %v1344
        %v1346 = vrot.slane %v1322, 1
        %v1347 = vsel %vm1328, %v1344, %v1346
        %v1348 = vrot.slane %v1323, 1
        %v1349 = vsel %vm1328, %v1346, %v1348
        %v1350 = vrot.slane %v1324, 1
        %v1351 = vsel %vm1328, %v1348, %v1350
        %v1352 = vrot.slane %v1325, 1
        %v1353 = vsel %vm1328, %v1350, %v1352
        %v1354 = vrot.slane %v1326, 1
        %v1355 = vsel %vm1328, %v1352, %v1354
        %v1356 = vrot.slane %v1327, 1
        %v1357 = vsel %vm1328, %v1354, %v1356
        %v1388 = vunpack.c.l.b16 %v1239
        %v1389 = vunpack.c.l.b16 %v1240
        %v1390 = vunpack.c.l.b16 %v1241
        %v1391 = vunpack.c.l.b16 %v1242
        %v1392 = vunpack.c.l.b16 %v1243
        %v1393 = vunpack.c.l.b16 %v1244
        %v1394 = vunpack.c.l.b16 %v1245
        %v1395 = vunpack.c.l.b16 %v1246
        %v1396 = vunpack.c.l.b16 %v1247
        %v1397 = vunpack.c.l.b16 %v1248
        %v1398 = vunpack.c.l.b16 %v1249
        %v1399 = vunpack.c.l.b16 %v1250
        %v1400 = vunpack.c.l.b16 %v1251
        %v1401 = vunpack.c.l.b16 %v1252
        %v1402 = vunpack.c.l.b16 %v1253
        %v1403 = vunpack.c.l.b16 %v1254
        %v1404 = vpack.c.b16 %v1389, %v1388
        %v1405 = vpack.c.b16 %v1391, %v1390
        %v1406 = vpack.c.b16 %v1393, %v1392
        %v1407 = vpack.c.b16 %v1395, %v1394
        %v1408 = vpack.c.b16 %v1397, %v1396
        %v1409 = vpack.c.b16 %v1399, %v1398
        %v1410 = vpack.c.b16 %v1401, %v1400
        %v1411 = vpack.c.b16 %v1403, %v1402
        %1420 = vmatprep.subr.bf16.mxu0 0
        %1421 = vmatpush1.bf16.msra.mxu0 %v1404
        %1422 = vmatprep.subr.bf16.mxu0 0
        %1423 = vmatpush1.bf16.msra.mxu0 %v1405
        %1424 = vmatprep.subr.bf16.mxu0 0
        %1425 = vmatpush1.bf16.msra.mxu0 %v1406
        %1426 = vmatprep.subr.bf16.mxu0 0
        %1427 = vmatpush1.bf16.msra.mxu0 %v1407
        %1428 = vmatprep.subr.bf16.mxu0 0
        %1429 = vmatpush1.bf16.msra.mxu0 %v1408
        %1430 = vmatprep.subr.bf16.mxu0 0
        %1431 = vmatpush1.bf16.msra.mxu0 %v1409
        %1432 = vmatprep.subr.bf16.mxu0 0
        %1433 = vmatpush1.bf16.msra.mxu0 %v1410
        %1434 = vmatprep.subr.bf16.mxu0 0
        %1435 = vmatpush1.bf16.msra.mxu0 %v1411
        %1436 = vmatprep.subr.bf16.mxu0 0
        %1437 = vmatpush1.bf16.msra.mxu0 0
        %1438 = vmatprep.subr.bf16.mxu0 0
        %1439 = vmatpush1.bf16.msra.mxu0 0
        %1440 = vmatprep.subr.bf16.mxu0 0
        %1441 = vmatpush1.bf16.msra.mxu0 0
        %1442 = vmatprep.subr.bf16.mxu0 0
        %1443 = vmatpush1.bf16.msra.mxu0 0
        %1444 = vmatprep.subr.bf16.mxu0 0
        %1445 = vmatpush1.bf16.msra.mxu0 0
        %1446 = vmatprep.subr.bf16.mxu0 0
        %1447 = vmatpush1.bf16.msra.mxu0 0
        %1448 = vmatprep.subr.bf16.mxu0 0
        %1449 = vmatpush1.bf16.msra.mxu0 0
        %1450 = vmatprep.subr.bf16.mxu0 0
        %1451 = vmatpush1.bf16.msra.mxu0 0
        %1452 = vmatprep.mubr.bf16.mxu0 0
        %1453 = vmatmul.mubr.bf16.gmra.mrb[0].mxu0 %v1331
        %v1454 = vpop.f32.mrb[0].mxu0
        %v1455 = vadd.f32 0.0, %v1454
        %v1456 = vpop.f32.mrb[0].mxu0
        %v1457 = vpop.f32.mrb[0].mxu0
        %v1458 = vadd.f32 0.0, %v1457
        %v1459 = vpop.f32.mrb[0].mxu0
        %1460 = vmatprep.mubr.bf16.mxu0 0
        %1461 = vmatmul.mubr.bf16.gmra.mrb[0].mxu0 %v1333
        %v1462 = vpop.f32.mrb[0].mxu0
        %v1463 = vadd.f32 0.0, %v1462
        %v1464 = vpop.f32.mrb[0].mxu0
        %v1465 = vpop.f32.mrb[0].mxu0
        %v1466 = vadd.f32 0.0, %v1465
        %v1467 = vpop.f32.mrb[0].mxu0
        %1468 = vmatprep.mubr.bf16.mxu0 0
        %1469 = vmatmul.mubr.bf16.gmra.mrb[0].mxu0 %v1335
        %v1470 = vpop.f32.mrb[0].mxu0
        %v1471 = vadd.f32 0.0, %v1470
        %v1472 = vpop.f32.mrb[0].mxu0
        %v1473 = vpop.f32.mrb[0].mxu0
        %v1474 = vadd.f32 0.0, %v1473
        %v1475 = vpop.f32.mrb[0].mxu0
        %1476 = vmatprep.mubr.bf16.mxu0 0
        %1477 = vmatmul.mubr.bf16.gmra.mrb[0].mxu0 %v1337
        %v1478 = vpop.f32.mrb[0].mxu0
        %v1479 = vadd.f32 0.0, %v1478
        %v1480 = vpop.f32.mrb[0].mxu0
        %v1481 = vpop.f32.mrb[0].mxu0
        %v1482 = vadd.f32 0.0, %v1481
        %v1483 = vpop.f32.mrb[0].mxu0
        %1484 = vmatprep.mubr.bf16.mxu0 0
        %1485 = vmatmul.mubr.bf16.gmra.mrb[0].mxu0 %v1339
        %v1486 = vpop.f32.mrb[0].mxu0
        %v1487 = vadd.f32 0.0, %v1486
        %v1488 = vpop.f32.mrb[0].mxu0
        %v1489 = vpop.f32.mrb[0].mxu0
        %v1490 = vadd.f32 0.0, %v1489
        %v1491 = vpop.f32.mrb[0].mxu0
        %1492 = vmatprep.mubr.bf16.mxu0 0
        %1493 = vmatmul.mubr.bf16.gmra.mrb[0].mxu0 %v1341
        %v1494 = vpop.f32.mrb[0].mxu0
        %v1495 = vadd.f32 0.0, %v1494
        %v1496 = vpop.f32.mrb[0].mxu0
        %v1497 = vpop.f32.mrb[0].mxu0
        %v1498 = vadd.f32 0.0, %v1497
        %v1499 = vpop.f32.mrb[0].mxu0
        %1500 = vmatprep.mubr.bf16.mxu0 0
        %1501 = vmatmul.mubr.bf16.gmra.mrb[0].mxu0 %v1343
        %v1502 = vpop.f32.mrb[0].mxu0
        %v1503 = vadd.f32 0.0, %v1502
        %v1504 = vpop.f32.mrb[0].mxu0
        %v1505 = vpop.f32.mrb[0].mxu0
        %v1506 = vadd.f32 0.0, %v1505
        %v1507 = vpop.f32.mrb[0].mxu0
        %1508 = vmatprep.mubr.bf16.mxu0 0
        %1509 = vmatmul.mubr.bf16.gmra.mrb[0].mxu0 %v1345
        %v1510 = vpop.f32.mrb[0].mxu0
        %v1511 = vadd.f32 0.0, %v1510
        %v1512 = vpop.f32.mrb[0].mxu0
        %v1513 = vpop.f32.mrb[0].mxu0
        %v1514 = vadd.f32 0.0, %v1513
        %v1515 = vpop.f32.mrb[0].mxu0
        %1516 = vmatprep.mubr.bf16.mxu0 0
        %1517 = vmatmul.mubr.bf16.gmra.mrb[0].mxu0 %v1347
        %v1518 = vpop.f32.mrb[0].mxu0
        %v1519 = vadd.f32 0.0, %v1518
        %v1520 = vpop.f32.mrb[0].mxu0
        %v1521 = vpop.f32.mrb[0].mxu0
        %v1522 = vadd.f32 0.0, %v1521
        %v1523 = vpop.f32.mrb[0].mxu0
        %1524 = vmatprep.mubr.bf16.mxu0 0
        %1525 = vmatmul.mubr.bf16.gmra.mrb[0].mxu0 %v1349
        %v1526 = vpop.f32.mrb[0].mxu0
        %v1527 = vadd.f32 0.0, %v1526
        %v1528 = vpop.f32.mrb[0].mxu0
        %v1529 = vpop.f32.mrb[0].mxu0
        %v1530 = vadd.f32 0.0, %v1529
        %v1531 = vpop.f32.mrb[0].mxu0
        %1532 = vmatprep.mubr.bf16.mxu0 0
        %1533 = vmatmul.mubr.bf16.gmra.mrb[0].mxu0 %v1351
        %v1534 = vpop.f32.mrb[0].mxu0
        %v1535 = vadd.f32 0.0, %v1534
        %v1536 = vpop.f32.mrb[0].mxu0
        %v1537 = vpop.f32.mrb[0].mxu0
        %v1538 = vadd.f32 0.0, %v1537
        %v1539 = vpop.f32.mrb[0].mxu0
        %1540 = vmatprep.mubr.bf16.mxu0 0
        %1541 = vmatmul.mubr.bf16.gmra.mrb[0].mxu0 %v1353
        %v1542 = vpop.f32.mrb[0].mxu0
        %v1543 = vadd.f32 0.0, %v1542
        %v1544 = vpop.f32.mrb[0].mxu0
        %v1545 = vpop.f32.mrb[0].mxu0
        %v1546 = vadd.f32 0.0, %v1545
        %v1547 = vpop.f32.mrb[0].mxu0
        %1548 = vmatprep.mubr.bf16.mxu0 0
        %1549 = vmatmul.mubr.bf16.gmra.mrb[0].mxu0 %v1355
        %v1550 = vpop.f32.mrb[0].mxu0
        %v1551 = vadd.f32 0.0, %v1550
        %v1552 = vpop.f32.mrb[0].mxu0
        %v1553 = vpop.f32.mrb[0].mxu0
        %v1554 = vadd.f32 0.0, %v1553
        %v1555 = vpop.f32.mrb[0].mxu0
        %1556 = vmatprep.mubr.bf16.mxu0 0
        %1557 = vmatmul.mubr.bf16.gmra.mrb[0].mxu0 %v1357
        %v1558 = vpop.f32.mrb[0].mxu0
        %v1559 = vadd.f32 0.0, %v1558
        %v1560 = vpop.f32.mrb[0].mxu0
        %v1561 = vpop.f32.mrb[0].mxu0
        %v1562 = vadd.f32 0.0, %v1561
        %v1563 = vpop.f32.mrb[0].mxu0
        %1564 = vdwg.mxu0
        %v1565 = vadd.f32 %v1210, %v1455
        %v1566 = vadd.f32 %v1211, %v1458
        %v1567 = vadd.f32 %v1212, %v1463
        %v1568 = vadd.f32 %v1213, %v1466
        %v1569 = vadd.f32 %v1214, %v1471
        %v1570 = vadd.f32 %v1215, %v1474
        %v1571 = vadd.f32 %v1216, %v1479
        %v1572 = vadd.f32 %v1217, %v1482
        %v1573 = vadd.f32 %v1218, %v1487
        %v1574 = vadd.f32 %v1219, %v1490
        %v1575 = vadd.f32 %v1220, %v1495
        %v1576 = vadd.f32 %v1221, %v1498
        %v1577 = vadd.f32 %v1222, %v1503
        %v1578 = vadd.f32 %v1223, %v1506
        %v1579 = vadd.f32 %v1224, %v1511
        %v1580 = vadd.f32 %v1225, %v1514
        %v1581 = vadd.f32 %v1226, %v1519
        %v1582 = vadd.f32 %v1227, %v1522
        %v1583 = vadd.f32 %v1228, %v1527
        %v1584 = vadd.f32 %v1229, %v1530
        %v1585 = vadd.f32 %v1230, %v1535
        %v1586 = vadd.f32 %v1231, %v1538
        %v1587 = vadd.f32 %v1232, %v1543
        %v1588 = vadd.f32 %v1233, %v1546
        %v1589 = vadd.f32 %v1234, %v1551
        %v1590 = vadd.f32 %v1235, %v1554
        %v1591 = vadd.f32 %v1236, %v1559
        %v1592 = vadd.f32 %v1237, %v1562
        %1593 = vst [vmem:[#allocation2] sm:$0xff] %v1565
        %1594 = vst [vmem:[#allocation2 + $0x8] sm:$0xff] %v1566
        %1595 = vst [vmem:[#allocation2 + $0x10] sm:$0xff] %v1567
        %1596 = vst [vmem:[#allocation2 + $0x18] sm:$0xff] %v1568
        %1597 = vst [vmem:[#allocation2 + $0x20] sm:$0xff] %v1569
        %1598 = vst [vmem:[#allocation2 + $0x28] sm:$0xff] %v1570
        %1599 = vst [vmem:[#allocation2 + $0x30] sm:$0xff] %v1571
        %1600 = vst [vmem:[#allocation2 + $0x38] sm:$0xff] %v1572
        %1601 = vst [vmem:[#allocation2 + $0x40] sm:$0xff] %v1573
        %1602 = vst [vmem:[#allocation2 + $0x48] sm:$0xff] %v1574
        %1603 = vst [vmem:[#allocation2 + $0x50] sm:$0xff] %v1575
        %1604 = vst [vmem:[#allocation2 + $0x58] sm:$0xff] %v1576
        %1605 = vst [vmem:[#allocation2 + $0x60] sm:$0xff] %v1577
        %1606 = vst [vmem:[#allocation2 + $0x68] sm:$0xff] %v1578
        %1607 = vst [vmem:[#allocation2 + $0x70] sm:$0xff] %v1579
        %1608 = vst [vmem:[#allocation2 + $0x78] sm:$0xff] %v1580
        %1609 = vst [vmem:[#allocation2 + $0x80] sm:$0xff] %v1581
        %1610 = vst [vmem:[#allocation2 + $0x88] sm:$0xff] %v1582
        %1611 = vst [vmem:[#allocation2 + $0x90] sm:$0xff] %v1583
        %1612 = vst [vmem:[#allocation2 + $0x98] sm:$0xff] %v1584
        %1613 = vst [vmem:[#allocation2 + $0xa0] sm:$0xff] %v1585
        %1614 = vst [vmem:[#allocation2 + $0xa8] sm:$0xff] %v1586
        %1615 = vst [vmem:[#allocation2 + $0xb0] sm:$0xff] %v1587
        %1616 = vst [vmem:[#allocation2 + $0xb8] sm:$0xff] %v1588
        %1617 = vst [vmem:[#allocation2 + $0xc0] sm:$0xff] %v1589
        %1618 = vst [vmem:[#allocation2 + $0xc8] sm:$0xff] %v1590
        %1619 = vst [vmem:[#allocation2 + $0xd0] sm:$0xff] %v1591
        %1620 = vst [vmem:[#allocation2 + $0xd8] sm:$0xff] %v1592
        %v1621 = vld [vmem:[%s185 + $0x8] sm:$0xf]
        %v1622 = vld [vmem:[%s185 + $0xc] sm:$0xf]
        %v1623 = vld [vmem:[%s185 + $0x10] sm:$0xf]
        %v1624 = vld [vmem:[%s185 + $0x14] sm:$0xf]
        %v1625 = vld [vmem:[%s185 + $0x18] sm:$0xf]
        %v1626 = vld [vmem:[%s185 + $0x1c] sm:$0xf]
        %v1627 = vld [vmem:[%s185 + $0x20] sm:$0xf]
        %v1628 = vld [vmem:[%s185 + $0x24] sm:$0xf]
        %v1629 = vld [vmem:[%s185 + $0x28] sm:$0xf]
        %v1630 = vld [vmem:[%s185 + $0x2c] sm:$0xf]
        %v1631 = vld [vmem:[%s185 + $0x30] sm:$0xf]
        %v1632 = vld [vmem:[%s185 + $0x34] sm:$0xf]
        %v1633 = vld [vmem:[%s185 + $0x38] sm:$0xf]
        %v1634 = vld [vmem:[%s185 + $0x3c] sm:$0xf]
        %v1635 = vld [vmem:[%s185 + $0x40] sm:$0xf]
        %v1636 = vld [vmem:[%s185 + $0x44] sm:$0xf]
        %v1637 = vld [vmem:[%s185 + $0x48] sm:$0xf]
        %v1638 = vld [vmem:[%s185 + $0x4c] sm:$0xf]
        %v1639 = vld [vmem:[%s185 + $0x50] sm:$0xf]
        %v1640 = vld [vmem:[%s185 + $0x54] sm:$0xf]
        %v1641 = vld [vmem:[%s185 + $0x58] sm:$0xf]
        %v1642 = vld [vmem:[%s185 + $0x5c] sm:$0xf]
        %v1643 = vld [vmem:[%s185 + $0x60] sm:$0xf]
        %v1644 = vld [vmem:[%s185 + $0x64] sm:$0xf]
        %v1645 = vld [vmem:[%s185 + $0x68] sm:$0xf]
        %v1646 = vld [vmem:[%s185 + $0x6c] sm:$0xf]
        %v1647 = vld [vmem:[%s185 + $0x70] sm:$0xf]
        %v1648 = vld [vmem:[%s185 + $0x74] sm:$0xf]
        %v1649 = vld [vmem:[#allocation2] sm:$0xff]
        %v1650 = vld [vmem:[#allocation2 + $0x8] sm:$0xff]
        %v1651 = vld [vmem:[#allocation2 + $0x10] sm:$0xff]
        %v1652 = vld [vmem:[#allocation2 + $0x18] sm:$0xff]
        %v1653 = vld [vmem:[#allocation2 + $0x20] sm:$0xff]
        %v1654 = vld [vmem:[#allocation2 + $0x28] sm:$0xff]
        %v1655 = vld [vmem:[#allocation2 + $0x30] sm:$0xff]
        %v1656 = vld [vmem:[#allocation2 + $0x38] sm:$0xff]
        %v1657 = vld [vmem:[#allocation2 + $0x40] sm:$0xff]
        %v1658 = vld [vmem:[#allocation2 + $0x48] sm:$0xff]
        %v1659 = vld [vmem:[#allocation2 + $0x50] sm:$0xff]
        %v1660 = vld [vmem:[#allocation2 + $0x58] sm:$0xff]
        %v1661 = vld [vmem:[#allocation2 + $0x60] sm:$0xff]
        %v1662 = vld [vmem:[#allocation2 + $0x68] sm:$0xff]
        %v1663 = vld [vmem:[#allocation2 + $0x70] sm:$0xff]
        %v1664 = vld [vmem:[#allocation2 + $0x78] sm:$0xff]
        %v1665 = vld [vmem:[#allocation2 + $0x80] sm:$0xff]
        %v1666 = vld [vmem:[#allocation2 + $0x88] sm:$0xff]
        %v1667 = vld [vmem:[#allocation2 + $0x90] sm:$0xff]
        %v1668 = vld [vmem:[#allocation2 + $0x98] sm:$0xff]
        %v1669 = vld [vmem:[#allocation2 + $0xa0] sm:$0xff]
        %v1670 = vld [vmem:[#allocation2 + $0xa8] sm:$0xff]
        %v1671 = vld [vmem:[#allocation2 + $0xb0] sm:$0xff]
        %v1672 = vld [vmem:[#allocation2 + $0xb8] sm:$0xff]
        %v1673 = vld [vmem:[#allocation2 + $0xc0] sm:$0xff]
        %v1674 = vld [vmem:[#allocation2 + $0xc8] sm:$0xff]
        %v1675 = vld [vmem:[#allocation2 + $0xd0] sm:$0xff]
        %v1676 = vld [vmem:[#allocation2 + $0xd8] sm:$0xff]
        %s1677 = scalar_lea.vmem %s194, 192 [#allocation6]
        %v1678 = vld [vmem:[%s1677] sm:$0xf]
        %v1679 = vld [vmem:[%s1677 + $0x4] sm:$0xf]
        %v1680 = vld [vmem:[%s1677 + $0x8] sm:$0xf]
        %v1681 = vld [vmem:[%s1677 + $0xc] sm:$0xf]
        %v1682 = vld [vmem:[%s1677 + $0x10] sm:$0xf]
        %v1683 = vld [vmem:[%s1677 + $0x14] sm:$0xf]
        %v1684 = vld [vmem:[%s1677 + $0x18] sm:$0xf]
        %v1685 = vld [vmem:[%s1677 + $0x1c] sm:$0xf]
        %v1686 = vld [vmem:[%s1677 + $0x20] sm:$0xf]
        %v1687 = vld [vmem:[%s1677 + $0x24] sm:$0xf]
        %v1688 = vld [vmem:[%s1677 + $0x28] sm:$0xf]
        %v1689 = vld [vmem:[%s1677 + $0x2c] sm:$0xf]
        %v1690 = vld [vmem:[%s1677 + $0x30] sm:$0xf]
        %v1691 = vld [vmem:[%s1677 + $0x34] sm:$0xf]
        %v1692 = vld [vmem:[%s1677 + $0x38] sm:$0xf]
        %v1693 = vld [vmem:[%s1677 + $0x3c] sm:$0xf]
        %v1722 = vunpack.c.l.b16 %v1621
        %v1723 = vunpack.c.l.b16 %v1622
        %v1724 = vunpack.c.l.b16 %v1623
        %v1725 = vunpack.c.l.b16 %v1624
        %v1726 = vunpack.c.l.b16 %v1625
        %v1727 = vunpack.c.l.b16 %v1626
        %v1728 = vunpack.c.l.b16 %v1627
        %v1729 = vunpack.c.l.b16 %v1628
        %v1730 = vunpack.c.l.b16 %v1629
        %v1731 = vunpack.c.l.b16 %v1630
        %v1732 = vunpack.c.l.b16 %v1631
        %v1733 = vunpack.c.l.b16 %v1632
        %v1734 = vunpack.c.l.b16 %v1633
        %v1735 = vunpack.c.l.b16 %v1634
        %v1736 = vunpack.c.l.b16 %v1635
        %v1737 = vunpack.c.l.b16 %v1636
        %v1738 = vunpack.c.l.b16 %v1637
        %v1739 = vunpack.c.l.b16 %v1638
        %v1740 = vunpack.c.l.b16 %v1639
        %v1741 = vunpack.c.l.b16 %v1640
        %v1742 = vunpack.c.l.b16 %v1641
        %v1743 = vunpack.c.l.b16 %v1642
        %v1744 = vunpack.c.l.b16 %v1643
        %v1745 = vunpack.c.l.b16 %v1644
        %v1746 = vunpack.c.l.b16 %v1645
        %v1747 = vunpack.c.l.b16 %v1646
        %v1748 = vunpack.c.l.b16 %v1647
        %v1749 = vunpack.c.l.b16 %v1648
        %v1750 = vpack.c.b16 %v1723, %v1722
        %v1751 = vpack.c.b16 %v1725, %v1724
        %v1752 = vpack.c.b16 %v1727, %v1726
        %v1753 = vpack.c.b16 %v1729, %v1728
        %v1754 = vpack.c.b16 %v1731, %v1730
        %v1755 = vpack.c.b16 %v1733, %v1732
        %v1756 = vpack.c.b16 %v1735, %v1734
        %v1757 = vpack.c.b16 %v1737, %v1736
        %v1758 = vpack.c.b16 %v1739, %v1738
        %v1759 = vpack.c.b16 %v1741, %v1740
        %v1760 = vpack.c.b16 %v1743, %v1742
        %v1761 = vpack.c.b16 %v1745, %v1744
        %v1762 = vpack.c.b16 %v1747, %v1746
        %v1763 = vpack.c.b16 %v1749, %v1748
        %v1794 = vunpack.c.l.b16 %v1678
        %v1795 = vunpack.c.l.b16 %v1679
        %v1796 = vunpack.c.l.b16 %v1680
        %v1797 = vunpack.c.l.b16 %v1681
        %v1798 = vunpack.c.l.b16 %v1682
        %v1799 = vunpack.c.l.b16 %v1683
        %v1800 = vunpack.c.l.b16 %v1684
        %v1801 = vunpack.c.l.b16 %v1685
        %v1802 = vunpack.c.l.b16 %v1686
        %v1803 = vunpack.c.l.b16 %v1687
        %v1804 = vunpack.c.l.b16 %v1688
        %v1805 = vunpack.c.l.b16 %v1689
        %v1806 = vunpack.c.l.b16 %v1690
        %v1807 = vunpack.c.l.b16 %v1691
        %v1808 = vunpack.c.l.b16 %v1692
        %v1809 = vunpack.c.l.b16 %v1693
        %v1810 = vpack.c.b16 %v1795, %v1794
        %v1811 = vpack.c.b16 %v1797, %v1796
        %v1812 = vpack.c.b16 %v1799, %v1798
        %v1813 = vpack.c.b16 %v1801, %v1800
        %v1814 = vpack.c.b16 %v1803, %v1802
        %v1815 = vpack.c.b16 %v1805, %v1804
        %v1816 = vpack.c.b16 %v1807, %v1806
        %v1817 = vpack.c.b16 %v1809, %v1808
        %1826 = vmatprep.subr.bf16.mxu0 0
        %1827 = vmatpush1.bf16.msra.mxu0 %v1810
        %1828 = vmatprep.subr.bf16.mxu0 0
        %1829 = vmatpush1.bf16.msra.mxu0 %v1811
        %1830 = vmatprep.subr.bf16.mxu0 0
        %1831 = vmatpush1.bf16.msra.mxu0 %v1812
        %1832 = vmatprep.subr.bf16.mxu0 0
        %1833 = vmatpush1.bf16.msra.mxu0 %v1813
        %1834 = vmatprep.subr.bf16.mxu0 0
        %1835 = vmatpush1.bf16.msra.mxu0 %v1814
        %1836 = vmatprep.subr.bf16.mxu0 0
        %1837 = vmatpush1.bf16.msra.mxu0 %v1815
        %1838 = vmatprep.subr.bf16.mxu0 0
        %1839 = vmatpush1.bf16.msra.mxu0 %v1816
        %1840 = vmatprep.subr.bf16.mxu0 0
        %1841 = vmatpush1.bf16.msra.mxu0 %v1817
        %1842 = vmatprep.subr.bf16.mxu0 0
        %1843 = vmatpush1.bf16.msra.mxu0 0
        %1844 = vmatprep.subr.bf16.mxu0 0
        %1845 = vmatpush1.bf16.msra.mxu0 0
        %1846 = vmatprep.subr.bf16.mxu0 0
        %1847 = vmatpush1.bf16.msra.mxu0 0
        %1848 = vmatprep.subr.bf16.mxu0 0
        %1849 = vmatpush1.bf16.msra.mxu0 0
        %1850 = vmatprep.subr.bf16.mxu0 0
        %1851 = vmatpush1.bf16.msra.mxu0 0
        %1852 = vmatprep.subr.bf16.mxu0 0
        %1853 = vmatpush1.bf16.msra.mxu0 0
        %1854 = vmatprep.subr.bf16.mxu0 0
        %1855 = vmatpush1.bf16.msra.mxu0 0
        %1856 = vmatprep.subr.bf16.mxu0 0
        %1857 = vmatpush1.bf16.msra.mxu0 0
        %1858 = vmatprep.mubr.bf16.mxu0 0
        %1859 = vmatmul.mubr.bf16.gmra.mrb[0].mxu0 %v1750
        %v1860 = vpop.f32.mrb[0].mxu0
        %v1861 = vadd.f32 0.0, %v1860
        %v1862 = vpop.f32.mrb[0].mxu0
        %v1863 = vpop.f32.mrb[0].mxu0
        %v1864 = vadd.f32 0.0, %v1863
        %v1865 = vpop.f32.mrb[0].mxu0
        %1866 = vmatprep.mubr.bf16.mxu0 0
        %1867 = vmatmul.mubr.bf16.gmra.mrb[0].mxu0 %v1751
        %v1868 = vpop.f32.mrb[0].mxu0
        %v1869 = vadd.f32 0.0, %v1868
        %v1870 = vpop.f32.mrb[0].mxu0
        %v1871 = vpop.f32.mrb[0].mxu0
        %v1872 = vadd.f32 0.0, %v1871
        %v1873 = vpop.f32.mrb[0].mxu0
        %1874 = vmatprep.mubr.bf16.mxu0 0
        %1875 = vmatmul.mubr.bf16.gmra.mrb[0].mxu0 %v1752
        %v1876 = vpop.f32.mrb[0].mxu0
        %v1877 = vadd.f32 0.0, %v1876
        %v1878 = vpop.f32.mrb[0].mxu0
        %v1879 = vpop.f32.mrb[0].mxu0
        %v1880 = vadd.f32 0.0, %v1879
        %v1881 = vpop.f32.mrb[0].mxu0
        %1882 = vmatprep.mubr.bf16.mxu0 0
        %1883 = vmatmul.mubr.bf16.gmra.mrb[0].mxu0 %v1753
        %v1884 = vpop.f32.mrb[0].mxu0
        %v1885 = vadd.f32 0.0, %v1884
        %v1886 = vpop.f32.mrb[0].mxu0
        %v1887 = vpop.f32.mrb[0].mxu0
        %v1888 = vadd.f32 0.0, %v1887
        %v1889 = vpop.f32.mrb[0].mxu0
        %1890 = vmatprep.mubr.bf16.mxu0 0
        %1891 = vmatmul.mubr.bf16.gmra.mrb[0].mxu0 %v1754
        %v1892 = vpop.f32.mrb[0].mxu0
        %v1893 = vadd.f32 0.0, %v1892
        %v1894 = vpop.f32.mrb[0].mxu0
        %v1895 = vpop.f32.mrb[0].mxu0
        %v1896 = vadd.f32 0.0, %v1895
        %v1897 = vpop.f32.mrb[0].mxu0
        %1898 = vmatprep.mubr.bf16.mxu0 0
        %1899 = vmatmul.mubr.bf16.gmra.mrb[0].mxu0 %v1755
        %v1900 = vpop.f32.mrb[0].mxu0
        %v1901 = vadd.f32 0.0, %v1900
        %v1902 = vpop.f32.mrb[0].mxu0
        %v1903 = vpop.f32.mrb[0].mxu0
        %v1904 = vadd.f32 0.0, %v1903
        %v1905 = vpop.f32.mrb[0].mxu0
        %1906 = vmatprep.mubr.bf16.mxu0 0
        %1907 = vmatmul.mubr.bf16.gmra.mrb[0].mxu0 %v1756
        %v1908 = vpop.f32.mrb[0].mxu0
        %v1909 = vadd.f32 0.0, %v1908
        %v1910 = vpop.f32.mrb[0].mxu0
        %v1911 = vpop.f32.mrb[0].mxu0
        %v1912 = vadd.f32 0.0, %v1911
        %v1913 = vpop.f32.mrb[0].mxu0
        %1914 = vmatprep.mubr.bf16.mxu0 0
        %1915 = vmatmul.mubr.bf16.gmra.mrb[0].mxu0 %v1757
        %v1916 = vpop.f32.mrb[0].mxu0
        %v1917 = vadd.f32 0.0, %v1916
        %v1918 = vpop.f32.mrb[0].mxu0
        %v1919 = vpop.f32.mrb[0].mxu0
        %v1920 = vadd.f32 0.0, %v1919
        %v1921 = vpop.f32.mrb[0].mxu0
        %1922 = vmatprep.mubr.bf16.mxu0 0
        %1923 = vmatmul.mubr.bf16.gmra.mrb[0].mxu0 %v1758
        %v1924 = vpop.f32.mrb[0].mxu0
        %v1925 = vadd.f32 0.0, %v1924
        %v1926 = vpop.f32.mrb[0].mxu0
        %v1927 = vpop.f32.mrb[0].mxu0
        %v1928 = vadd.f32 0.0, %v1927
        %v1929 = vpop.f32.mrb[0].mxu0
        %1930 = vmatprep.mubr.bf16.mxu0 0
        %1931 = vmatmul.mubr.bf16.gmra.mrb[0].mxu0 %v1759
        %v1932 = vpop.f32.mrb[0].mxu0
        %v1933 = vadd.f32 0.0, %v1932
        %v1934 = vpop.f32.mrb[0].mxu0
        %v1935 = vpop.f32.mrb[0].mxu0
        %v1936 = vadd.f32 0.0, %v1935
        %v1937 = vpop.f32.mrb[0].mxu0
        %1938 = vmatprep.mubr.bf16.mxu0 0
        %1939 = vmatmul.mubr.bf16.gmra.mrb[0].mxu0 %v1760
        %v1940 = vpop.f32.mrb[0].mxu0
        %v1941 = vadd.f32 0.0, %v1940
        %v1942 = vpop.f32.mrb[0].mxu0
        %v1943 = vpop.f32.mrb[0].mxu0
        %v1944 = vadd.f32 0.0, %v1943
        %v1945 = vpop.f32.mrb[0].mxu0
        %1946 = vmatprep.mubr.bf16.mxu0 0
        %1947 = vmatmul.mubr.bf16.gmra.mrb[0].mxu0 %v1761
        %v1948 = vpop.f32.mrb[0].mxu0
        %v1949 = vadd.f32 0.0, %v1948
        %v1950 = vpop.f32.mrb[0].mxu0
        %v1951 = vpop.f32.mrb[0].mxu0
        %v1952 = vadd.f32 0.0, %v1951
        %v1953 = vpop.f32.mrb[0].mxu0
        %1954 = vmatprep.mubr.bf16.mxu0 0
        %1955 = vmatmul.mubr.bf16.gmra.mrb[0].mxu0 %v1762
        %v1956 = vpop.f32.mrb[0].mxu0
        %v1957 = vadd.f32 0.0, %v1956
        %v1958 = vpop.f32.mrb[0].mxu0
        %v1959 = vpop.f32.mrb[0].mxu0
        %v1960 = vadd.f32 0.0, %v1959
        %v1961 = vpop.f32.mrb[0].mxu0
        %1962 = vmatprep.mubr.bf16.mxu0 0
        %1963 = vmatmul.mubr.bf16.gmra.mrb[0].mxu0 %v1763
        %v1964 = vpop.f32.mrb[0].mxu0
        %v1965 = vadd.f32 0.0, %v1964
        %v1966 = vpop.f32.mrb[0].mxu0
        %v1967 = vpop.f32.mrb[0].mxu0
        %v1968 = vadd.f32 0.0, %v1967
        %v1969 = vpop.f32.mrb[0].mxu0
        %1970 = vdwg.mxu0
        %v1971 = vadd.f32 %v1649, %v1861
        %v1972 = vadd.f32 %v1650, %v1864
        %v1973 = vadd.f32 %v1651, %v1869
        %v1974 = vadd.f32 %v1652, %v1872
        %v1975 = vadd.f32 %v1653, %v1877
        %v1976 = vadd.f32 %v1654, %v1880
        %v1977 = vadd.f32 %v1655, %v1885
        %v1978 = vadd.f32 %v1656, %v1888
        %v1979 = vadd.f32 %v1657, %v1893
        %v1980 = vadd.f32 %v1658, %v1896
        %v1981 = vadd.f32 %v1659, %v1901
        %v1982 = vadd.f32 %v1660, %v1904
        %v1983 = vadd.f32 %v1661, %v1909
        %v1984 = vadd.f32 %v1662, %v1912
        %v1985 = vadd.f32 %v1663, %v1917
        %v1986 = vadd.f32 %v1664, %v1920
        %v1987 = vadd.f32 %v1665, %v1925
        %v1988 = vadd.f32 %v1666, %v1928
        %v1989 = vadd.f32 %v1667, %v1933
        %v1990 = vadd.f32 %v1668, %v1936
        %v1991 = vadd.f32 %v1669, %v1941
        %v1992 = vadd.f32 %v1670, %v1944
        %v1993 = vadd.f32 %v1671, %v1949
        %v1994 = vadd.f32 %v1672, %v1952
        %v1995 = vadd.f32 %v1673, %v1957
        %v1996 = vadd.f32 %v1674, %v1960
        %v1997 = vadd.f32 %v1675, %v1965
        %v1998 = vadd.f32 %v1676, %v1968
        %1999 = vst [vmem:[#allocation2] sm:$0xff] %v1971
        %2000 = vst [vmem:[#allocation2 + $0x8] sm:$0xff] %v1972
        %2001 = vst [vmem:[#allocation2 + $0x10] sm:$0xff] %v1973
        %2002 = vst [vmem:[#allocation2 + $0x18] sm:$0xff] %v1974
        %2003 = vst [vmem:[#allocation2 + $0x20] sm:$0xff] %v1975
        %2004 = vst [vmem:[#allocation2 + $0x28] sm:$0xff] %v1976
        %2005 = vst [vmem:[#allocation2 + $0x30] sm:$0xff] %v1977
        %2006 = vst [vmem:[#allocation2 + $0x38] sm:$0xff] %v1978
        %2007 = vst [vmem:[#allocation2 + $0x40] sm:$0xff] %v1979
        %2008 = vst [vmem:[#allocation2 + $0x48] sm:$0xff] %v1980
        %2009 = vst [vmem:[#allocation2 + $0x50] sm:$0xff] %v1981
        %2010 = vst [vmem:[#allocation2 + $0x58] sm:$0xff] %v1982
        %2011 = vst [vmem:[#allocation2 + $0x60] sm:$0xff] %v1983
        %2012 = vst [vmem:[#allocation2 + $0x68] sm:$0xff] %v1984
        %2013 = vst [vmem:[#allocation2 + $0x70] sm:$0xff] %v1985
        %2014 = vst [vmem:[#allocation2 + $0x78] sm:$0xff] %v1986
        %2015 = vst [vmem:[#allocation2 + $0x80] sm:$0xff] %v1987
        %2016 = vst [vmem:[#allocation2 + $0x88] sm:$0xff] %v1988
        %2017 = vst [vmem:[#allocation2 + $0x90] sm:$0xff] %v1989
        %2018 = vst [vmem:[#allocation2 + $0x98] sm:$0xff] %v1990
        %2019 = vst [vmem:[#allocation2 + $0xa0] sm:$0xff] %v1991
        %2020 = vst [vmem:[#allocation2 + $0xa8] sm:$0xff] %v1992
        %2021 = vst [vmem:[#allocation2 + $0xb0] sm:$0xff] %v1993
        %2022 = vst [vmem:[#allocation2 + $0xb8] sm:$0xff] %v1994
        %2023 = vst [vmem:[#allocation2 + $0xc0] sm:$0xff] %v1995
        %2024 = vst [vmem:[#allocation2 + $0xc8] sm:$0xff] %v1996
        %2025 = vst [vmem:[#allocation2 + $0xd0] sm:$0xff] %v1997
        %2026 = vst [vmem:[#allocation2 + $0xd8] sm:$0xff] %v1998
        %v2027 = vld [vmem:[%s185 + $0x8] sm:$0xf]
        %v2028 = vld [vmem:[%s185 + $0xc] sm:$0xf]
        %v2029 = vld [vmem:[%s185 + $0x10] sm:$0xf]
        %v2030 = vld [vmem:[%s185 + $0x14] sm:$0xf]
        %v2031 = vld [vmem:[%s185 + $0x18] sm:$0xf]
        %v2032 = vld [vmem:[%s185 + $0x1c] sm:$0xf]
        %v2033 = vld [vmem:[%s185 + $0x20] sm:$0xf]
        %v2034 = vld [vmem:[%s185 + $0x24] sm:$0xf]
        %v2035 = vld [vmem:[%s185 + $0x28] sm:$0xf]
        %v2036 = vld [vmem:[%s185 + $0x2c] sm:$0xf]
        %v2037 = vld [vmem:[%s185 + $0x30] sm:$0xf]
        %v2038 = vld [vmem:[%s185 + $0x34] sm:$0xf]
        %v2039 = vld [vmem:[%s185 + $0x38] sm:$0xf]
        %v2040 = vld [vmem:[%s185 + $0x3c] sm:$0xf]
        %v2041 = vld [vmem:[%s185 + $0x40] sm:$0xf]
        %v2042 = vld [vmem:[%s185 + $0x44] sm:$0xf]
        %v2043 = vld [vmem:[%s185 + $0x48] sm:$0xf]
        %v2044 = vld [vmem:[%s185 + $0x4c] sm:$0xf]
        %v2045 = vld [vmem:[%s185 + $0x50] sm:$0xf]
        %v2046 = vld [vmem:[%s185 + $0x54] sm:$0xf]
        %v2047 = vld [vmem:[%s185 + $0x58] sm:$0xf]
        %v2048 = vld [vmem:[%s185 + $0x5c] sm:$0xf]
        %v2049 = vld [vmem:[%s185 + $0x60] sm:$0xf]
        %v2050 = vld [vmem:[%s185 + $0x64] sm:$0xf]
        %v2051 = vld [vmem:[%s185 + $0x68] sm:$0xf]
        %v2052 = vld [vmem:[%s185 + $0x6c] sm:$0xf]
        %v2053 = vld [vmem:[%s185 + $0x70] sm:$0xf]
        %v2054 = vld [vmem:[%s185 + $0x74] sm:$0xf]
        %v2055 = vld [vmem:[%s185 + $0x78] sm:$0x1]
        %v2056 = vld [vmem:[#allocation2] sm:$0xff]
        %v2057 = vld [vmem:[#allocation2 + $0x8] sm:$0xff]
        %v2058 = vld [vmem:[#allocation2 + $0x10] sm:$0xff]
        %v2059 = vld [vmem:[#allocation2 + $0x18] sm:$0xff]
        %v2060 = vld [vmem:[#allocation2 + $0x20] sm:$0xff]
        %v2061 = vld [vmem:[#allocation2 + $0x28] sm:$0xff]
        %v2062 = vld [vmem:[#allocation2 + $0x30] sm:$0xff]
        %v2063 = vld [vmem:[#allocation2 + $0x38] sm:$0xff]
        %v2064 = vld [vmem:[#allocation2 + $0x40] sm:$0xff]
        %v2065 = vld [vmem:[#allocation2 + $0x48] sm:$0xff]
        %v2066 = vld [vmem:[#allocation2 + $0x50] sm:$0xff]
        %v2067 = vld [vmem:[#allocation2 + $0x58] sm:$0xff]
        %v2068 = vld [vmem:[#allocation2 + $0x60] sm:$0xff]
        %v2069 = vld [vmem:[#allocation2 + $0x68] sm:$0xff]
        %v2070 = vld [vmem:[#allocation2 + $0x70] sm:$0xff]
        %v2071 = vld [vmem:[#allocation2 + $0x78] sm:$0xff]
        %v2072 = vld [vmem:[#allocation2 + $0x80] sm:$0xff]
        %v2073 = vld [vmem:[#allocation2 + $0x88] sm:$0xff]
        %v2074 = vld [vmem:[#allocation2 + $0x90] sm:$0xff]
        %v2075 = vld [vmem:[#allocation2 + $0x98] sm:$0xff]
        %v2076 = vld [vmem:[#allocation2 + $0xa0] sm:$0xff]
        %v2077 = vld [vmem:[#allocation2 + $0xa8] sm:$0xff]
        %v2078 = vld [vmem:[#allocation2 + $0xb0] sm:$0xff]
        %v2079 = vld [vmem:[#allocation2 + $0xb8] sm:$0xff]
        %v2080 = vld [vmem:[#allocation2 + $0xc0] sm:$0xff]
        %v2081 = vld [vmem:[#allocation2 + $0xc8] sm:$0xff]
        %v2082 = vld [vmem:[#allocation2 + $0xd0] sm:$0xff]
        %v2083 = vld [vmem:[#allocation2 + $0xd8] sm:$0xff]
        %s2084 = scalar_lea.vmem %s194, 256 [#allocation6]
        %v2085 = vld [vmem:[%s2084] sm:$0xf]
        %v2086 = vld [vmem:[%s2084 + $0x4] sm:$0xf]
        %v2087 = vld [vmem:[%s2084 + $0x8] sm:$0xf]
        %v2088 = vld [vmem:[%s2084 + $0xc] sm:$0xf]
        %v2089 = vld [vmem:[%s2084 + $0x10] sm:$0xf]
        %v2090 = vld [vmem:[%s2084 + $0x14] sm:$0xf]
        %v2091 = vld [vmem:[%s2084 + $0x18] sm:$0xf]
        %v2092 = vld [vmem:[%s2084 + $0x1c] sm:$0xf]
        %v2093 = vld [vmem:[%s2084 + $0x20] sm:$0xf]
        %v2094 = vld [vmem:[%s2084 + $0x24] sm:$0xf]
        %v2095 = vld [vmem:[%s2084 + $0x28] sm:$0xf]
        %v2096 = vld [vmem:[%s2084 + $0x2c] sm:$0xf]
        %v2097 = vld [vmem:[%s2084 + $0x30] sm:$0xf]
        %v2098 = vld [vmem:[%s2084 + $0x34] sm:$0xf]
        %v2099 = vld [vmem:[%s2084 + $0x38] sm:$0xf]
        %v2100 = vld [vmem:[%s2084 + $0x3c] sm:$0xf]
        %v2130 = vunpack.c.l.b16 %v2027
        %v2131 = vunpack.c.l.b16 %v2028
        %v2132 = vunpack.c.l.b16 %v2029
        %v2133 = vunpack.c.l.b16 %v2030
        %v2134 = vunpack.c.l.b16 %v2031
        %v2135 = vunpack.c.l.b16 %v2032
        %v2136 = vunpack.c.l.b16 %v2033
        %v2137 = vunpack.c.l.b16 %v2034
        %v2138 = vunpack.c.l.b16 %v2035
        %v2139 = vunpack.c.l.b16 %v2036
        %v2140 = vunpack.c.l.b16 %v2037
        %v2141 = vunpack.c.l.b16 %v2038
        %v2142 = vunpack.c.l.b16 %v2039
        %v2143 = vunpack.c.l.b16 %v2040
        %v2144 = vunpack.c.l.b16 %v2041
        %v2145 = vunpack.c.l.b16 %v2042
        %v2146 = vunpack.c.l.b16 %v2043
        %v2147 = vunpack.c.l.b16 %v2044
        %v2148 = vunpack.c.l.b16 %v2045
        %v2149 = vunpack.c.l.b16 %v2046
        %v2150 = vunpack.c.l.b16 %v2047
        %v2151 = vunpack.c.l.b16 %v2048
        %v2152 = vunpack.c.l.b16 %v2049
        %v2153 = vunpack.c.l.b16 %v2050
        %v2154 = vunpack.c.l.b16 %v2051
        %v2155 = vunpack.c.l.b16 %v2052
        %v2156 = vunpack.c.l.b16 %v2053
        %v2157 = vunpack.c.l.b16 %v2054
        %v2158 = vunpack.c.l.b16 %v2055
        %v2159 = vpack.c.b16 %v2131, %v2130
        %v2160 = vpack.c.b16 %v2133, %v2132
        %v2161 = vpack.c.b16 %v2135, %v2134
        %v2162 = vpack.c.b16 %v2137, %v2136
        %v2163 = vpack.c.b16 %v2139, %v2138
        %v2164 = vpack.c.b16 %v2141, %v2140
        %v2165 = vpack.c.b16 %v2143, %v2142
        %v2166 = vpack.c.b16 %v2145, %v2144
        %v2167 = vpack.c.b16 %v2147, %v2146
        %v2168 = vpack.c.b16 %v2149, %v2148
        %v2169 = vpack.c.b16 %v2151, %v2150
        %v2170 = vpack.c.b16 %v2153, %v2152
        %v2171 = vpack.c.b16 %v2155, %v2154
        %v2172 = vpack.c.b16 %v2157, %v2156
        %v2173 = vpack.c.b16 %v2158, %v2158
        %v2175 = vshrl.u32 %v2159, 16
        %v2177 = vshll.u32 %v2159, 16
        %v2179 = vrot.slane %v2177, 1
        %v2180 = vor.u32 %v2175, %v2179
        %v2182 = vshll.u32 %v2160, 16
        %v2184 = vrot.slane %v2182, 1
        %v2185 = vsel %vm801, %v2180, %v2184
        %v2186 = vshrl.u32 %v2160, 16
        %v2188 = vor.u32 %v2186, %v2184
        %v2190 = vshll.u32 %v2161, 16
        %v2192 = vrot.slane %v2190, 1
        %v2193 = vsel %vm801, %v2188, %v2192
        %v2194 = vshrl.u32 %v2161, 16
        %v2196 = vor.u32 %v2194, %v2192
        %v2198 = vshll.u32 %v2162, 16
        %v2200 = vrot.slane %v2198, 1
        %v2201 = vsel %vm801, %v2196, %v2200
        %v2202 = vshrl.u32 %v2162, 16
        %v2204 = vor.u32 %v2202, %v2200
        %v2206 = vshll.u32 %v2163, 16
        %v2208 = vrot.slane %v2206, 1
        %v2209 = vsel %vm801, %v2204, %v2208
        %v2210 = vshrl.u32 %v2163, 16
        %v2212 = vor.u32 %v2210, %v2208
        %v2214 = vshll.u32 %v2164, 16
        %v2216 = vrot.slane %v2214, 1
        %v2217 = vsel %vm801, %v2212, %v2216
        %v2218 = vshrl.u32 %v2164, 16
        %v2220 = vor.u32 %v2218, %v2216
        %v2222 = vshll.u32 %v2165, 16
        %v2224 = vrot.slane %v2222, 1
        %v2225 = vsel %vm801, %v2220, %v2224
        %v2226 = vshrl.u32 %v2165, 16
        %v2228 = vor.u32 %v2226, %v2224
        %v2230 = vshll.u32 %v2166, 16
        %v2232 = vrot.slane %v2230, 1
        %v2233 = vsel %vm801, %v2228, %v2232
        %v2234 = vshrl.u32 %v2166, 16
        %v2236 = vor.u32 %v2234, %v2232
        %v2238 = vshll.u32 %v2167, 16
        %v2240 = vrot.slane %v2238, 1
        %v2241 = vsel %vm801, %v2236, %v2240
        %v2242 = vshrl.u32 %v2167, 16
        %v2244 = vor.u32 %v2242, %v2240
        %v2246 = vshll.u32 %v2168, 16
        %v2248 = vrot.slane %v2246, 1
        %v2249 = vsel %vm801, %v2244, %v2248
        %v2250 = vshrl.u32 %v2168, 16
        %v2252 = vor.u32 %v2250, %v2248
        %v2254 = vshll.u32 %v2169, 16
        %v2256 = vrot.slane %v2254, 1
        %v2257 = vsel %vm801, %v2252, %v2256
        %v2258 = vshrl.u32 %v2169, 16
        %v2260 = vor.u32 %v2258, %v2256
        %v2262 = vshll.u32 %v2170, 16
        %v2264 = vrot.slane %v2262, 1
        %v2265 = vsel %vm801, %v2260, %v2264
        %v2266 = vshrl.u32 %v2170, 16
        %v2268 = vor.u32 %v2266, %v2264
        %v2270 = vshll.u32 %v2171, 16
        %v2272 = vrot.slane %v2270, 1
        %v2273 = vsel %vm801, %v2268, %v2272
        %v2274 = vshrl.u32 %v2171, 16
        %v2276 = vor.u32 %v2274, %v2272
        %v2278 = vshll.u32 %v2172, 16
        %v2280 = vrot.slane %v2278, 1
        %v2281 = vsel %vm801, %v2276, %v2280
        %v2282 = vshrl.u32 %v2172, 16
        %v2284 = vor.u32 %v2282, %v2280
        %v2286 = vshll.u32 %v2173, 16
        %v2288 = vrot.slane %v2286, 1
        %v2289 = vsel %vm801, %v2284, %v2288
        %v2320 = vunpack.c.l.b16 %v2085
        %v2321 = vunpack.c.l.b16 %v2086
        %v2322 = vunpack.c.l.b16 %v2087
        %v2323 = vunpack.c.l.b16 %v2088
        %v2324 = vunpack.c.l.b16 %v2089
        %v2325 = vunpack.c.l.b16 %v2090
        %v2326 = vunpack.c.l.b16 %v2091
        %v2327 = vunpack.c.l.b16 %v2092
        %v2328 = vunpack.c.l.b16 %v2093
        %v2329 = vunpack.c.l.b16 %v2094
        %v2330 = vunpack.c.l.b16 %v2095
        %v2331 = vunpack.c.l.b16 %v2096
        %v2332 = vunpack.c.l.b16 %v2097
        %v2333 = vunpack.c.l.b16 %v2098
        %v2334 = vunpack.c.l.b16 %v2099
        %v2335 = vunpack.c.l.b16 %v2100
        %v2336 = vpack.c.b16 %v2321, %v2320
        %v2337 = vpack.c.b16 %v2323, %v2322
        %v2338 = vpack.c.b16 %v2325, %v2324
        %v2339 = vpack.c.b16 %v2327, %v2326
        %v2340 = vpack.c.b16 %v2329, %v2328
        %v2341 = vpack.c.b16 %v2331, %v2330
        %v2342 = vpack.c.b16 %v2333, %v2332
        %v2343 = vpack.c.b16 %v2335, %v2334
        %2352 = vmatprep.subr.bf16.mxu0 0
        %2353 = vmatpush1.bf16.msra.mxu0 %v2336
        %2354 = vmatprep.subr.bf16.mxu0 0
        %2355 = vmatpush1.bf16.msra.mxu0 %v2337
        %2356 = vmatprep.subr.bf16.mxu0 0
        %2357 = vmatpush1.bf16.msra.mxu0 %v2338
        %2358 = vmatprep.subr.bf16.mxu0 0
        %2359 = vmatpush1.bf16.msra.mxu0 %v2339
        %2360 = vmatprep.subr.bf16.mxu0 0
        %2361 = vmatpush1.bf16.msra.mxu0 %v2340
        %2362 = vmatprep.subr.bf16.mxu0 0
        %2363 = vmatpush1.bf16.msra.mxu0 %v2341
        %2364 = vmatprep.subr.bf16.mxu0 0
        %2365 = vmatpush1.bf16.msra.mxu0 %v2342
        %2366 = vmatprep.subr.bf16.mxu0 0
        %2367 = vmatpush1.bf16.msra.mxu0 %v2343
        %2368 = vmatprep.subr.bf16.mxu0 0
        %2369 = vmatpush1.bf16.msra.mxu0 0
        %2370 = vmatprep.subr.bf16.mxu0 0
        %2371 = vmatpush1.bf16.msra.mxu0 0
        %2372 = vmatprep.subr.bf16.mxu0 0
        %2373 = vmatpush1.bf16.msra.mxu0 0
        %2374 = vmatprep.subr.bf16.mxu0 0
        %2375 = vmatpush1.bf16.msra.mxu0 0
        %2376 = vmatprep.subr.bf16.mxu0 0
        %2377 = vmatpush1.bf16.msra.mxu0 0
        %2378 = vmatprep.subr.bf16.mxu0 0
        %2379 = vmatpush1.bf16.msra.mxu0 0
        %2380 = vmatprep.subr.bf16.mxu0 0
        %2381 = vmatpush1.bf16.msra.mxu0 0
        %2382 = vmatprep.subr.bf16.mxu0 0
        %2383 = vmatpush1.bf16.msra.mxu0 0
        %2384 = vmatprep.mubr.bf16.mxu0 0
        %2385 = vmatmul.mubr.bf16.gmra.mrb[0].mxu0 %v2185
        %v2386 = vpop.f32.mrb[0].mxu0
        %v2387 = vadd.f32 0.0, %v2386
        %v2388 = vpop.f32.mrb[0].mxu0
        %v2389 = vpop.f32.mrb[0].mxu0
        %v2390 = vadd.f32 0.0, %v2389
        %v2391 = vpop.f32.mrb[0].mxu0
        %2392 = vmatprep.mubr.bf16.mxu0 0
        %2393 = vmatmul.mubr.bf16.gmra.mrb[0].mxu0 %v2193
        %v2394 = vpop.f32.mrb[0].mxu0
        %v2395 = vadd.f32 0.0, %v2394
        %v2396 = vpop.f32.mrb[0].mxu0
        %v2397 = vpop.f32.mrb[0].mxu0
        %v2398 = vadd.f32 0.0, %v2397
        %v2399 = vpop.f32.mrb[0].mxu0
        %2400 = vmatprep.mubr.bf16.mxu0 0
        %2401 = vmatmul.mubr.bf16.gmra.mrb[0].mxu0 %v2201
        %v2402 = vpop.f32.mrb[0].mxu0
        %v2403 = vadd.f32 0.0, %v2402
        %v2404 = vpop.f32.mrb[0].mxu0
        %v2405 = vpop.f32.mrb[0].mxu0
        %v2406 = vadd.f32 0.0, %v2405
        %v2407 = vpop.f32.mrb[0].mxu0
        %2408 = vmatprep.mubr.bf16.mxu0 0
        %2409 = vmatmul.mubr.bf16.gmra.mrb[0].mxu0 %v2209
        %v2410 = vpop.f32.mrb[0].mxu0
        %v2411 = vadd.f32 0.0, %v2410
        %v2412 = vpop.f32.mrb[0].mxu0
        %v2413 = vpop.f32.mrb[0].mxu0
        %v2414 = vadd.f32 0.0, %v2413
        %v2415 = vpop.f32.mrb[0].mxu0
        %2416 = vmatprep.mubr.bf16.mxu0 0
        %2417 = vmatmul.mubr.bf16.gmra.mrb[0].mxu0 %v2217
        %v2418 = vpop.f32.mrb[0].mxu0
        %v2419 = vadd.f32 0.0, %v2418
        %v2420 = vpop.f32.mrb[0].mxu0
        %v2421 = vpop.f32.mrb[0].mxu0
        %v2422 = vadd.f32 0.0, %v2421
        %v2423 = vpop.f32.mrb[0].mxu0
        %2424 = vmatprep.mubr.bf16.mxu0 0
        %2425 = vmatmul.mubr.bf16.gmra.mrb[0].mxu0 %v2225
        %v2426 = vpop.f32.mrb[0].mxu0
        %v2427 = vadd.f32 0.0, %v2426
        %v2428 = vpop.f32.mrb[0].mxu0
        %v2429 = vpop.f32.mrb[0].mxu0
        %v2430 = vadd.f32 0.0, %v2429
        %v2431 = vpop.f32.mrb[0].mxu0
        %2432 = vmatprep.mubr.bf16.mxu0 0
        %2433 = vmatmul.mubr.bf16.gmra.mrb[0].mxu0 %v2233
        %v2434 = vpop.f32.mrb[0].mxu0
        %v2435 = vadd.f32 0.0, %v2434
        %v2436 = vpop.f32.mrb[0].mxu0
        %v2437 = vpop.f32.mrb[0].mxu0
        %v2438 = vadd.f32 0.0, %v2437
        %v2439 = vpop.f32.mrb[0].mxu0
        %2440 = vmatprep.mubr.bf16.mxu0 0
        %2441 = vmatmul.mubr.bf16.gmra.mrb[0].mxu0 %v2241
        %v2442 = vpop.f32.mrb[0].mxu0
        %v2443 = vadd.f32 0.0, %v2442
        %v2444 = vpop.f32.mrb[0].mxu0
        %v2445 = vpop.f32.mrb[0].mxu0
        %v2446 = vadd.f32 0.0, %v2445
        %v2447 = vpop.f32.mrb[0].mxu0
        %2448 = vmatprep.mubr.bf16.mxu0 0
        %2449 = vmatmul.mubr.bf16.gmra.mrb[0].mxu0 %v2249
        %v2450 = vpop.f32.mrb[0].mxu0
        %v2451 = vadd.f32 0.0, %v2450
        %v2452 = vpop.f32.mrb[0].mxu0
        %v2453 = vpop.f32.mrb[0].mxu0
        %v2454 = vadd.f32 0.0, %v2453
        %v2455 = vpop.f32.mrb[0].mxu0
        %2456 = vmatprep.mubr.bf16.mxu0 0
        %2457 = vmatmul.mubr.bf16.gmra.mrb[0].mxu0 %v2257
        %v2458 = vpop.f32.mrb[0].mxu0
        %v2459 = vadd.f32 0.0, %v2458
        %v2460 = vpop.f32.mrb[0].mxu0
        %v2461 = vpop.f32.mrb[0].mxu0
        %v2462 = vadd.f32 0.0, %v2461
        %v2463 = vpop.f32.mrb[0].mxu0
        %2464 = vmatprep.mubr.bf16.mxu0 0
        %2465 = vmatmul.mubr.bf16.gmra.mrb[0].mxu0 %v2265
        %v2466 = vpop.f32.mrb[0].mxu0
        %v2467 = vadd.f32 0.0, %v2466
        %v2468 = vpop.f32.mrb[0].mxu0
        %v2469 = vpop.f32.mrb[0].mxu0
        %v2470 = vadd.f32 0.0, %v2469
        %v2471 = vpop.f32.mrb[0].mxu0
        %2472 = vmatprep.mubr.bf16.mxu0 0
        %2473 = vmatmul.mubr.bf16.gmra.mrb[0].mxu0 %v2273
        %v2474 = vpop.f32.mrb[0].mxu0
        %v2475 = vadd.f32 0.0, %v2474
        %v2476 = vpop.f32.mrb[0].mxu0
        %v2477 = vpop.f32.mrb[0].mxu0
        %v2478 = vadd.f32 0.0, %v2477
        %v2479 = vpop.f32.mrb[0].mxu0
        %2480 = vmatprep.mubr.bf16.mxu0 0
        %2481 = vmatmul.mubr.bf16.gmra.mrb[0].mxu0 %v2281
        %v2482 = vpop.f32.mrb[0].mxu0
        %v2483 = vadd.f32 0.0, %v2482
        %v2484 = vpop.f32.mrb[0].mxu0
        %v2485 = vpop.f32.mrb[0].mxu0
        %v2486 = vadd.f32 0.0, %v2485
        %v2487 = vpop.f32.mrb[0].mxu0
        %2488 = vmatprep.mubr.bf16.mxu0 0
        %2489 = vmatmul.mubr.bf16.gmra.mrb[0].mxu0 %v2289
        %v2490 = vpop.f32.mrb[0].mxu0
        %v2491 = vadd.f32 0.0, %v2490
        %v2492 = vpop.f32.mrb[0].mxu0
        %v2493 = vpop.f32.mrb[0].mxu0
        %v2494 = vadd.f32 0.0, %v2493
        %v2495 = vpop.f32.mrb[0].mxu0
        %2496 = vdwg.mxu0
        %v2497 = vadd.f32 %v2056, %v2387
        %v2498 = vadd.f32 %v2057, %v2390
        %v2499 = vadd.f32 %v2058, %v2395
        %v2500 = vadd.f32 %v2059, %v2398
        %v2501 = vadd.f32 %v2060, %v2403
        %v2502 = vadd.f32 %v2061, %v2406
        %v2503 = vadd.f32 %v2062, %v2411
        %v2504 = vadd.f32 %v2063, %v2414
        %v2505 = vadd.f32 %v2064, %v2419
        %v2506 = vadd.f32 %v2065, %v2422
        %v2507 = vadd.f32 %v2066, %v2427
        %v2508 = vadd.f32 %v2067, %v2430
        %v2509 = vadd.f32 %v2068, %v2435
        %v2510 = vadd.f32 %v2069, %v2438
        %v2511 = vadd.f32 %v2070, %v2443
        %v2512 = vadd.f32 %v2071, %v2446
        %v2513 = vadd.f32 %v2072, %v2451
        %v2514 = vadd.f32 %v2073, %v2454
        %v2515 = vadd.f32 %v2074, %v2459
        %v2516 = vadd.f32 %v2075, %v2462
        %v2517 = vadd.f32 %v2076, %v2467
        %v2518 = vadd.f32 %v2077, %v2470
        %v2519 = vadd.f32 %v2078, %v2475
        %v2520 = vadd.f32 %v2079, %v2478
        %v2521 = vadd.f32 %v2080, %v2483
        %v2522 = vadd.f32 %v2081, %v2486
        %v2523 = vadd.f32 %v2082, %v2491
        %v2524 = vadd.f32 %v2083, %v2494
        %2525 = vst [vmem:[#allocation2] sm:$0xff] %v2497
        %2526 = vst [vmem:[#allocation2 + $0x8] sm:$0xff] %v2498
        %2527 = vst [vmem:[#allocation2 + $0x10] sm:$0xff] %v2499
        %2528 = vst [vmem:[#allocation2 + $0x18] sm:$0xff] %v2500
        %2529 = vst [vmem:[#allocation2 + $0x20] sm:$0xff] %v2501
        %2530 = vst [vmem:[#allocation2 + $0x28] sm:$0xff] %v2502
        %2531 = vst [vmem:[#allocation2 + $0x30] sm:$0xff] %v2503
        %2532 = vst [vmem:[#allocation2 + $0x38] sm:$0xff] %v2504
        %2533 = vst [vmem:[#allocation2 + $0x40] sm:$0xff] %v2505
        %2534 = vst [vmem:[#allocation2 + $0x48] sm:$0xff] %v2506
        %2535 = vst [vmem:[#allocation2 + $0x50] sm:$0xff] %v2507
        %2536 = vst [vmem:[#allocation2 + $0x58] sm:$0xff] %v2508
        %2537 = vst [vmem:[#allocation2 + $0x60] sm:$0xff] %v2509
        %2538 = vst [vmem:[#allocation2 + $0x68] sm:$0xff] %v2510
        %2539 = vst [vmem:[#allocation2 + $0x70] sm:$0xff] %v2511
        %2540 = vst [vmem:[#allocation2 + $0x78] sm:$0xff] %v2512
        %2541 = vst [vmem:[#allocation2 + $0x80] sm:$0xff] %v2513
        %2542 = vst [vmem:[#allocation2 + $0x88] sm:$0xff] %v2514
        %2543 = vst [vmem:[#allocation2 + $0x90] sm:$0xff] %v2515
        %2544 = vst [vmem:[#allocation2 + $0x98] sm:$0xff] %v2516
        %2545 = vst [vmem:[#allocation2 + $0xa0] sm:$0xff] %v2517
        %2546 = vst [vmem:[#allocation2 + $0xa8] sm:$0xff] %v2518
        %2547 = vst [vmem:[#allocation2 + $0xb0] sm:$0xff] %v2519
        %2548 = vst [vmem:[#allocation2 + $0xb8] sm:$0xff] %v2520
        %2549 = vst [vmem:[#allocation2 + $0xc0] sm:$0xff] %v2521
        %2550 = vst [vmem:[#allocation2 + $0xc8] sm:$0xff] %v2522
        %2551 = vst [vmem:[#allocation2 + $0xd0] sm:$0xff] %v2523
        %2552 = vst [vmem:[#allocation2 + $0xd8] sm:$0xff] %v2524
        %v2553 = vld [vmem:[%s185 + $0x8] sm:$0xe]
        %v2554 = vld [vmem:[%s185 + $0xc] sm:$0xf]
        %v2555 = vld [vmem:[%s185 + $0x10] sm:$0xf]
        %v2556 = vld [vmem:[%s185 + $0x14] sm:$0xf]
        %v2557 = vld [vmem:[%s185 + $0x18] sm:$0xf]
        %v2558 = vld [vmem:[%s185 + $0x1c] sm:$0xf]
        %v2559 = vld [vmem:[%s185 + $0x20] sm:$0xf]
        %v2560 = vld [vmem:[%s185 + $0x24] sm:$0xf]
        %v2561 = vld [vmem:[%s185 + $0x28] sm:$0xf]
        %v2562 = vld [vmem:[%s185 + $0x2c] sm:$0xf]
        %v2563 = vld [vmem:[%s185 + $0x30] sm:$0xf]
        %v2564 = vld [vmem:[%s185 + $0x34] sm:$0xf]
        %v2565 = vld [vmem:[%s185 + $0x38] sm:$0xf]
        %v2566 = vld [vmem:[%s185 + $0x3c] sm:$0xf]
        %v2567 = vld [vmem:[%s185 + $0x40] sm:$0xf]
        %v2568 = vld [vmem:[%s185 + $0x44] sm:$0xf]
        %v2569 = vld [vmem:[%s185 + $0x48] sm:$0xf]
        %v2570 = vld [vmem:[%s185 + $0x4c] sm:$0xf]
        %v2571 = vld [vmem:[%s185 + $0x50] sm:$0xf]
        %v2572 = vld [vmem:[%s185 + $0x54] sm:$0xf]
        %v2573 = vld [vmem:[%s185 + $0x58] sm:$0xf]
        %v2574 = vld [vmem:[%s185 + $0x5c] sm:$0xf]
        %v2575 = vld [vmem:[%s185 + $0x60] sm:$0xf]
        %v2576 = vld [vmem:[%s185 + $0x64] sm:$0xf]
        %v2577 = vld [vmem:[%s185 + $0x68] sm:$0xf]
        %v2578 = vld [vmem:[%s185 + $0x6c] sm:$0xf]
        %v2579 = vld [vmem:[%s185 + $0x70] sm:$0xf]
        %v2580 = vld [vmem:[%s185 + $0x74] sm:$0xf]
        %v2581 = vld [vmem:[%s185 + $0x78] sm:$0x1]
        %v2582 = vld [vmem:[#allocation2] sm:$0xff]
        %v2583 = vld [vmem:[#allocation2 + $0x8] sm:$0xff]
        %v2584 = vld [vmem:[#allocation2 + $0x10] sm:$0xff]
        %v2585 = vld [vmem:[#allocation2 + $0x18] sm:$0xff]
        %v2586 = vld [vmem:[#allocation2 + $0x20] sm:$0xff]
        %v2587 = vld [vmem:[#allocation2 + $0x28] sm:$0xff]
        %v2588 = vld [vmem:[#allocation2 + $0x30] sm:$0xff]
        %v2589 = vld [vmem:[#allocation2 + $0x38] sm:$0xff]
        %v2590 = vld [vmem:[#allocation2 + $0x40] sm:$0xff]
        %v2591 = vld [vmem:[#allocation2 + $0x48] sm:$0xff]
        %v2592 = vld [vmem:[#allocation2 + $0x50] sm:$0xff]
        %v2593 = vld [vmem:[#allocation2 + $0x58] sm:$0xff]
        %v2594 = vld [vmem:[#allocation2 + $0x60] sm:$0xff]
        %v2595 = vld [vmem:[#allocation2 + $0x68] sm:$0xff]
        %v2596 = vld [vmem:[#allocation2 + $0x70] sm:$0xff]
        %v2597 = vld [vmem:[#allocation2 + $0x78] sm:$0xff]
        %v2598 = vld [vmem:[#allocation2 + $0x80] sm:$0xff]
        %v2599 = vld [vmem:[#allocation2 + $0x88] sm:$0xff]
        %v2600 = vld [vmem:[#allocation2 + $0x90] sm:$0xff]
        %v2601 = vld [vmem:[#allocation2 + $0x98] sm:$0xff]
        %v2602 = vld [vmem:[#allocation2 + $0xa0] sm:$0xff]
        %v2603 = vld [vmem:[#allocation2 + $0xa8] sm:$0xff]
        %v2604 = vld [vmem:[#allocation2 + $0xb0] sm:$0xff]
        %v2605 = vld [vmem:[#allocation2 + $0xb8] sm:$0xff]
        %v2606 = vld [vmem:[#allocation2 + $0xc0] sm:$0xff]
        %v2607 = vld [vmem:[#allocation2 + $0xc8] sm:$0xff]
        %v2608 = vld [vmem:[#allocation2 + $0xd0] sm:$0xff]
        %v2609 = vld [vmem:[#allocation2 + $0xd8] sm:$0xff]
        %s2610 = scalar_lea.vmem %s194, 320 [#allocation6]
        %v2611 = vld [vmem:[%s2610] sm:$0xf]
        %v2612 = vld [vmem:[%s2610 + $0x4] sm:$0xf]
        %v2613 = vld [vmem:[%s2610 + $0x8] sm:$0xf]
        %v2614 = vld [vmem:[%s2610 + $0xc] sm:$0xf]
        %v2615 = vld [vmem:[%s2610 + $0x10] sm:$0xf]
        %v2616 = vld [vmem:[%s2610 + $0x14] sm:$0xf]
        %v2617 = vld [vmem:[%s2610 + $0x18] sm:$0xf]
        %v2618 = vld [vmem:[%s2610 + $0x1c] sm:$0xf]
        %v2619 = vld [vmem:[%s2610 + $0x20] sm:$0xf]
        %v2620 = vld [vmem:[%s2610 + $0x24] sm:$0xf]
        %v2621 = vld [vmem:[%s2610 + $0x28] sm:$0xf]
        %v2622 = vld [vmem:[%s2610 + $0x2c] sm:$0xf]
        %v2623 = vld [vmem:[%s2610 + $0x30] sm:$0xf]
        %v2624 = vld [vmem:[%s2610 + $0x34] sm:$0xf]
        %v2625 = vld [vmem:[%s2610 + $0x38] sm:$0xf]
        %v2626 = vld [vmem:[%s2610 + $0x3c] sm:$0xf]
        %v2656 = vunpack.c.l.b16 %v2553
        %v2657 = vunpack.c.l.b16 %v2554
        %v2658 = vunpack.c.l.b16 %v2555
        %v2659 = vunpack.c.l.b16 %v2556
        %v2660 = vunpack.c.l.b16 %v2557
        %v2661 = vunpack.c.l.b16 %v2558
        %v2662 = vunpack.c.l.b16 %v2559
        %v2663 = vunpack.c.l.b16 %v2560
        %v2664 = vunpack.c.l.b16 %v2561
        %v2665 = vunpack.c.l.b16 %v2562
        %v2666 = vunpack.c.l.b16 %v2563
        %v2667 = vunpack.c.l.b16 %v2564
        %v2668 = vunpack.c.l.b16 %v2565
        %v2669 = vunpack.c.l.b16 %v2566
        %v2670 = vunpack.c.l.b16 %v2567
        %v2671 = vunpack.c.l.b16 %v2568
        %v2672 = vunpack.c.l.b16 %v2569
        %v2673 = vunpack.c.l.b16 %v2570
        %v2674 = vunpack.c.l.b16 %v2571
        %v2675 = vunpack.c.l.b16 %v2572
        %v2676 = vunpack.c.l.b16 %v2573
        %v2677 = vunpack.c.l.b16 %v2574
        %v2678 = vunpack.c.l.b16 %v2575
        %v2679 = vunpack.c.l.b16 %v2576
        %v2680 = vunpack.c.l.b16 %v2577
        %v2681 = vunpack.c.l.b16 %v2578
        %v2682 = vunpack.c.l.b16 %v2579
        %v2683 = vunpack.c.l.b16 %v2580
        %v2684 = vunpack.c.l.b16 %v2581
        %v2685 = vpack.c.b16 %v2657, %v2656
        %v2686 = vpack.c.b16 %v2659, %v2658
        %v2687 = vpack.c.b16 %v2661, %v2660
        %v2688 = vpack.c.b16 %v2663, %v2662
        %v2689 = vpack.c.b16 %v2665, %v2664
        %v2690 = vpack.c.b16 %v2667, %v2666
        %v2691 = vpack.c.b16 %v2669, %v2668
        %v2692 = vpack.c.b16 %v2671, %v2670
        %v2693 = vpack.c.b16 %v2673, %v2672
        %v2694 = vpack.c.b16 %v2675, %v2674
        %v2695 = vpack.c.b16 %v2677, %v2676
        %v2696 = vpack.c.b16 %v2679, %v2678
        %v2697 = vpack.c.b16 %v2681, %v2680
        %v2698 = vpack.c.b16 %v2683, %v2682
        %v2699 = vpack.c.b16 %v2684, %v2684
        %v2700 = vrot.slane %v2685, 1
        %v2701 = vrot.slane %v2686, 1
        %v2702 = vsel %vm1328, %v2700, %v2701
        %v2703 = vrot.slane %v2687, 1
        %v2704 = vsel %vm1328, %v2701, %v2703
        %v2705 = vrot.slane %v2688, 1
        %v2706 = vsel %vm1328, %v2703, %v2705
        %v2707 = vrot.slane %v2689, 1
        %v2708 = vsel %vm1328, %v2705, %v2707
        %v2709 = vrot.slane %v2690, 1
        %v2710 = vsel %vm1328, %v2707, %v2709
        %v2711 = vrot.slane %v2691, 1
        %v2712 = vsel %vm1328, %v2709, %v2711
        %v2713 = vrot.slane %v2692, 1
        %v2714 = vsel %vm1328, %v2711, %v2713
        %v2715 = vrot.slane %v2693, 1
        %v2716 = vsel %vm1328, %v2713, %v2715
        %v2717 = vrot.slane %v2694, 1
        %v2718 = vsel %vm1328, %v2715, %v2717
        %v2719 = vrot.slane %v2695, 1
        %v2720 = vsel %vm1328, %v2717, %v2719
        %v2721 = vrot.slane %v2696, 1
        %v2722 = vsel %vm1328, %v2719, %v2721
        %v2723 = vrot.slane %v2697, 1
        %v2724 = vsel %vm1328, %v2721, %v2723
        %v2725 = vrot.slane %v2698, 1
        %v2726 = vsel %vm1328, %v2723, %v2725
        %v2727 = vrot.slane %v2699, 1
        %v2728 = vsel %vm1328, %v2725, %v2727
        %v2759 = vunpack.c.l.b16 %v2611
        %v2760 = vunpack.c.l.b16 %v2612
        %v2761 = vunpack.c.l.b16 %v2613
        %v2762 = vunpack.c.l.b16 %v2614
        %v2763 = vunpack.c.l.b16 %v2615
        %v2764 = vunpack.c.l.b16 %v2616
        %v2765 = vunpack.c.l.b16 %v2617
        %v2766 = vunpack.c.l.b16 %v2618
        %v2767 = vunpack.c.l.b16 %v2619
        %v2768 = vunpack.c.l.b16 %v2620
        %v2769 = vunpack.c.l.b16 %v2621
        %v2770 = vunpack.c.l.b16 %v2622
        %v2771 = vunpack.c.l.b16 %v2623
        %v2772 = vunpack.c.l.b16 %v2624
        %v2773 = vunpack.c.l.b16 %v2625
        %v2774 = vunpack.c.l.b16 %v2626
        %v2775 = vpack.c.b16 %v2760, %v2759
        %v2776 = vpack.c.b16 %v2762, %v2761
        %v2777 = vpack.c.b16 %v2764, %v2763
        %v2778 = vpack.c.b16 %v2766, %v2765
        %v2779 = vpack.c.b16 %v2768, %v2767
        %v2780 = vpack.c.b16 %v2770, %v2769
        %v2781 = vpack.c.b16 %v2772, %v2771
        %v2782 = vpack.c.b16 %v2774, %v2773
        %2791 = vmatprep.subr.bf16.mxu0 0
        %2792 = vmatpush1.bf16.msra.mxu0 %v2775
        %2793 = vmatprep.subr.bf16.mxu0 0
        %2794 = vmatpush1.bf16.msra.mxu0 %v2776
        %2795 = vmatprep.subr.bf16.mxu0 0
        %2796 = vmatpush1.bf16.msra.mxu0 %v2777
        %2797 = vmatprep.subr.bf16.mxu0 0
        %2798 = vmatpush1.bf16.msra.mxu0 %v2778
        %2799 = vmatprep.subr.bf16.mxu0 0
        %2800 = vmatpush1.bf16.msra.mxu0 %v2779
        %2801 = vmatprep.subr.bf16.mxu0 0
        %2802 = vmatpush1.bf16.msra.mxu0 %v2780
        %2803 = vmatprep.subr.bf16.mxu0 0
        %2804 = vmatpush1.bf16.msra.mxu0 %v2781
        %2805 = vmatprep.subr.bf16.mxu0 0
        %2806 = vmatpush1.bf16.msra.mxu0 %v2782
        %2807 = vmatprep.subr.bf16.mxu0 0
        %2808 = vmatpush1.bf16.msra.mxu0 0
        %2809 = vmatprep.subr.bf16.mxu0 0
        %2810 = vmatpush1.bf16.msra.mxu0 0
        %2811 = vmatprep.subr.bf16.mxu0 0
        %2812 = vmatpush1.bf16.msra.mxu0 0
        %2813 = vmatprep.subr.bf16.mxu0 0
        %2814 = vmatpush1.bf16.msra.mxu0 0
        %2815 = vmatprep.subr.bf16.mxu0 0
        %2816 = vmatpush1.bf16.msra.mxu0 0
        %2817 = vmatprep.subr.bf16.mxu0 0
        %2818 = vmatpush1.bf16.msra.mxu0 0
        %2819 = vmatprep.subr.bf16.mxu0 0
        %2820 = vmatpush1.bf16.msra.mxu0 0
        %2821 = vmatprep.subr.bf16.mxu0 0
        %2822 = vmatpush1.bf16.msra.mxu0 0
        %2823 = vmatprep.mubr.bf16.mxu0 0
        %2824 = vmatmul.mubr.bf16.gmra.mrb[0].mxu0 %v2702
        %v2825 = vpop.f32.mrb[0].mxu0
        %v2826 = vadd.f32 0.0, %v2825
        %v2827 = vpop.f32.mrb[0].mxu0
        %v2828 = vpop.f32.mrb[0].mxu0
        %v2829 = vadd.f32 0.0, %v2828
        %v2830 = vpop.f32.mrb[0].mxu0
        %2831 = vmatprep.mubr.bf16.mxu0 0
        %2832 = vmatmul.mubr.bf16.gmra.mrb[0].mxu0 %v2704
        %v2833 = vpop.f32.mrb[0].mxu0
        %v2834 = vadd.f32 0.0, %v2833
        %v2835 = vpop.f32.mrb[0].mxu0
        %v2836 = vpop.f32.mrb[0].mxu0
        %v2837 = vadd.f32 0.0, %v2836
        %v2838 = vpop.f32.mrb[0].mxu0
        %2839 = vmatprep.mubr.bf16.mxu0 0
        %2840 = vmatmul.mubr.bf16.gmra.mrb[0].mxu0 %v2706
        %v2841 = vpop.f32.mrb[0].mxu0
        %v2842 = vadd.f32 0.0, %v2841
        %v2843 = vpop.f32.mrb[0].mxu0
        %v2844 = vpop.f32.mrb[0].mxu0
        %v2845 = vadd.f32 0.0, %v2844
        %v2846 = vpop.f32.mrb[0].mxu0
        %2847 = vmatprep.mubr.bf16.mxu0 0
        %2848 = vmatmul.mubr.bf16.gmra.mrb[0].mxu0 %v2708
        %v2849 = vpop.f32.mrb[0].mxu0
        %v2850 = vadd.f32 0.0, %v2849
        %v2851 = vpop.f32.mrb[0].mxu0
        %v2852 = vpop.f32.mrb[0].mxu0
        %v2853 = vadd.f32 0.0, %v2852
        %v2854 = vpop.f32.mrb[0].mxu0
        %2855 = vmatprep.mubr.bf16.mxu0 0
        %2856 = vmatmul.mubr.bf16.gmra.mrb[0].mxu0 %v2710
        %v2857 = vpop.f32.mrb[0].mxu0
        %v2858 = vadd.f32 0.0, %v2857
        %v2859 = vpop.f32.mrb[0].mxu0
        %v2860 = vpop.f32.mrb[0].mxu0
        %v2861 = vadd.f32 0.0, %v2860
        %v2862 = vpop.f32.mrb[0].mxu0
        %2863 = vmatprep.mubr.bf16.mxu0 0
        %2864 = vmatmul.mubr.bf16.gmra.mrb[0].mxu0 %v2712
        %v2865 = vpop.f32.mrb[0].mxu0
        %v2866 = vadd.f32 0.0, %v2865
        %v2867 = vpop.f32.mrb[0].mxu0
        %v2868 = vpop.f32.mrb[0].mxu0
        %v2869 = vadd.f32 0.0, %v2868
        %v2870 = vpop.f32.mrb[0].mxu0
        %2871 = vmatprep.mubr.bf16.mxu0 0
        %2872 = vmatmul.mubr.bf16.gmra.mrb[0].mxu0 %v2714
        %v2873 = vpop.f32.mrb[0].mxu0
        %v2874 = vadd.f32 0.0, %v2873
        %v2875 = vpop.f32.mrb[0].mxu0
        %v2876 = vpop.f32.mrb[0].mxu0
        %v2877 = vadd.f32 0.0, %v2876
        %v2878 = vpop.f32.mrb[0].mxu0
        %2879 = vmatprep.mubr.bf16.mxu0 0
        %2880 = vmatmul.mubr.bf16.gmra.mrb[0].mxu0 %v2716
        %v2881 = vpop.f32.mrb[0].mxu0
        %v2882 = vadd.f32 0.0, %v2881
        %v2883 = vpop.f32.mrb[0].mxu0
        %v2884 = vpop.f32.mrb[0].mxu0
        %v2885 = vadd.f32 0.0, %v2884
        %v2886 = vpop.f32.mrb[0].mxu0
        %2887 = vmatprep.mubr.bf16.mxu0 0
        %2888 = vmatmul.mubr.bf16.gmra.mrb[0].mxu0 %v2718
        %v2889 = vpop.f32.mrb[0].mxu0
        %v2890 = vadd.f32 0.0, %v2889
        %v2891 = vpop.f32.mrb[0].mxu0
        %v2892 = vpop.f32.mrb[0].mxu0
        %v2893 = vadd.f32 0.0, %v2892
        %v2894 = vpop.f32.mrb[0].mxu0
        %2895 = vmatprep.mubr.bf16.mxu0 0
        %2896 = vmatmul.mubr.bf16.gmra.mrb[0].mxu0 %v2720
        %v2897 = vpop.f32.mrb[0].mxu0
        %v2898 = vadd.f32 0.0, %v2897
        %v2899 = vpop.f32.mrb[0].mxu0
        %v2900 = vpop.f32.mrb[0].mxu0
        %v2901 = vadd.f32 0.0, %v2900
        %v2902 = vpop.f32.mrb[0].mxu0
        %2903 = vmatprep.mubr.bf16.mxu0 0
        %2904 = vmatmul.mubr.bf16.gmra.mrb[0].mxu0 %v2722
        %v2905 = vpop.f32.mrb[0].mxu0
        %v2906 = vadd.f32 0.0, %v2905
        %v2907 = vpop.f32.mrb[0].mxu0
        %v2908 = vpop.f32.mrb[0].mxu0
        %v2909 = vadd.f32 0.0, %v2908
        %v2910 = vpop.f32.mrb[0].mxu0
        %2911 = vmatprep.mubr.bf16.mxu0 0
        %2912 = vmatmul.mubr.bf16.gmra.mrb[0].mxu0 %v2724
        %v2913 = vpop.f32.mrb[0].mxu0
        %v2914 = vadd.f32 0.0, %v2913
        %v2915 = vpop.f32.mrb[0].mxu0
        %v2916 = vpop.f32.mrb[0].mxu0
        %v2917 = vadd.f32 0.0, %v2916
        %v2918 = vpop.f32.mrb[0].mxu0
        %2919 = vmatprep.mubr.bf16.mxu0 0
        %2920 = vmatmul.mubr.bf16.gmra.mrb[0].mxu0 %v2726
        %v2921 = vpop.f32.mrb[0].mxu0
        %v2922 = vadd.f32 0.0, %v2921
        %v2923 = vpop.f32.mrb[0].mxu0
        %v2924 = vpop.f32.mrb[0].mxu0
        %v2925 = vadd.f32 0.0, %v2924
        %v2926 = vpop.f32.mrb[0].mxu0
        %2927 = vmatprep.mubr.bf16.mxu0 0
        %2928 = vmatmul.mubr.bf16.gmra.mrb[0].mxu0 %v2728
        %v2929 = vpop.f32.mrb[0].mxu0
        %v2930 = vadd.f32 0.0, %v2929
        %v2931 = vpop.f32.mrb[0].mxu0
        %v2932 = vpop.f32.mrb[0].mxu0
        %v2933 = vadd.f32 0.0, %v2932
        %v2934 = vpop.f32.mrb[0].mxu0
        %2935 = vdwg.mxu0
        %v2936 = vadd.f32 %v2582, %v2826
        %v2937 = vadd.f32 %v2583, %v2829
        %v2938 = vadd.f32 %v2584, %v2834
        %v2939 = vadd.f32 %v2585, %v2837
        %v2940 = vadd.f32 %v2586, %v2842
        %v2941 = vadd.f32 %v2587, %v2845
        %v2942 = vadd.f32 %v2588, %v2850
        %v2943 = vadd.f32 %v2589, %v2853
        %v2944 = vadd.f32 %v2590, %v2858
        %v2945 = vadd.f32 %v2591, %v2861
        %v2946 = vadd.f32 %v2592, %v2866
        %v2947 = vadd.f32 %v2593, %v2869
        %v2948 = vadd.f32 %v2594, %v2874
        %v2949 = vadd.f32 %v2595, %v2877
        %v2950 = vadd.f32 %v2596, %v2882
        %v2951 = vadd.f32 %v2597, %v2885
        %v2952 = vadd.f32 %v2598, %v2890
        %v2953 = vadd.f32 %v2599, %v2893
        %v2954 = vadd.f32 %v2600, %v2898
        %v2955 = vadd.f32 %v2601, %v2901
        %v2956 = vadd.f32 %v2602, %v2906
        %v2957 = vadd.f32 %v2603, %v2909
        %v2958 = vadd.f32 %v2604, %v2914
        %v2959 = vadd.f32 %v2605, %v2917
        %v2960 = vadd.f32 %v2606, %v2922
        %v2961 = vadd.f32 %v2607, %v2925
        %v2962 = vadd.f32 %v2608, %v2930
        %v2963 = vadd.f32 %v2609, %v2933
        %2964 = vst [vmem:[#allocation2] sm:$0xff] %v2936
        %2965 = vst [vmem:[#allocation2 + $0x8] sm:$0xff] %v2937
        %2966 = vst [vmem:[#allocation2 + $0x10] sm:$0xff] %v2938
        %2967 = vst [vmem:[#allocation2 + $0x18] sm:$0xff] %v2939
        %2968 = vst [vmem:[#allocation2 + $0x20] sm:$0xff] %v2940
        %2969 = vst [vmem:[#allocation2 + $0x28] sm:$0xff] %v2941
        %2970 = vst [vmem:[#allocation2 + $0x30] sm:$0xff] %v2942
        %2971 = vst [vmem:[#allocation2 + $0x38] sm:$0xff] %v2943
        %2972 = vst [vmem:[#allocation2 + $0x40] sm:$0xff] %v2944
        %2973 = vst [vmem:[#allocation2 + $0x48] sm:$0xff] %v2945
        %2974 = vst [vmem:[#allocation2 + $0x50] sm:$0xff] %v2946
        %2975 = vst [vmem:[#allocation2 + $0x58] sm:$0xff] %v2947
        %2976 = vst [vmem:[#allocation2 + $0x60] sm:$0xff] %v2948
        %2977 = vst [vmem:[#allocation2 + $0x68] sm:$0xff] %v2949
        %2978 = vst [vmem:[#allocation2 + $0x70] sm:$0xff] %v2950
        %2979 = vst [vmem:[#allocation2 + $0x78] sm:$0xff] %v2951
        %2980 = vst [vmem:[#allocation2 + $0x80] sm:$0xff] %v2952
        %2981 = vst [vmem:[#allocation2 + $0x88] sm:$0xff] %v2953
        %2982 = vst [vmem:[#allocation2 + $0x90] sm:$0xff] %v2954
        %2983 = vst [vmem:[#allocation2 + $0x98] sm:$0xff] %v2955
        %2984 = vst [vmem:[#allocation2 + $0xa0] sm:$0xff] %v2956
        %2985 = vst [vmem:[#allocation2 + $0xa8] sm:$0xff] %v2957
        %2986 = vst [vmem:[#allocation2 + $0xb0] sm:$0xff] %v2958
        %2987 = vst [vmem:[#allocation2 + $0xb8] sm:$0xff] %v2959
        %2988 = vst [vmem:[#allocation2 + $0xc0] sm:$0xff] %v2960
        %2989 = vst [vmem:[#allocation2 + $0xc8] sm:$0xff] %v2961
        %2990 = vst [vmem:[#allocation2 + $0xd0] sm:$0xff] %v2962
        %2991 = vst [vmem:[#allocation2 + $0xd8] sm:$0xff] %v2963
        %v2992 = vld [vmem:[%s185 + $0x10] sm:$0xf]
        %v2993 = vld [vmem:[%s185 + $0x14] sm:$0xf]
        %v2994 = vld [vmem:[%s185 + $0x18] sm:$0xf]
        %v2995 = vld [vmem:[%s185 + $0x1c] sm:$0xf]
        %v2996 = vld [vmem:[%s185 + $0x20] sm:$0xf]
        %v2997 = vld [vmem:[%s185 + $0x24] sm:$0xf]
        %v2998 = vld [vmem:[%s185 + $0x28] sm:$0xf]
        %v2999 = vld [vmem:[%s185 + $0x2c] sm:$0xf]
        %v3000 = vld [vmem:[%s185 + $0x30] sm:$0xf]
        %v3001 = vld [vmem:[%s185 + $0x34] sm:$0xf]
        %v3002 = vld [vmem:[%s185 + $0x38] sm:$0xf]
        %v3003 = vld [vmem:[%s185 + $0x3c] sm:$0xf]
        %v3004 = vld [vmem:[%s185 + $0x40] sm:$0xf]
        %v3005 = vld [vmem:[%s185 + $0x44] sm:$0xf]
        %v3006 = vld [vmem:[%s185 + $0x48] sm:$0xf]
        %v3007 = vld [vmem:[%s185 + $0x4c] sm:$0xf]
        %v3008 = vld [vmem:[%s185 + $0x50] sm:$0xf]
        %v3009 = vld [vmem:[%s185 + $0x54] sm:$0xf]
        %v3010 = vld [vmem:[%s185 + $0x58] sm:$0xf]
        %v3011 = vld [vmem:[%s185 + $0x5c] sm:$0xf]
        %v3012 = vld [vmem:[%s185 + $0x60] sm:$0xf]
        %v3013 = vld [vmem:[%s185 + $0x64] sm:$0xf]
        %v3014 = vld [vmem:[%s185 + $0x68] sm:$0xf]
        %v3015 = vld [vmem:[%s185 + $0x6c] sm:$0xf]
        %v3016 = vld [vmem:[%s185 + $0x70] sm:$0xf]
        %v3017 = vld [vmem:[%s185 + $0x74] sm:$0xf]
        %v3018 = vld [vmem:[%s185 + $0x78] sm:$0xf]
        %v3019 = vld [vmem:[%s185 + $0x7c] sm:$0xf]
        %v3020 = vld [vmem:[#allocation2] sm:$0xff]
        %v3021 = vld [vmem:[#allocation2 + $0x8] sm:$0xff]
        %v3022 = vld [vmem:[#allocation2 + $0x10] sm:$0xff]
        %v3023 = vld [vmem:[#allocation2 + $0x18] sm:$0xff]
        %v3024 = vld [vmem:[#allocation2 + $0x20] sm:$0xff]
        %v3025 = vld [vmem:[#allocation2 + $0x28] sm:$0xff]
        %v3026 = vld [vmem:[#allocation2 + $0x30] sm:$0xff]
        %v3027 = vld [vmem:[#allocation2 + $0x38] sm:$0xff]
        %v3028 = vld [vmem:[#allocation2 + $0x40] sm:$0xff]
        %v3029 = vld [vmem:[#allocation2 + $0x48] sm:$0xff]
        %v3030 = vld [vmem:[#allocation2 + $0x50] sm:$0xff]
        %v3031 = vld [vmem:[#allocation2 + $0x58] sm:$0xff]
        %v3032 = vld [vmem:[#allocation2 + $0x60] sm:$0xff]
        %v3033 = vld [vmem:[#allocation2 + $0x68] sm:$0xff]
        %v3034 = vld [vmem:[#allocation2 + $0x70] sm:$0xff]
        %v3035 = vld [vmem:[#allocation2 + $0x78] sm:$0xff]
        %v3036 = vld [vmem:[#allocation2 + $0x80] sm:$0xff]
        %v3037 = vld [vmem:[#allocation2 + $0x88] sm:$0xff]
        %v3038 = vld [vmem:[#allocation2 + $0x90] sm:$0xff]
        %v3039 = vld [vmem:[#allocation2 + $0x98] sm:$0xff]
        %v3040 = vld [vmem:[#allocation2 + $0xa0] sm:$0xff]
        %v3041 = vld [vmem:[#allocation2 + $0xa8] sm:$0xff]
        %v3042 = vld [vmem:[#allocation2 + $0xb0] sm:$0xff]
        %v3043 = vld [vmem:[#allocation2 + $0xb8] sm:$0xff]
        %v3044 = vld [vmem:[#allocation2 + $0xc0] sm:$0xff]
        %v3045 = vld [vmem:[#allocation2 + $0xc8] sm:$0xff]
        %v3046 = vld [vmem:[#allocation2 + $0xd0] sm:$0xff]
        %v3047 = vld [vmem:[#allocation2 + $0xd8] sm:$0xff]
        %s3048 = scalar_lea.vmem %s194, 384 [#allocation6]
        %v3049 = vld [vmem:[%s3048] sm:$0xf]
        %v3050 = vld [vmem:[%s3048 + $0x4] sm:$0xf]
        %v3051 = vld [vmem:[%s3048 + $0x8] sm:$0xf]
        %v3052 = vld [vmem:[%s3048 + $0xc] sm:$0xf]
        %v3053 = vld [vmem:[%s3048 + $0x10] sm:$0xf]
        %v3054 = vld [vmem:[%s3048 + $0x14] sm:$0xf]
        %v3055 = vld [vmem:[%s3048 + $0x18] sm:$0xf]
        %v3056 = vld [vmem:[%s3048 + $0x1c] sm:$0xf]
        %v3057 = vld [vmem:[%s3048 + $0x20] sm:$0xf]
        %v3058 = vld [vmem:[%s3048 + $0x24] sm:$0xf]
        %v3059 = vld [vmem:[%s3048 + $0x28] sm:$0xf]
        %v3060 = vld [vmem:[%s3048 + $0x2c] sm:$0xf]
        %v3061 = vld [vmem:[%s3048 + $0x30] sm:$0xf]
        %v3062 = vld [vmem:[%s3048 + $0x34] sm:$0xf]
        %v3063 = vld [vmem:[%s3048 + $0x38] sm:$0xf]
        %v3064 = vld [vmem:[%s3048 + $0x3c] sm:$0xf]
        %v3093 = vunpack.c.l.b16 %v2992
        %v3094 = vunpack.c.l.b16 %v2993
        %v3095 = vunpack.c.l.b16 %v2994
        %v3096 = vunpack.c.l.b16 %v2995
        %v3097 = vunpack.c.l.b16 %v2996
        %v3098 = vunpack.c.l.b16 %v2997
        %v3099 = vunpack.c.l.b16 %v2998
        %v3100 = vunpack.c.l.b16 %v2999
        %v3101 = vunpack.c.l.b16 %v3000
        %v3102 = vunpack.c.l.b16 %v3001
        %v3103 = vunpack.c.l.b16 %v3002
        %v3104 = vunpack.c.l.b16 %v3003
        %v3105 = vunpack.c.l.b16 %v3004
        %v3106 = vunpack.c.l.b16 %v3005
        %v3107 = vunpack.c.l.b16 %v3006
        %v3108 = vunpack.c.l.b16 %v3007
        %v3109 = vunpack.c.l.b16 %v3008
        %v3110 = vunpack.c.l.b16 %v3009
        %v3111 = vunpack.c.l.b16 %v3010
        %v3112 = vunpack.c.l.b16 %v3011
        %v3113 = vunpack.c.l.b16 %v3012
        %v3114 = vunpack.c.l.b16 %v3013
        %v3115 = vunpack.c.l.b16 %v3014
        %v3116 = vunpack.c.l.b16 %v3015
        %v3117 = vunpack.c.l.b16 %v3016
        %v3118 = vunpack.c.l.b16 %v3017
        %v3119 = vunpack.c.l.b16 %v3018
        %v3120 = vunpack.c.l.b16 %v3019
        %v3121 = vpack.c.b16 %v3094, %v3093
        %v3122 = vpack.c.b16 %v3096, %v3095
        %v3123 = vpack.c.b16 %v3098, %v3097
        %v3124 = vpack.c.b16 %v3100, %v3099
        %v3125 = vpack.c.b16 %v3102, %v3101
        %v3126 = vpack.c.b16 %v3104, %v3103
        %v3127 = vpack.c.b16 %v3106, %v3105
        %v3128 = vpack.c.b16 %v3108, %v3107
        %v3129 = vpack.c.b16 %v3110, %v3109
        %v3130 = vpack.c.b16 %v3112, %v3111
        %v3131 = vpack.c.b16 %v3114, %v3113
        %v3132 = vpack.c.b16 %v3116, %v3115
        %v3133 = vpack.c.b16 %v3118, %v3117
        %v3134 = vpack.c.b16 %v3120, %v3119
        %v3165 = vunpack.c.l.b16 %v3049
        %v3166 = vunpack.c.l.b16 %v3050
        %v3167 = vunpack.c.l.b16 %v3051
        %v3168 = vunpack.c.l.b16 %v3052
        %v3169 = vunpack.c.l.b16 %v3053
        %v3170 = vunpack.c.l.b16 %v3054
        %v3171 = vunpack.c.l.b16 %v3055
        %v3172 = vunpack.c.l.b16 %v3056
        %v3173 = vunpack.c.l.b16 %v3057
        %v3174 = vunpack.c.l.b16 %v3058
        %v3175 = vunpack.c.l.b16 %v3059
        %v3176 = vunpack.c.l.b16 %v3060
        %v3177 = vunpack.c.l.b16 %v3061
        %v3178 = vunpack.c.l.b16 %v3062
        %v3179 = vunpack.c.l.b16 %v3063
        %v3180 = vunpack.c.l.b16 %v3064
        %v3181 = vpack.c.b16 %v3166, %v3165
        %v3182 = vpack.c.b16 %v3168, %v3167
        %v3183 = vpack.c.b16 %v3170, %v3169
        %v3184 = vpack.c.b16 %v3172, %v3171
        %v3185 = vpack.c.b16 %v3174, %v3173
        %v3186 = vpack.c.b16 %v3176, %v3175
        %v3187 = vpack.c.b16 %v3178, %v3177
        %v3188 = vpack.c.b16 %v3180, %v3179
        %3197 = vmatprep.subr.bf16.mxu0 0
        %3198 = vmatpush1.bf16.msra.mxu0 %v3181
        %3199 = vmatprep.subr.bf16.mxu0 0
        %3200 = vmatpush1.bf16.msra.mxu0 %v3182
        %3201 = vmatprep.subr.bf16.mxu0 0
        %3202 = vmatpush1.bf16.msra.mxu0 %v3183
        %3203 = vmatprep.subr.bf16.mxu0 0
        %3204 = vmatpush1.bf16.msra.mxu0 %v3184
        %3205 = vmatprep.subr.bf16.mxu0 0
        %3206 = vmatpush1.bf16.msra.mxu0 %v3185
        %3207 = vmatprep.subr.bf16.mxu0 0
        %3208 = vmatpush1.bf16.msra.mxu0 %v3186
        %3209 = vmatprep.subr.bf16.mxu0 0
        %3210 = vmatpush1.bf16.msra.mxu0 %v3187
        %3211 = vmatprep.subr.bf16.mxu0 0
        %3212 = vmatpush1.bf16.msra.mxu0 %v3188
        %3213 = vmatprep.subr.bf16.mxu0 0
        %3214 = vmatpush1.bf16.msra.mxu0 0
        %3215 = vmatprep.subr.bf16.mxu0 0
        %3216 = vmatpush1.bf16.msra.mxu0 0
        %3217 = vmatprep.subr.bf16.mxu0 0
        %3218 = vmatpush1.bf16.msra.mxu0 0
        %3219 = vmatprep.subr.bf16.mxu0 0
        %3220 = vmatpush1.bf16.msra.mxu0 0
        %3221 = vmatprep.subr.bf16.mxu0 0
        %3222 = vmatpush1.bf16.msra.mxu0 0
        %3223 = vmatprep.subr.bf16.mxu0 0
        %3224 = vmatpush1.bf16.msra.mxu0 0
        %3225 = vmatprep.subr.bf16.mxu0 0
        %3226 = vmatpush1.bf16.msra.mxu0 0
        %3227 = vmatprep.subr.bf16.mxu0 0
        %3228 = vmatpush1.bf16.msra.mxu0 0
        %3229 = vmatprep.mubr.bf16.mxu0 0
        %3230 = vmatmul.mubr.bf16.gmra.mrb[0].mxu0 %v3121
        %v3231 = vpop.f32.mrb[0].mxu0
        %v3232 = vadd.f32 0.0, %v3231
        %v3233 = vpop.f32.mrb[0].mxu0
        %v3234 = vpop.f32.mrb[0].mxu0
        %v3235 = vadd.f32 0.0, %v3234
        %v3236 = vpop.f32.mrb[0].mxu0
        %3237 = vmatprep.mubr.bf16.mxu0 0
        %3238 = vmatmul.mubr.bf16.gmra.mrb[0].mxu0 %v3122
        %v3239 = vpop.f32.mrb[0].mxu0
        %v3240 = vadd.f32 0.0, %v3239
        %v3241 = vpop.f32.mrb[0].mxu0
        %v3242 = vpop.f32.mrb[0].mxu0
        %v3243 = vadd.f32 0.0, %v3242
        %v3244 = vpop.f32.mrb[0].mxu0
        %3245 = vmatprep.mubr.bf16.mxu0 0
        %3246 = vmatmul.mubr.bf16.gmra.mrb[0].mxu0 %v3123
        %v3247 = vpop.f32.mrb[0].mxu0
        %v3248 = vadd.f32 0.0, %v3247
        %v3249 = vpop.f32.mrb[0].mxu0
        %v3250 = vpop.f32.mrb[0].mxu0
        %v3251 = vadd.f32 0.0, %v3250
        %v3252 = vpop.f32.mrb[0].mxu0
        %3253 = vmatprep.mubr.bf16.mxu0 0
        %3254 = vmatmul.mubr.bf16.gmra.mrb[0].mxu0 %v3124
        %v3255 = vpop.f32.mrb[0].mxu0
        %v3256 = vadd.f32 0.0, %v3255
        %v3257 = vpop.f32.mrb[0].mxu0
        %v3258 = vpop.f32.mrb[0].mxu0
        %v3259 = vadd.f32 0.0, %v3258
        %v3260 = vpop.f32.mrb[0].mxu0
        %3261 = vmatprep.mubr.bf16.mxu0 0
        %3262 = vmatmul.mubr.bf16.gmra.mrb[0].mxu0 %v3125
        %v3263 = vpop.f32.mrb[0].mxu0
        %v3264 = vadd.f32 0.0, %v3263
        %v3265 = vpop.f32.mrb[0].mxu0
        %v3266 = vpop.f32.mrb[0].mxu0
        %v3267 = vadd.f32 0.0, %v3266
        %v3268 = vpop.f32.mrb[0].mxu0
        %3269 = vmatprep.mubr.bf16.mxu0 0
        %3270 = vmatmul.mubr.bf16.gmra.mrb[0].mxu0 %v3126
        %v3271 = vpop.f32.mrb[0].mxu0
        %v3272 = vadd.f32 0.0, %v3271
        %v3273 = vpop.f32.mrb[0].mxu0
        %v3274 = vpop.f32.mrb[0].mxu0
        %v3275 = vadd.f32 0.0, %v3274
        %v3276 = vpop.f32.mrb[0].mxu0
        %3277 = vmatprep.mubr.bf16.mxu0 0
        %3278 = vmatmul.mubr.bf16.gmra.mrb[0].mxu0 %v3127
        %v3279 = vpop.f32.mrb[0].mxu0
        %v3280 = vadd.f32 0.0, %v3279
        %v3281 = vpop.f32.mrb[0].mxu0
        %v3282 = vpop.f32.mrb[0].mxu0
        %v3283 = vadd.f32 0.0, %v3282
        %v3284 = vpop.f32.mrb[0].mxu0
        %3285 = vmatprep.mubr.bf16.mxu0 0
        %3286 = vmatmul.mubr.bf16.gmra.mrb[0].mxu0 %v3128
        %v3287 = vpop.f32.mrb[0].mxu0
        %v3288 = vadd.f32 0.0, %v3287
        %v3289 = vpop.f32.mrb[0].mxu0
        %v3290 = vpop.f32.mrb[0].mxu0
        %v3291 = vadd.f32 0.0, %v3290
        %v3292 = vpop.f32.mrb[0].mxu0
        %3293 = vmatprep.mubr.bf16.mxu0 0
        %3294 = vmatmul.mubr.bf16.gmra.mrb[0].mxu0 %v3129
        %v3295 = vpop.f32.mrb[0].mxu0
        %v3296 = vadd.f32 0.0, %v3295
        %v3297 = vpop.f32.mrb[0].mxu0
        %v3298 = vpop.f32.mrb[0].mxu0
        %v3299 = vadd.f32 0.0, %v3298
        %v3300 = vpop.f32.mrb[0].mxu0
        %3301 = vmatprep.mubr.bf16.mxu0 0
        %3302 = vmatmul.mubr.bf16.gmra.mrb[0].mxu0 %v3130
        %v3303 = vpop.f32.mrb[0].mxu0
        %v3304 = vadd.f32 0.0, %v3303
        %v3305 = vpop.f32.mrb[0].mxu0
        %v3306 = vpop.f32.mrb[0].mxu0
        %v3307 = vadd.f32 0.0, %v3306
        %v3308 = vpop.f32.mrb[0].mxu0
        %3309 = vmatprep.mubr.bf16.mxu0 0
        %3310 = vmatmul.mubr.bf16.gmra.mrb[0].mxu0 %v3131
        %v3311 = vpop.f32.mrb[0].mxu0
        %v3312 = vadd.f32 0.0, %v3311
        %v3313 = vpop.f32.mrb[0].mxu0
        %v3314 = vpop.f32.mrb[0].mxu0
        %v3315 = vadd.f32 0.0, %v3314
        %v3316 = vpop.f32.mrb[0].mxu0
        %3317 = vmatprep.mubr.bf16.mxu0 0
        %3318 = vmatmul.mubr.bf16.gmra.mrb[0].mxu0 %v3132
        %v3319 = vpop.f32.mrb[0].mxu0
        %v3320 = vadd.f32 0.0, %v3319
        %v3321 = vpop.f32.mrb[0].mxu0
        %v3322 = vpop.f32.mrb[0].mxu0
        %v3323 = vadd.f32 0.0, %v3322
        %v3324 = vpop.f32.mrb[0].mxu0
        %3325 = vmatprep.mubr.bf16.mxu0 0
        %3326 = vmatmul.mubr.bf16.gmra.mrb[0].mxu0 %v3133
        %v3327 = vpop.f32.mrb[0].mxu0
        %v3328 = vadd.f32 0.0, %v3327
        %v3329 = vpop.f32.mrb[0].mxu0
        %v3330 = vpop.f32.mrb[0].mxu0
        %v3331 = vadd.f32 0.0, %v3330
        %v3332 = vpop.f32.mrb[0].mxu0
        %3333 = vmatprep.mubr.bf16.mxu0 0
        %3334 = vmatmul.mubr.bf16.gmra.mrb[0].mxu0 %v3134
        %v3335 = vpop.f32.mrb[0].mxu0
        %v3336 = vadd.f32 0.0, %v3335
        %v3337 = vpop.f32.mrb[0].mxu0
        %v3338 = vpop.f32.mrb[0].mxu0
        %v3339 = vadd.f32 0.0, %v3338
        %v3340 = vpop.f32.mrb[0].mxu0
        %3341 = vdwg.mxu0
        %v3342 = vadd.f32 %v3020, %v3232
        %v3343 = vadd.f32 %v3021, %v3235
        %v3344 = vadd.f32 %v3022, %v3240
        %v3345 = vadd.f32 %v3023, %v3243
        %v3346 = vadd.f32 %v3024, %v3248
        %v3347 = vadd.f32 %v3025, %v3251
        %v3348 = vadd.f32 %v3026, %v3256
        %v3349 = vadd.f32 %v3027, %v3259
        %v3350 = vadd.f32 %v3028, %v3264
        %v3351 = vadd.f32 %v3029, %v3267
        %v3352 = vadd.f32 %v3030, %v3272
        %v3353 = vadd.f32 %v3031, %v3275
        %v3354 = vadd.f32 %v3032, %v3280
        %v3355 = vadd.f32 %v3033, %v3283
        %v3356 = vadd.f32 %v3034, %v3288
        %v3357 = vadd.f32 %v3035, %v3291
        %v3358 = vadd.f32 %v3036, %v3296
        %v3359 = vadd.f32 %v3037, %v3299
        %v3360 = vadd.f32 %v3038, %v3304
        %v3361 = vadd.f32 %v3039, %v3307
        %v3362 = vadd.f32 %v3040, %v3312
        %v3363 = vadd.f32 %v3041, %v3315
        %v3364 = vadd.f32 %v3042, %v3320
        %v3365 = vadd.f32 %v3043, %v3323
        %v3366 = vadd.f32 %v3044, %v3328
        %v3367 = vadd.f32 %v3045, %v3331
        %v3368 = vadd.f32 %v3046, %v3336
        %v3369 = vadd.f32 %v3047, %v3339
        %3370 = vst [vmem:[#allocation2] sm:$0xff] %v3342
        %3371 = vst [vmem:[#allocation2 + $0x8] sm:$0xff] %v3343
        %3372 = vst [vmem:[#allocation2 + $0x10] sm:$0xff] %v3344
        %3373 = vst [vmem:[#allocation2 + $0x18] sm:$0xff] %v3345
        %3374 = vst [vmem:[#allocation2 + $0x20] sm:$0xff] %v3346
        %3375 = vst [vmem:[#allocation2 + $0x28] sm:$0xff] %v3347
        %3376 = vst [vmem:[#allocation2 + $0x30] sm:$0xff] %v3348
        %3377 = vst [vmem:[#allocation2 + $0x38] sm:$0xff] %v3349
        %3378 = vst [vmem:[#allocation2 + $0x40] sm:$0xff] %v3350
        %3379 = vst [vmem:[#allocation2 + $0x48] sm:$0xff] %v3351
        %3380 = vst [vmem:[#allocation2 + $0x50] sm:$0xff] %v3352
        %3381 = vst [vmem:[#allocation2 + $0x58] sm:$0xff] %v3353
        %3382 = vst [vmem:[#allocation2 + $0x60] sm:$0xff] %v3354
        %3383 = vst [vmem:[#allocation2 + $0x68] sm:$0xff] %v3355
        %3384 = vst [vmem:[#allocation2 + $0x70] sm:$0xff] %v3356
        %3385 = vst [vmem:[#allocation2 + $0x78] sm:$0xff] %v3357
        %3386 = vst [vmem:[#allocation2 + $0x80] sm:$0xff] %v3358
        %3387 = vst [vmem:[#allocation2 + $0x88] sm:$0xff] %v3359
        %3388 = vst [vmem:[#allocation2 + $0x90] sm:$0xff] %v3360
        %3389 = vst [vmem:[#allocation2 + $0x98] sm:$0xff] %v3361
        %3390 = vst [vmem:[#allocation2 + $0xa0] sm:$0xff] %v3362
        %3391 = vst [vmem:[#allocation2 + $0xa8] sm:$0xff] %v3363
        %3392 = vst [vmem:[#allocation2 + $0xb0] sm:$0xff] %v3364
        %3393 = vst [vmem:[#allocation2 + $0xb8] sm:$0xff] %v3365
        %3394 = vst [vmem:[#allocation2 + $0xc0] sm:$0xff] %v3366
        %3395 = vst [vmem:[#allocation2 + $0xc8] sm:$0xff] %v3367
        %3396 = vst [vmem:[#allocation2 + $0xd0] sm:$0xff] %v3368
        %3397 = vst [vmem:[#allocation2 + $0xd8] sm:$0xff] %v3369
        %v3398 = vld [vmem:[%s185 + $0x10] sm:$0xf]
        %v3399 = vld [vmem:[%s185 + $0x14] sm:$0xf]
        %v3400 = vld [vmem:[%s185 + $0x18] sm:$0xf]
        %v3401 = vld [vmem:[%s185 + $0x1c] sm:$0xf]
        %v3402 = vld [vmem:[%s185 + $0x20] sm:$0xf]
        %v3403 = vld [vmem:[%s185 + $0x24] sm:$0xf]
        %v3404 = vld [vmem:[%s185 + $0x28] sm:$0xf]
        %v3405 = vld [vmem:[%s185 + $0x2c] sm:$0xf]
        %v3406 = vld [vmem:[%s185 + $0x30] sm:$0xf]
        %v3407 = vld [vmem:[%s185 + $0x34] sm:$0xf]
        %v3408 = vld [vmem:[%s185 + $0x38] sm:$0xf]
        %v3409 = vld [vmem:[%s185 + $0x3c] sm:$0xf]
        %v3410 = vld [vmem:[%s185 + $0x40] sm:$0xf]
        %v3411 = vld [vmem:[%s185 + $0x44] sm:$0xf]
        %v3412 = vld [vmem:[%s185 + $0x48] sm:$0xf]
        %v3413 = vld [vmem:[%s185 + $0x4c] sm:$0xf]
        %v3414 = vld [vmem:[%s185 + $0x50] sm:$0xf]
        %v3415 = vld [vmem:[%s185 + $0x54] sm:$0xf]
        %v3416 = vld [vmem:[%s185 + $0x58] sm:$0xf]
        %v3417 = vld [vmem:[%s185 + $0x5c] sm:$0xf]
        %v3418 = vld [vmem:[%s185 + $0x60] sm:$0xf]
        %v3419 = vld [vmem:[%s185 + $0x64] sm:$0xf]
        %v3420 = vld [vmem:[%s185 + $0x68] sm:$0xf]
        %v3421 = vld [vmem:[%s185 + $0x6c] sm:$0xf]
        %v3422 = vld [vmem:[%s185 + $0x70] sm:$0xf]
        %v3423 = vld [vmem:[%s185 + $0x74] sm:$0xf]
        %v3424 = vld [vmem:[%s185 + $0x78] sm:$0xf]
        %v3425 = vld [vmem:[%s185 + $0x7c] sm:$0xf]
        %v3426 = vld [vmem:[%s185 + $0x80] sm:$0x1]
        %v3427 = vld [vmem:[#allocation2] sm:$0xff]
        %v3428 = vld [vmem:[#allocation2 + $0x8] sm:$0xff]
        %v3429 = vld [vmem:[#allocation2 + $0x10] sm:$0xff]
        %v3430 = vld [vmem:[#allocation2 + $0x18] sm:$0xff]
        %v3431 = vld [vmem:[#allocation2 + $0x20] sm:$0xff]
        %v3432 = vld [vmem:[#allocation2 + $0x28] sm:$0xff]
        %v3433 = vld [vmem:[#allocation2 + $0x30] sm:$0xff]
        %v3434 = vld [vmem:[#allocation2 + $0x38] sm:$0xff]
        %v3435 = vld [vmem:[#allocation2 + $0x40] sm:$0xff]
        %v3436 = vld [vmem:[#allocation2 + $0x48] sm:$0xff]
        %v3437 = vld [vmem:[#allocation2 + $0x50] sm:$0xff]
        %v3438 = vld [vmem:[#allocation2 + $0x58] sm:$0xff]
        %v3439 = vld [vmem:[#allocation2 + $0x60] sm:$0xff]
        %v3440 = vld [vmem:[#allocation2 + $0x68] sm:$0xff]
        %v3441 = vld [vmem:[#allocation2 + $0x70] sm:$0xff]
        %v3442 = vld [vmem:[#allocation2 + $0x78] sm:$0xff]
        %v3443 = vld [vmem:[#allocation2 + $0x80] sm:$0xff]
        %v3444 = vld [vmem:[#allocation2 + $0x88] sm:$0xff]
        %v3445 = vld [vmem:[#allocation2 + $0x90] sm:$0xff]
        %v3446 = vld [vmem:[#allocation2 + $0x98] sm:$0xff]
        %v3447 = vld [vmem:[#allocation2 + $0xa0] sm:$0xff]
        %v3448 = vld [vmem:[#allocation2 + $0xa8] sm:$0xff]
        %v3449 = vld [vmem:[#allocation2 + $0xb0] sm:$0xff]
        %v3450 = vld [vmem:[#allocation2 + $0xb8] sm:$0xff]
        %v3451 = vld [vmem:[#allocation2 + $0xc0] sm:$0xff]
        %v3452 = vld [vmem:[#allocation2 + $0xc8] sm:$0xff]
        %v3453 = vld [vmem:[#allocation2 + $0xd0] sm:$0xff]
        %v3454 = vld [vmem:[#allocation2 + $0xd8] sm:$0xff]
        %s3455 = scalar_lea.vmem %s194, 448 [#allocation6]
        %v3456 = vld [vmem:[%s3455] sm:$0xf]
        %v3457 = vld [vmem:[%s3455 + $0x4] sm:$0xf]
        %v3458 = vld [vmem:[%s3455 + $0x8] sm:$0xf]
        %v3459 = vld [vmem:[%s3455 + $0xc] sm:$0xf]
        %v3460 = vld [vmem:[%s3455 + $0x10] sm:$0xf]
        %v3461 = vld [vmem:[%s3455 + $0x14] sm:$0xf]
        %v3462 = vld [vmem:[%s3455 + $0x18] sm:$0xf]
        %v3463 = vld [vmem:[%s3455 + $0x1c] sm:$0xf]
        %v3464 = vld [vmem:[%s3455 + $0x20] sm:$0xf]
        %v3465 = vld [vmem:[%s3455 + $0x24] sm:$0xf]
        %v3466 = vld [vmem:[%s3455 + $0x28] sm:$0xf]
        %v3467 = vld [vmem:[%s3455 + $0x2c] sm:$0xf]
        %v3468 = vld [vmem:[%s3455 + $0x30] sm:$0xf]
        %v3469 = vld [vmem:[%s3455 + $0x34] sm:$0xf]
        %v3470 = vld [vmem:[%s3455 + $0x38] sm:$0xf]
        %v3471 = vld [vmem:[%s3455 + $0x3c] sm:$0xf]
        %v3501 = vunpack.c.l.b16 %v3398
        %v3502 = vunpack.c.l.b16 %v3399
        %v3503 = vunpack.c.l.b16 %v3400
        %v3504 = vunpack.c.l.b16 %v3401
        %v3505 = vunpack.c.l.b16 %v3402
        %v3506 = vunpack.c.l.b16 %v3403
        %v3507 = vunpack.c.l.b16 %v3404
        %v3508 = vunpack.c.l.b16 %v3405
        %v3509 = vunpack.c.l.b16 %v3406
        %v3510 = vunpack.c.l.b16 %v3407
        %v3511 = vunpack.c.l.b16 %v3408
        %v3512 = vunpack.c.l.b16 %v3409
        %v3513 = vunpack.c.l.b16 %v3410
        %v3514 = vunpack.c.l.b16 %v3411
        %v3515 = vunpack.c.l.b16 %v3412
        %v3516 = vunpack.c.l.b16 %v3413
        %v3517 = vunpack.c.l.b16 %v3414
        %v3518 = vunpack.c.l.b16 %v3415
        %v3519 = vunpack.c.l.b16 %v3416
        %v3520 = vunpack.c.l.b16 %v3417
        %v3521 = vunpack.c.l.b16 %v3418
        %v3522 = vunpack.c.l.b16 %v3419
        %v3523 = vunpack.c.l.b16 %v3420
        %v3524 = vunpack.c.l.b16 %v3421
        %v3525 = vunpack.c.l.b16 %v3422
        %v3526 = vunpack.c.l.b16 %v3423
        %v3527 = vunpack.c.l.b16 %v3424
        %v3528 = vunpack.c.l.b16 %v3425
        %v3529 = vunpack.c.l.b16 %v3426
        %v3530 = vpack.c.b16 %v3502, %v3501
        %v3531 = vpack.c.b16 %v3504, %v3503
        %v3532 = vpack.c.b16 %v3506, %v3505
        %v3533 = vpack.c.b16 %v3508, %v3507
        %v3534 = vpack.c.b16 %v3510, %v3509
        %v3535 = vpack.c.b16 %v3512, %v3511
        %v3536 = vpack.c.b16 %v3514, %v3513
        %v3537 = vpack.c.b16 %v3516, %v3515
        %v3538 = vpack.c.b16 %v3518, %v3517
        %v3539 = vpack.c.b16 %v3520, %v3519
        %v3540 = vpack.c.b16 %v3522, %v3521
        %v3541 = vpack.c.b16 %v3524, %v3523
        %v3542 = vpack.c.b16 %v3526, %v3525
        %v3543 = vpack.c.b16 %v3528, %v3527
        %v3544 = vpack.c.b16 %v3529, %v3529
        %v3546 = vshrl.u32 %v3530, 16
        %v3548 = vshll.u32 %v3530, 16
        %v3550 = vrot.slane %v3548, 1
        %v3551 = vor.u32 %v3546, %v3550
        %v3553 = vshll.u32 %v3531, 16
        %v3555 = vrot.slane %v3553, 1
        %v3556 = vsel %vm801, %v3551, %v3555
        %v3557 = vshrl.u32 %v3531, 16
        %v3559 = vor.u32 %v3557, %v3555
        %v3561 = vshll.u32 %v3532, 16
        %v3563 = vrot.slane %v3561, 1
        %v3564 = vsel %vm801, %v3559, %v3563
        %v3565 = vshrl.u32 %v3532, 16
        %v3567 = vor.u32 %v3565, %v3563
        %v3569 = vshll.u32 %v3533, 16
        %v3571 = vrot.slane %v3569, 1
        %v3572 = vsel %vm801, %v3567, %v3571
        %v3573 = vshrl.u32 %v3533, 16
        %v3575 = vor.u32 %v3573, %v3571
        %v3577 = vshll.u32 %v3534, 16
        %v3579 = vrot.slane %v3577, 1
        %v3580 = vsel %vm801, %v3575, %v3579
        %v3581 = vshrl.u32 %v3534, 16
        %v3583 = vor.u32 %v3581, %v3579
        %v3585 = vshll.u32 %v3535, 16
        %v3587 = vrot.slane %v3585, 1
        %v3588 = vsel %vm801, %v3583, %v3587
        %v3589 = vshrl.u32 %v3535, 16
        %v3591 = vor.u32 %v3589, %v3587
        %v3593 = vshll.u32 %v3536, 16
        %v3595 = vrot.slane %v3593, 1
        %v3596 = vsel %vm801, %v3591, %v3595
        %v3597 = vshrl.u32 %v3536, 16
        %v3599 = vor.u32 %v3597, %v3595
        %v3601 = vshll.u32 %v3537, 16
        %v3603 = vrot.slane %v3601, 1
        %v3604 = vsel %vm801, %v3599, %v3603
        %v3605 = vshrl.u32 %v3537, 16
        %v3607 = vor.u32 %v3605, %v3603
        %v3609 = vshll.u32 %v3538, 16
        %v3611 = vrot.slane %v3609, 1
        %v3612 = vsel %vm801, %v3607, %v3611
        %v3613 = vshrl.u32 %v3538, 16
        %v3615 = vor.u32 %v3613, %v3611
        %v3617 = vshll.u32 %v3539, 16
        %v3619 = vrot.slane %v3617, 1
        %v3620 = vsel %vm801, %v3615, %v3619
        %v3621 = vshrl.u32 %v3539, 16
        %v3623 = vor.u32 %v3621, %v3619
        %v3625 = vshll.u32 %v3540, 16
        %v3627 = vrot.slane %v3625, 1
        %v3628 = vsel %vm801, %v3623, %v3627
        %v3629 = vshrl.u32 %v3540, 16
        %v3631 = vor.u32 %v3629, %v3627
        %v3633 = vshll.u32 %v3541, 16
        %v3635 = vrot.slane %v3633, 1
        %v3636 = vsel %vm801, %v3631, %v3635
        %v3637 = vshrl.u32 %v3541, 16
        %v3639 = vor.u32 %v3637, %v3635
        %v3641 = vshll.u32 %v3542, 16
        %v3643 = vrot.slane %v3641, 1
        %v3644 = vsel %vm801, %v3639, %v3643
        %v3645 = vshrl.u32 %v3542, 16
        %v3647 = vor.u32 %v3645, %v3643
        %v3649 = vshll.u32 %v3543, 16
        %v3651 = vrot.slane %v3649, 1
        %v3652 = vsel %vm801, %v3647, %v3651
        %v3653 = vshrl.u32 %v3543, 16
        %v3655 = vor.u32 %v3653, %v3651
        %v3657 = vshll.u32 %v3544, 16
        %v3659 = vrot.slane %v3657, 1
        %v3660 = vsel %vm801, %v3655, %v3659
        %v3691 = vunpack.c.l.b16 %v3456
        %v3692 = vunpack.c.l.b16 %v3457
        %v3693 = vunpack.c.l.b16 %v3458
        %v3694 = vunpack.c.l.b16 %v3459
        %v3695 = vunpack.c.l.b16 %v3460
        %v3696 = vunpack.c.l.b16 %v3461
        %v3697 = vunpack.c.l.b16 %v3462
        %v3698 = vunpack.c.l.b16 %v3463
        %v3699 = vunpack.c.l.b16 %v3464
        %v3700 = vunpack.c.l.b16 %v3465
        %v3701 = vunpack.c.l.b16 %v3466
        %v3702 = vunpack.c.l.b16 %v3467
        %v3703 = vunpack.c.l.b16 %v3468
        %v3704 = vunpack.c.l.b16 %v3469
        %v3705 = vunpack.c.l.b16 %v3470
        %v3706 = vunpack.c.l.b16 %v3471
        %v3707 = vpack.c.b16 %v3692, %v3691
        %v3708 = vpack.c.b16 %v3694, %v3693
        %v3709 = vpack.c.b16 %v3696, %v3695
        %v3710 = vpack.c.b16 %v3698, %v3697
        %v3711 = vpack.c.b16 %v3700, %v3699
        %v3712 = vpack.c.b16 %v3702, %v3701
        %v3713 = vpack.c.b16 %v3704, %v3703
        %v3714 = vpack.c.b16 %v3706, %v3705
        %3723 = vmatprep.subr.bf16.mxu0 0
        %3724 = vmatpush1.bf16.msra.mxu0 %v3707
        %3725 = vmatprep.subr.bf16.mxu0 0
        %3726 = vmatpush1.bf16.msra.mxu0 %v3708
        %3727 = vmatprep.subr.bf16.mxu0 0
        %3728 = vmatpush1.bf16.msra.mxu0 %v3709
        %3729 = vmatprep.subr.bf16.mxu0 0
        %3730 = vmatpush1.bf16.msra.mxu0 %v3710
        %3731 = vmatprep.subr.bf16.mxu0 0
        %3732 = vmatpush1.bf16.msra.mxu0 %v3711
        %3733 = vmatprep.subr.bf16.mxu0 0
        %3734 = vmatpush1.bf16.msra.mxu0 %v3712
        %3735 = vmatprep.subr.bf16.mxu0 0
        %3736 = vmatpush1.bf16.msra.mxu0 %v3713
        %3737 = vmatprep.subr.bf16.mxu0 0
        %3738 = vmatpush1.bf16.msra.mxu0 %v3714
        %3739 = vmatprep.subr.bf16.mxu0 0
        %3740 = vmatpush1.bf16.msra.mxu0 0
        %3741 = vmatprep.subr.bf16.mxu0 0
        %3742 = vmatpush1.bf16.msra.mxu0 0
        %3743 = vmatprep.subr.bf16.mxu0 0
        %3744 = vmatpush1.bf16.msra.mxu0 0
        %3745 = vmatprep.subr.bf16.mxu0 0
        %3746 = vmatpush1.bf16.msra.mxu0 0
        %3747 = vmatprep.subr.bf16.mxu0 0
        %3748 = vmatpush1.bf16.msra.mxu0 0
        %3749 = vmatprep.subr.bf16.mxu0 0
        %3750 = vmatpush1.bf16.msra.mxu0 0
        %3751 = vmatprep.subr.bf16.mxu0 0
        %3752 = vmatpush1.bf16.msra.mxu0 0
        %3753 = vmatprep.subr.bf16.mxu0 0
        %3754 = vmatpush1.bf16.msra.mxu0 0
        %3755 = vmatprep.mubr.bf16.mxu0 0
        %3756 = vmatmul.mubr.bf16.gmra.mrb[0].mxu0 %v3556
        %v3757 = vpop.f32.mrb[0].mxu0
        %v3758 = vadd.f32 0.0, %v3757
        %v3759 = vpop.f32.mrb[0].mxu0
        %v3760 = vpop.f32.mrb[0].mxu0
        %v3761 = vadd.f32 0.0, %v3760
        %v3762 = vpop.f32.mrb[0].mxu0
        %3763 = vmatprep.mubr.bf16.mxu0 0
        %3764 = vmatmul.mubr.bf16.gmra.mrb[0].mxu0 %v3564
        %v3765 = vpop.f32.mrb[0].mxu0
        %v3766 = vadd.f32 0.0, %v3765
        %v3767 = vpop.f32.mrb[0].mxu0
        %v3768 = vpop.f32.mrb[0].mxu0
        %v3769 = vadd.f32 0.0, %v3768
        %v3770 = vpop.f32.mrb[0].mxu0
        %3771 = vmatprep.mubr.bf16.mxu0 0
        %3772 = vmatmul.mubr.bf16.gmra.mrb[0].mxu0 %v3572
        %v3773 = vpop.f32.mrb[0].mxu0
        %v3774 = vadd.f32 0.0, %v3773
        %v3775 = vpop.f32.mrb[0].mxu0
        %v3776 = vpop.f32.mrb[0].mxu0
        %v3777 = vadd.f32 0.0, %v3776
        %v3778 = vpop.f32.mrb[0].mxu0
        %3779 = vmatprep.mubr.bf16.mxu0 0
        %3780 = vmatmul.mubr.bf16.gmra.mrb[0].mxu0 %v3580
        %v3781 = vpop.f32.mrb[0].mxu0
        %v3782 = vadd.f32 0.0, %v3781
        %v3783 = vpop.f32.mrb[0].mxu0
        %v3784 = vpop.f32.mrb[0].mxu0
        %v3785 = vadd.f32 0.0, %v3784
        %v3786 = vpop.f32.mrb[0].mxu0
        %3787 = vmatprep.mubr.bf16.mxu0 0
        %3788 = vmatmul.mubr.bf16.gmra.mrb[0].mxu0 %v3588
        %v3789 = vpop.f32.mrb[0].mxu0
        %v3790 = vadd.f32 0.0, %v3789
        %v3791 = vpop.f32.mrb[0].mxu0
        %v3792 = vpop.f32.mrb[0].mxu0
        %v3793 = vadd.f32 0.0, %v3792
        %v3794 = vpop.f32.mrb[0].mxu0
        %3795 = vmatprep.mubr.bf16.mxu0 0
        %3796 = vmatmul.mubr.bf16.gmra.mrb[0].mxu0 %v3596
        %v3797 = vpop.f32.mrb[0].mxu0
        %v3798 = vadd.f32 0.0, %v3797
        %v3799 = vpop.f32.mrb[0].mxu0
        %v3800 = vpop.f32.mrb[0].mxu0
        %v3801 = vadd.f32 0.0, %v3800
        %v3802 = vpop.f32.mrb[0].mxu0
        %3803 = vmatprep.mubr.bf16.mxu0 0
        %3804 = vmatmul.mubr.bf16.gmra.mrb[0].mxu0 %v3604
        %v3805 = vpop.f32.mrb[0].mxu0
        %v3806 = vadd.f32 0.0, %v3805
        %v3807 = vpop.f32.mrb[0].mxu0
        %v3808 = vpop.f32.mrb[0].mxu0
        %v3809 = vadd.f32 0.0, %v3808
        %v3810 = vpop.f32.mrb[0].mxu0
        %3811 = vmatprep.mubr.bf16.mxu0 0
        %3812 = vmatmul.mubr.bf16.gmra.mrb[0].mxu0 %v3612
        %v3813 = vpop.f32.mrb[0].mxu0
        %v3814 = vadd.f32 0.0, %v3813
        %v3815 = vpop.f32.mrb[0].mxu0
        %v3816 = vpop.f32.mrb[0].mxu0
        %v3817 = vadd.f32 0.0, %v3816
        %v3818 = vpop.f32.mrb[0].mxu0
        %3819 = vmatprep.mubr.bf16.mxu0 0
        %3820 = vmatmul.mubr.bf16.gmra.mrb[0].mxu0 %v3620
        %v3821 = vpop.f32.mrb[0].mxu0
        %v3822 = vadd.f32 0.0, %v3821
        %v3823 = vpop.f32.mrb[0].mxu0
        %v3824 = vpop.f32.mrb[0].mxu0
        %v3825 = vadd.f32 0.0, %v3824
        %v3826 = vpop.f32.mrb[0].mxu0
        %3827 = vmatprep.mubr.bf16.mxu0 0
        %3828 = vmatmul.mubr.bf16.gmra.mrb[0].mxu0 %v3628
        %v3829 = vpop.f32.mrb[0].mxu0
        %v3830 = vadd.f32 0.0, %v3829
        %v3831 = vpop.f32.mrb[0].mxu0
        %v3832 = vpop.f32.mrb[0].mxu0
        %v3833 = vadd.f32 0.0, %v3832
        %v3834 = vpop.f32.mrb[0].mxu0
        %3835 = vmatprep.mubr.bf16.mxu0 0
        %3836 = vmatmul.mubr.bf16.gmra.mrb[0].mxu0 %v3636
        %v3837 = vpop.f32.mrb[0].mxu0
        %v3838 = vadd.f32 0.0, %v3837
        %v3839 = vpop.f32.mrb[0].mxu0
        %v3840 = vpop.f32.mrb[0].mxu0
        %v3841 = vadd.f32 0.0, %v3840
        %v3842 = vpop.f32.mrb[0].mxu0
        %3843 = vmatprep.mubr.bf16.mxu0 0
        %3844 = vmatmul.mubr.bf16.gmra.mrb[0].mxu0 %v3644
        %v3845 = vpop.f32.mrb[0].mxu0
        %v3846 = vadd.f32 0.0, %v3845
        %v3847 = vpop.f32.mrb[0].mxu0
        %v3848 = vpop.f32.mrb[0].mxu0
        %v3849 = vadd.f32 0.0, %v3848
        %v3850 = vpop.f32.mrb[0].mxu0
        %3851 = vmatprep.mubr.bf16.mxu0 0
        %3852 = vmatmul.mubr.bf16.gmra.mrb[0].mxu0 %v3652
        %v3853 = vpop.f32.mrb[0].mxu0
        %v3854 = vadd.f32 0.0, %v3853
        %v3855 = vpop.f32.mrb[0].mxu0
        %v3856 = vpop.f32.mrb[0].mxu0
        %v3857 = vadd.f32 0.0, %v3856
        %v3858 = vpop.f32.mrb[0].mxu0
        %3859 = vmatprep.mubr.bf16.mxu0 0
        %3860 = vmatmul.mubr.bf16.gmra.mrb[0].mxu0 %v3660
        %v3861 = vpop.f32.mrb[0].mxu0
        %v3862 = vadd.f32 0.0, %v3861
        %v3863 = vpop.f32.mrb[0].mxu0
        %v3864 = vpop.f32.mrb[0].mxu0
        %v3865 = vadd.f32 0.0, %v3864
        %v3866 = vpop.f32.mrb[0].mxu0
        %3867 = vdwg.mxu0
        %v3868 = vadd.f32 %v3427, %v3758
        %v3869 = vadd.f32 %v3428, %v3761
        %v3870 = vadd.f32 %v3429, %v3766
        %v3871 = vadd.f32 %v3430, %v3769
        %v3872 = vadd.f32 %v3431, %v3774
        %v3873 = vadd.f32 %v3432, %v3777
        %v3874 = vadd.f32 %v3433, %v3782
        %v3875 = vadd.f32 %v3434, %v3785
        %v3876 = vadd.f32 %v3435, %v3790
        %v3877 = vadd.f32 %v3436, %v3793
        %v3878 = vadd.f32 %v3437, %v3798
        %v3879 = vadd.f32 %v3438, %v3801
        %v3880 = vadd.f32 %v3439, %v3806
        %v3881 = vadd.f32 %v3440, %v3809
        %v3882 = vadd.f32 %v3441, %v3814
        %v3883 = vadd.f32 %v3442, %v3817
        %v3884 = vadd.f32 %v3443, %v3822
        %v3885 = vadd.f32 %v3444, %v3825
        %v3886 = vadd.f32 %v3445, %v3830
        %v3887 = vadd.f32 %v3446, %v3833
        %v3888 = vadd.f32 %v3447, %v3838
        %v3889 = vadd.f32 %v3448, %v3841
        %v3890 = vadd.f32 %v3449, %v3846
        %v3891 = vadd.f32 %v3450, %v3849
        %v3892 = vadd.f32 %v3451, %v3854
        %v3893 = vadd.f32 %v3452, %v3857
        %v3894 = vadd.f32 %v3453, %v3862
        %v3895 = vadd.f32 %v3454, %v3865
        %3896 = vst [vmem:[#allocation2] sm:$0xff] %v3868
        %3897 = vst [vmem:[#allocation2 + $0x8] sm:$0xff] %v3869
        %3898 = vst [vmem:[#allocation2 + $0x10] sm:$0xff] %v3870
        %3899 = vst [vmem:[#allocation2 + $0x18] sm:$0xff] %v3871
        %3900 = vst [vmem:[#allocation2 + $0x20] sm:$0xff] %v3872
        %3901 = vst [vmem:[#allocation2 + $0x28] sm:$0xff] %v3873
        %3902 = vst [vmem:[#allocation2 + $0x30] sm:$0xff] %v3874
        %3903 = vst [vmem:[#allocation2 + $0x38] sm:$0xff] %v3875
        %3904 = vst [vmem:[#allocation2 + $0x40] sm:$0xff] %v3876
        %3905 = vst [vmem:[#allocation2 + $0x48] sm:$0xff] %v3877
        %3906 = vst [vmem:[#allocation2 + $0x50] sm:$0xff] %v3878
        %3907 = vst [vmem:[#allocation2 + $0x58] sm:$0xff] %v3879
        %3908 = vst [vmem:[#allocation2 + $0x60] sm:$0xff] %v3880
        %3909 = vst [vmem:[#allocation2 + $0x68] sm:$0xff] %v3881
        %3910 = vst [vmem:[#allocation2 + $0x70] sm:$0xff] %v3882
        %3911 = vst [vmem:[#allocation2 + $0x78] sm:$0xff] %v3883
        %3912 = vst [vmem:[#allocation2 + $0x80] sm:$0xff] %v3884
        %3913 = vst [vmem:[#allocation2 + $0x88] sm:$0xff] %v3885
        %3914 = vst [vmem:[#allocation2 + $0x90] sm:$0xff] %v3886
        %3915 = vst [vmem:[#allocation2 + $0x98] sm:$0xff] %v3887
        %3916 = vst [vmem:[#allocation2 + $0xa0] sm:$0xff] %v3888
        %3917 = vst [vmem:[#allocation2 + $0xa8] sm:$0xff] %v3889
        %3918 = vst [vmem:[#allocation2 + $0xb0] sm:$0xff] %v3890
        %3919 = vst [vmem:[#allocation2 + $0xb8] sm:$0xff] %v3891
        %3920 = vst [vmem:[#allocation2 + $0xc0] sm:$0xff] %v3892
        %3921 = vst [vmem:[#allocation2 + $0xc8] sm:$0xff] %v3893
        %3922 = vst [vmem:[#allocation2 + $0xd0] sm:$0xff] %v3894
        %3923 = vst [vmem:[#allocation2 + $0xd8] sm:$0xff] %v3895
        %v3924 = vld [vmem:[%s185 + $0x10] sm:$0xe]
        %v3925 = vld [vmem:[%s185 + $0x14] sm:$0xf]
        %v3926 = vld [vmem:[%s185 + $0x18] sm:$0xf]
        %v3927 = vld [vmem:[%s185 + $0x1c] sm:$0xf]
        %v3928 = vld [vmem:[%s185 + $0x20] sm:$0xf]
        %v3929 = vld [vmem:[%s185 + $0x24] sm:$0xf]
        %v3930 = vld [vmem:[%s185 + $0x28] sm:$0xf]
        %v3931 = vld [vmem:[%s185 + $0x2c] sm:$0xf]
        %v3932 = vld [vmem:[%s185 + $0x30] sm:$0xf]
        %v3933 = vld [vmem:[%s185 + $0x34] sm:$0xf]
        %v3934 = vld [vmem:[%s185 + $0x38] sm:$0xf]
        %v3935 = vld [vmem:[%s185 + $0x3c] sm:$0xf]
        %v3936 = vld [vmem:[%s185 + $0x40] sm:$0xf]
        %v3937 = vld [vmem:[%s185 + $0x44] sm:$0xf]
        %v3938 = vld [vmem:[%s185 + $0x48] sm:$0xf]
        %v3939 = vld [vmem:[%s185 + $0x4c] sm:$0xf]
        %v3940 = vld [vmem:[%s185 + $0x50] sm:$0xf]
        %v3941 = vld [vmem:[%s185 + $0x54] sm:$0xf]
        %v3942 = vld [vmem:[%s185 + $0x58] sm:$0xf]
        %v3943 = vld [vmem:[%s185 + $0x5c] sm:$0xf]
        %v3944 = vld [vmem:[%s185 + $0x60] sm:$0xf]
        %v3945 = vld [vmem:[%s185 + $0x64] sm:$0xf]
        %v3946 = vld [vmem:[%s185 + $0x68] sm:$0xf]
        %v3947 = vld [vmem:[%s185 + $0x6c] sm:$0xf]
        %v3948 = vld [vmem:[%s185 + $0x70] sm:$0xf]
        %v3949 = vld [vmem:[%s185 + $0x74] sm:$0xf]
        %v3950 = vld [vmem:[%s185 + $0x78] sm:$0xf]
        %v3951 = vld [vmem:[%s185 + $0x7c] sm:$0xf]
        %v3952 = vld [vmem:[%s185 + $0x80] sm:$0x1]
        %v3953 = vld [vmem:[#allocation2] sm:$0xff]
        %v3954 = vld [vmem:[#allocation2 + $0x8] sm:$0xff]
        %v3955 = vld [vmem:[#allocation2 + $0x10] sm:$0xff]
        %v3956 = vld [vmem:[#allocation2 + $0x18] sm:$0xff]
        %v3957 = vld [vmem:[#allocation2 + $0x20] sm:$0xff]
        %v3958 = vld [vmem:[#allocation2 + $0x28] sm:$0xff]
        %v3959 = vld [vmem:[#allocation2 + $0x30] sm:$0xff]
        %v3960 = vld [vmem:[#allocation2 + $0x38] sm:$0xff]
        %v3961 = vld [vmem:[#allocation2 + $0x40] sm:$0xff]
        %v3962 = vld [vmem:[#allocation2 + $0x48] sm:$0xff]
        %v3963 = vld [vmem:[#allocation2 + $0x50] sm:$0xff]
        %v3964 = vld [vmem:[#allocation2 + $0x58] sm:$0xff]
        %v3965 = vld [vmem:[#allocation2 + $0x60] sm:$0xff]
        %v3966 = vld [vmem:[#allocation2 + $0x68] sm:$0xff]
        %v3967 = vld [vmem:[#allocation2 + $0x70] sm:$0xff]
        %v3968 = vld [vmem:[#allocation2 + $0x78] sm:$0xff]
        %v3969 = vld [vmem:[#allocation2 + $0x80] sm:$0xff]
        %v3970 = vld [vmem:[#allocation2 + $0x88] sm:$0xff]
        %v3971 = vld [vmem:[#allocation2 + $0x90] sm:$0xff]
        %v3972 = vld [vmem:[#allocation2 + $0x98] sm:$0xff]
        %v3973 = vld [vmem:[#allocation2 + $0xa0] sm:$0xff]
        %v3974 = vld [vmem:[#allocation2 + $0xa8] sm:$0xff]
        %v3975 = vld [vmem:[#allocation2 + $0xb0] sm:$0xff]
        %v3976 = vld [vmem:[#allocation2 + $0xb8] sm:$0xff]
        %v3977 = vld [vmem:[#allocation2 + $0xc0] sm:$0xff]
        %v3978 = vld [vmem:[#allocation2 + $0xc8] sm:$0xff]
        %v3979 = vld [vmem:[#allocation2 + $0xd0] sm:$0xff]
        %v3980 = vld [vmem:[#allocation2 + $0xd8] sm:$0xff]
        %s3981 = scalar_lea.vmem %s194, 512 [#allocation6]
        %v3982 = vld [vmem:[%s3981] sm:$0xf]
        %v3983 = vld [vmem:[%s3981 + $0x4] sm:$0xf]
        %v3984 = vld [vmem:[%s3981 + $0x8] sm:$0xf]
        %v3985 = vld [vmem:[%s3981 + $0xc] sm:$0xf]
        %v3986 = vld [vmem:[%s3981 + $0x10] sm:$0xf]
        %v3987 = vld [vmem:[%s3981 + $0x14] sm:$0xf]
        %v3988 = vld [vmem:[%s3981 + $0x18] sm:$0xf]
        %v3989 = vld [vmem:[%s3981 + $0x1c] sm:$0xf]
        %v3990 = vld [vmem:[%s3981 + $0x20] sm:$0xf]
        %v3991 = vld [vmem:[%s3981 + $0x24] sm:$0xf]
        %v3992 = vld [vmem:[%s3981 + $0x28] sm:$0xf]
        %v3993 = vld [vmem:[%s3981 + $0x2c] sm:$0xf]
        %v3994 = vld [vmem:[%s3981 + $0x30] sm:$0xf]
        %v3995 = vld [vmem:[%s3981 + $0x34] sm:$0xf]
        %v3996 = vld [vmem:[%s3981 + $0x38] sm:$0xf]
        %v3997 = vld [vmem:[%s3981 + $0x3c] sm:$0xf]
        %v4027 = vunpack.c.l.b16 %v3924
        %v4028 = vunpack.c.l.b16 %v3925
        %v4029 = vunpack.c.l.b16 %v3926
        %v4030 = vunpack.c.l.b16 %v3927
        %v4031 = vunpack.c.l.b16 %v3928
        %v4032 = vunpack.c.l.b16 %v3929
        %v4033 = vunpack.c.l.b16 %v3930
        %v4034 = vunpack.c.l.b16 %v3931
        %v4035 = vunpack.c.l.b16 %v3932
        %v4036 = vunpack.c.l.b16 %v3933
        %v4037 = vunpack.c.l.b16 %v3934
        %v4038 = vunpack.c.l.b16 %v3935
        %v4039 = vunpack.c.l.b16 %v3936
        %v4040 = vunpack.c.l.b16 %v3937
        %v4041 = vunpack.c.l.b16 %v3938
        %v4042 = vunpack.c.l.b16 %v3939
        %v4043 = vunpack.c.l.b16 %v3940
        %v4044 = vunpack.c.l.b16 %v3941
        %v4045 = vunpack.c.l.b16 %v3942
        %v4046 = vunpack.c.l.b16 %v3943
        %v4047 = vunpack.c.l.b16 %v3944
        %v4048 = vunpack.c.l.b16 %v3945
        %v4049 = vunpack.c.l.b16 %v3946
        %v4050 = vunpack.c.l.b16 %v3947
        %v4051 = vunpack.c.l.b16 %v3948
        %v4052 = vunpack.c.l.b16 %v3949
        %v4053 = vunpack.c.l.b16 %v3950
        %v4054 = vunpack.c.l.b16 %v3951
        %v4055 = vunpack.c.l.b16 %v3952
        %v4056 = vpack.c.b16 %v4028, %v4027
        %v4057 = vpack.c.b16 %v4030, %v4029
        %v4058 = vpack.c.b16 %v4032, %v4031
        %v4059 = vpack.c.b16 %v4034, %v4033
        %v4060 = vpack.c.b16 %v4036, %v4035
        %v4061 = vpack.c.b16 %v4038, %v4037
        %v4062 = vpack.c.b16 %v4040, %v4039
        %v4063 = vpack.c.b16 %v4042, %v4041
        %v4064 = vpack.c.b16 %v4044, %v4043
        %v4065 = vpack.c.b16 %v4046, %v4045
        %v4066 = vpack.c.b16 %v4048, %v4047
        %v4067 = vpack.c.b16 %v4050, %v4049
        %v4068 = vpack.c.b16 %v4052, %v4051
        %v4069 = vpack.c.b16 %v4054, %v4053
        %v4070 = vpack.c.b16 %v4055, %v4055
        %v4071 = vrot.slane %v4056, 1
        %v4072 = vrot.slane %v4057, 1
        %v4073 = vsel %vm1328, %v4071, %v4072
        %v4074 = vrot.slane %v4058, 1
        %v4075 = vsel %vm1328, %v4072, %v4074
        %v4076 = vrot.slane %v4059, 1
        %v4077 = vsel %vm1328, %v4074, %v4076
        %v4078 = vrot.slane %v4060, 1
        %v4079 = vsel %vm1328, %v4076, %v4078
        %v4080 = vrot.slane %v4061, 1
        %v4081 = vsel %vm1328, %v4078, %v4080
        %v4082 = vrot.slane %v4062, 1
        %v4083 = vsel %vm1328, %v4080, %v4082
        %v4084 = vrot.slane %v4063, 1
        %v4085 = vsel %vm1328, %v4082, %v4084
        %v4086 = vrot.slane %v4064, 1
        %v4087 = vsel %vm1328, %v4084, %v4086
        %v4088 = vrot.slane %v4065, 1
        %v4089 = vsel %vm1328, %v4086, %v4088
        %v4090 = vrot.slane %v4066, 1
        %v4091 = vsel %vm1328, %v4088, %v4090
        %v4092 = vrot.slane %v4067, 1
        %v4093 = vsel %vm1328, %v4090, %v4092
        %v4094 = vrot.slane %v4068, 1
        %v4095 = vsel %vm1328, %v4092, %v4094
        %v4096 = vrot.slane %v4069, 1
        %v4097 = vsel %vm1328, %v4094, %v4096
        %v4098 = vrot.slane %v4070, 1
        %v4099 = vsel %vm1328, %v4096, %v4098
        %v4130 = vunpack.c.l.b16 %v3982
        %v4131 = vunpack.c.l.b16 %v3983
        %v4132 = vunpack.c.l.b16 %v3984
        %v4133 = vunpack.c.l.b16 %v3985
        %v4134 = vunpack.c.l.b16 %v3986
        %v4135 = vunpack.c.l.b16 %v3987
        %v4136 = vunpack.c.l.b16 %v3988
        %v4137 = vunpack.c.l.b16 %v3989
        %v4138 = vunpack.c.l.b16 %v3990
        %v4139 = vunpack.c.l.b16 %v3991
        %v4140 = vunpack.c.l.b16 %v3992
        %v4141 = vunpack.c.l.b16 %v3993
        %v4142 = vunpack.c.l.b16 %v3994
        %v4143 = vunpack.c.l.b16 %v3995
        %v4144 = vunpack.c.l.b16 %v3996
        %v4145 = vunpack.c.l.b16 %v3997
        %v4146 = vpack.c.b16 %v4131, %v4130
        %v4147 = vpack.c.b16 %v4133, %v4132
        %v4148 = vpack.c.b16 %v4135, %v4134
        %v4149 = vpack.c.b16 %v4137, %v4136
        %v4150 = vpack.c.b16 %v4139, %v4138
        %v4151 = vpack.c.b16 %v4141, %v4140
        %v4152 = vpack.c.b16 %v4143, %v4142
        %v4153 = vpack.c.b16 %v4145, %v4144
        %4162 = vmatprep.subr.bf16.mxu0 0
        %4163 = vmatpush1.bf16.msra.mxu0 %v4146
        %4164 = vmatprep.subr.bf16.mxu0 0
        %4165 = vmatpush1.bf16.msra.mxu0 %v4147
        %4166 = vmatprep.subr.bf16.mxu0 0
        %4167 = vmatpush1.bf16.msra.mxu0 %v4148
        %4168 = vmatprep.subr.bf16.mxu0 0
        %4169 = vmatpush1.bf16.msra.mxu0 %v4149
        %4170 = vmatprep.subr.bf16.mxu0 0
        %4171 = vmatpush1.bf16.msra.mxu0 %v4150
        %4172 = vmatprep.subr.bf16.mxu0 0
        %4173 = vmatpush1.bf16.msra.mxu0 %v4151
        %4174 = vmatprep.subr.bf16.mxu0 0
        %4175 = vmatpush1.bf16.msra.mxu0 %v4152
        %4176 = vmatprep.subr.bf16.mxu0 0
        %4177 = vmatpush1.bf16.msra.mxu0 %v4153
        %4178 = vmatprep.subr.bf16.mxu0 0
        %4179 = vmatpush1.bf16.msra.mxu0 0
        %4180 = vmatprep.subr.bf16.mxu0 0
        %4181 = vmatpush1.bf16.msra.mxu0 0
        %4182 = vmatprep.subr.bf16.mxu0 0
        %4183 = vmatpush1.bf16.msra.mxu0 0
        %4184 = vmatprep.subr.bf16.mxu0 0
        %4185 = vmatpush1.bf16.msra.mxu0 0
        %4186 = vmatprep.subr.bf16.mxu0 0
        %4187 = vmatpush1.bf16.msra.mxu0 0
        %4188 = vmatprep.subr.bf16.mxu0 0
        %4189 = vmatpush1.bf16.msra.mxu0 0
        %4190 = vmatprep.subr.bf16.mxu0 0
        %4191 = vmatpush1.bf16.msra.mxu0 0
        %4192 = vmatprep.subr.bf16.mxu0 0
        %4193 = vmatpush1.bf16.msra.mxu0 0
        %4194 = vmatprep.mubr.bf16.mxu0 0
        %4195 = vmatmul.mubr.bf16.gmra.mrb[0].mxu0 %v4073
        %v4196 = vpop.f32.mrb[0].mxu0
        %v4197 = vadd.f32 0.0, %v4196
        %v4198 = vpop.f32.mrb[0].mxu0
        %v4199 = vpop.f32.mrb[0].mxu0
        %v4200 = vadd.f32 0.0, %v4199
        %v4201 = vpop.f32.mrb[0].mxu0
        %4202 = vmatprep.mubr.bf16.mxu0 0
        %4203 = vmatmul.mubr.bf16.gmra.mrb[0].mxu0 %v4075
        %v4204 = vpop.f32.mrb[0].mxu0
        %v4205 = vadd.f32 0.0, %v4204
        %v4206 = vpop.f32.mrb[0].mxu0
        %v4207 = vpop.f32.mrb[0].mxu0
        %v4208 = vadd.f32 0.0, %v4207
        %v4209 = vpop.f32.mrb[0].mxu0
        %4210 = vmatprep.mubr.bf16.mxu0 0
        %4211 = vmatmul.mubr.bf16.gmra.mrb[0].mxu0 %v4077
        %v4212 = vpop.f32.mrb[0].mxu0
        %v4213 = vadd.f32 0.0, %v4212
        %v4214 = vpop.f32.mrb[0].mxu0
        %v4215 = vpop.f32.mrb[0].mxu0
        %v4216 = vadd.f32 0.0, %v4215
        %v4217 = vpop.f32.mrb[0].mxu0
        %4218 = vmatprep.mubr.bf16.mxu0 0
        %4219 = vmatmul.mubr.bf16.gmra.mrb[0].mxu0 %v4079
        %v4220 = vpop.f32.mrb[0].mxu0
        %v4221 = vadd.f32 0.0, %v4220
        %v4222 = vpop.f32.mrb[0].mxu0
        %v4223 = vpop.f32.mrb[0].mxu0
        %v4224 = vadd.f32 0.0, %v4223
        %v4225 = vpop.f32.mrb[0].mxu0
        %4226 = vmatprep.mubr.bf16.mxu0 0
        %4227 = vmatmul.mubr.bf16.gmra.mrb[0].mxu0 %v4081
        %v4228 = vpop.f32.mrb[0].mxu0
        %v4229 = vadd.f32 0.0, %v4228
        %v4230 = vpop.f32.mrb[0].mxu0
        %v4231 = vpop.f32.mrb[0].mxu0
        %v4232 = vadd.f32 0.0, %v4231
        %v4233 = vpop.f32.mrb[0].mxu0
        %4234 = vmatprep.mubr.bf16.mxu0 0
        %4235 = vmatmul.mubr.bf16.gmra.mrb[0].mxu0 %v4083
        %v4236 = vpop.f32.mrb[0].mxu0
        %v4237 = vadd.f32 0.0, %v4236
        %v4238 = vpop.f32.mrb[0].mxu0
        %v4239 = vpop.f32.mrb[0].mxu0
        %v4240 = vadd.f32 0.0, %v4239
        %v4241 = vpop.f32.mrb[0].mxu0
        %4242 = vmatprep.mubr.bf16.mxu0 0
        %4243 = vmatmul.mubr.bf16.gmra.mrb[0].mxu0 %v4085
        %v4244 = vpop.f32.mrb[0].mxu0
        %v4245 = vadd.f32 0.0, %v4244
        %v4246 = vpop.f32.mrb[0].mxu0
        %v4247 = vpop.f32.mrb[0].mxu0
        %v4248 = vadd.f32 0.0, %v4247
        %v4249 = vpop.f32.mrb[0].mxu0
        %4250 = vmatprep.mubr.bf16.mxu0 0
        %4251 = vmatmul.mubr.bf16.gmra.mrb[0].mxu0 %v4087
        %v4252 = vpop.f32.mrb[0].mxu0
        %v4253 = vadd.f32 0.0, %v4252
        %v4254 = vpop.f32.mrb[0].mxu0
        %v4255 = vpop.f32.mrb[0].mxu0
        %v4256 = vadd.f32 0.0, %v4255
        %v4257 = vpop.f32.mrb[0].mxu0
        %4258 = vmatprep.mubr.bf16.mxu0 0
        %4259 = vmatmul.mubr.bf16.gmra.mrb[0].mxu0 %v4089
        %v4260 = vpop.f32.mrb[0].mxu0
        %v4261 = vadd.f32 0.0, %v4260
        %v4262 = vpop.f32.mrb[0].mxu0
        %v4263 = vpop.f32.mrb[0].mxu0
        %v4264 = vadd.f32 0.0, %v4263
        %v4265 = vpop.f32.mrb[0].mxu0
        %4266 = vmatprep.mubr.bf16.mxu0 0
        %4267 = vmatmul.mubr.bf16.gmra.mrb[0].mxu0 %v4091
        %v4268 = vpop.f32.mrb[0].mxu0
        %v4269 = vadd.f32 0.0, %v4268
        %v4270 = vpop.f32.mrb[0].mxu0
        %v4271 = vpop.f32.mrb[0].mxu0
        %v4272 = vadd.f32 0.0, %v4271
        %v4273 = vpop.f32.mrb[0].mxu0
        %4274 = vmatprep.mubr.bf16.mxu0 0
        %4275 = vmatmul.mubr.bf16.gmra.mrb[0].mxu0 %v4093
        %v4276 = vpop.f32.mrb[0].mxu0
        %v4277 = vadd.f32 0.0, %v4276
        %v4278 = vpop.f32.mrb[0].mxu0
        %v4279 = vpop.f32.mrb[0].mxu0
        %v4280 = vadd.f32 0.0, %v4279
        %v4281 = vpop.f32.mrb[0].mxu0
        %4282 = vmatprep.mubr.bf16.mxu0 0
        %4283 = vmatmul.mubr.bf16.gmra.mrb[0].mxu0 %v4095
        %v4284 = vpop.f32.mrb[0].mxu0
        %v4285 = vadd.f32 0.0, %v4284
        %v4286 = vpop.f32.mrb[0].mxu0
        %v4287 = vpop.f32.mrb[0].mxu0
        %v4288 = vadd.f32 0.0, %v4287
        %v4289 = vpop.f32.mrb[0].mxu0
        %4290 = vmatprep.mubr.bf16.mxu0 0
        %4291 = vmatmul.mubr.bf16.gmra.mrb[0].mxu0 %v4097
        %v4292 = vpop.f32.mrb[0].mxu0
        %v4293 = vadd.f32 0.0, %v4292
        %v4294 = vpop.f32.mrb[0].mxu0
        %v4295 = vpop.f32.mrb[0].mxu0
        %v4296 = vadd.f32 0.0, %v4295
        %v4297 = vpop.f32.mrb[0].mxu0
        %4298 = vmatprep.mubr.bf16.mxu0 0
        %4299 = vmatmul.mubr.bf16.gmra.mrb[0].mxu0 %v4099
        %v4300 = vpop.f32.mrb[0].mxu0
        %v4301 = vadd.f32 0.0, %v4300
        %v4302 = vpop.f32.mrb[0].mxu0
        %v4303 = vpop.f32.mrb[0].mxu0
        %v4304 = vadd.f32 0.0, %v4303
        %v4305 = vpop.f32.mrb[0].mxu0
        %4306 = vdwg.mxu0
        %v4307 = vadd.f32 %v3953, %v4197
        %v4308 = vadd.f32 %v3954, %v4200
        %v4309 = vadd.f32 %v3955, %v4205
        %v4310 = vadd.f32 %v3956, %v4208
        %v4311 = vadd.f32 %v3957, %v4213
        %v4312 = vadd.f32 %v3958, %v4216
        %v4313 = vadd.f32 %v3959, %v4221
        %v4314 = vadd.f32 %v3960, %v4224
        %v4315 = vadd.f32 %v3961, %v4229
        %v4316 = vadd.f32 %v3962, %v4232
        %v4317 = vadd.f32 %v3963, %v4237
        %v4318 = vadd.f32 %v3964, %v4240
        %v4319 = vadd.f32 %v3965, %v4245
        %v4320 = vadd.f32 %v3966, %v4248
        %v4321 = vadd.f32 %v3967, %v4253
        %v4322 = vadd.f32 %v3968, %v4256
        %v4323 = vadd.f32 %v3969, %v4261
        %v4324 = vadd.f32 %v3970, %v4264
        %v4325 = vadd.f32 %v3971, %v4269
        %v4326 = vadd.f32 %v3972, %v4272
        %v4327 = vadd.f32 %v3973, %v4277
        %v4328 = vadd.f32 %v3974, %v4280
        %v4329 = vadd.f32 %v3975, %v4285
        %v4330 = vadd.f32 %v3976, %v4288
        %v4331 = vadd.f32 %v3977, %v4293
        %v4332 = vadd.f32 %v3978, %v4296
        %v4333 = vadd.f32 %v3979, %v4301
        %v4334 = vadd.f32 %v3980, %v4304
        %4335 = vst [vmem:[#allocation2] sm:$0xff] %v4307
        %4336 = vst [vmem:[#allocation2 + $0x8] sm:$0xff] %v4308
        %4337 = vst [vmem:[#allocation2 + $0x10] sm:$0xff] %v4309
        %4338 = vst [vmem:[#allocation2 + $0x18] sm:$0xff] %v4310
        %4339 = vst [vmem:[#allocation2 + $0x20] sm:$0xff] %v4311
        %4340 = vst [vmem:[#allocation2 + $0x28] sm:$0xff] %v4312
        %4341 = vst [vmem:[#allocation2 + $0x30] sm:$0xff] %v4313
        %4342 = vst [vmem:[#allocation2 + $0x38] sm:$0xff] %v4314
        %4343 = vst [vmem:[#allocation2 + $0x40] sm:$0xff] %v4315
        %4344 = vst [vmem:[#allocation2 + $0x48] sm:$0xff] %v4316
        %4345 = vst [vmem:[#allocation2 + $0x50] sm:$0xff] %v4317
        %4346 = vst [vmem:[#allocation2 + $0x58] sm:$0xff] %v4318
        %4347 = vst [vmem:[#allocation2 + $0x60] sm:$0xff] %v4319
        %4348 = vst [vmem:[#allocation2 + $0x68] sm:$0xff] %v4320
        %4349 = vst [vmem:[#allocation2 + $0x70] sm:$0xff] %v4321
        %4350 = vst [vmem:[#allocation2 + $0x78] sm:$0xff] %v4322
        %4351 = vst [vmem:[#allocation2 + $0x80] sm:$0xff] %v4323
        %4352 = vst [vmem:[#allocation2 + $0x88] sm:$0xff] %v4324
        %4353 = vst [vmem:[#allocation2 + $0x90] sm:$0xff] %v4325
        %4354 = vst [vmem:[#allocation2 + $0x98] sm:$0xff] %v4326
        %4355 = vst [vmem:[#allocation2 + $0xa0] sm:$0xff] %v4327
        %4356 = vst [vmem:[#allocation2 + $0xa8] sm:$0xff] %v4328
        %4357 = vst [vmem:[#allocation2 + $0xb0] sm:$0xff] %v4329
        %4358 = vst [vmem:[#allocation2 + $0xb8] sm:$0xff] %v4330
        %4359 = vst [vmem:[#allocation2 + $0xc0] sm:$0xff] %v4331
        %4360 = vst [vmem:[#allocation2 + $0xc8] sm:$0xff] %v4332
        %4361 = vst [vmem:[#allocation2 + $0xd0] sm:$0xff] %v4333
        %4362 = vst [vmem:[#allocation2 + $0xd8] sm:$0xff] %v4334
        %v4363 = vld [vmem:[#allocation2] sm:$0xff]
        %v4364 = vld [vmem:[#allocation2 + $0x8] sm:$0xff]
        %v4365 = vld [vmem:[#allocation2 + $0x10] sm:$0xff]
        %v4366 = vld [vmem:[#allocation2 + $0x18] sm:$0xff]
        %v4367 = vld [vmem:[#allocation2 + $0x20] sm:$0xff]
        %v4368 = vld [vmem:[#allocation2 + $0x28] sm:$0xff]
        %v4369 = vld [vmem:[#allocation2 + $0x30] sm:$0xff]
        %v4370 = vld [vmem:[#allocation2 + $0x38] sm:$0xff]
        %v4371 = vld [vmem:[#allocation2 + $0x40] sm:$0xff]
        %v4372 = vld [vmem:[#allocation2 + $0x48] sm:$0xff]
        %v4373 = vld [vmem:[#allocation2 + $0x50] sm:$0xff]
        %v4374 = vld [vmem:[#allocation2 + $0x58] sm:$0xff]
        %v4375 = vld [vmem:[#allocation2 + $0x60] sm:$0xff]
        %v4376 = vld [vmem:[#allocation2 + $0x68] sm:$0xff]
        %v4377 = vld [vmem:[#allocation2 + $0x70] sm:$0xff]
        %v4378 = vld [vmem:[#allocation2 + $0x78] sm:$0xff]
        %v4379 = vld [vmem:[#allocation2 + $0x80] sm:$0xff]
        %v4380 = vld [vmem:[#allocation2 + $0x88] sm:$0xff]
        %v4381 = vld [vmem:[#allocation2 + $0x90] sm:$0xff]
        %v4382 = vld [vmem:[#allocation2 + $0x98] sm:$0xff]
        %v4383 = vld [vmem:[#allocation2 + $0xa0] sm:$0xff]
        %v4384 = vld [vmem:[#allocation2 + $0xa8] sm:$0xff]
        %v4385 = vld [vmem:[#allocation2 + $0xb0] sm:$0xff]
        %v4386 = vld [vmem:[#allocation2 + $0xb8] sm:$0xff]
        %v4387 = vld [vmem:[#allocation2 + $0xc0] sm:$0xff]
        %v4388 = vld [vmem:[#allocation2 + $0xc8] sm:$0xff]
        %v4389 = vld [vmem:[#allocation2 + $0xd0] sm:$0xff]
        %v4390 = vld [vmem:[#allocation2 + $0xd8] sm:$0xff]
        %4391 = vst [vmem:[%s219] sm:$0xff] %v4363
        %4392 = vst [vmem:[%s219 + $0x8] sm:$0xff] %v4364
        %4393 = vst [vmem:[%s219 + $0x10] sm:$0xff] %v4365
        %4394 = vst [vmem:[%s219 + $0x18] sm:$0xff] %v4366
        %4395 = vst [vmem:[%s219 + $0x20] sm:$0xff] %v4367
        %4396 = vst [vmem:[%s219 + $0x28] sm:$0xff] %v4368
        %4397 = vst [vmem:[%s219 + $0x30] sm:$0xff] %v4369
        %4398 = vst [vmem:[%s219 + $0x38] sm:$0xff] %v4370
        %4399 = vst [vmem:[%s219 + $0x40] sm:$0xff] %v4371
        %4400 = vst [vmem:[%s219 + $0x48] sm:$0xff] %v4372
        %4401 = vst [vmem:[%s219 + $0x50] sm:$0xff] %v4373
        %4402 = vst [vmem:[%s219 + $0x58] sm:$0xff] %v4374
        %4403 = vst [vmem:[%s219 + $0x60] sm:$0xff] %v4375
        %4404 = vst [vmem:[%s219 + $0x68] sm:$0xff] %v4376
        %4405 = vst [vmem:[%s219 + $0x70] sm:$0xff] %v4377
        %4406 = vst [vmem:[%s219 + $0x78] sm:$0xff] %v4378
        %4407 = vst [vmem:[%s219 + $0x80] sm:$0xff] %v4379
        %4408 = vst [vmem:[%s219 + $0x88] sm:$0xff] %v4380
        %4409 = vst [vmem:[%s219 + $0x90] sm:$0xff] %v4381
        %4410 = vst [vmem:[%s219 + $0x98] sm:$0xff] %v4382
        %4411 = vst [vmem:[%s219 + $0xa0] sm:$0xff] %v4383
        %4412 = vst [vmem:[%s219 + $0xa8] sm:$0xff] %v4384
        %4413 = vst [vmem:[%s219 + $0xb0] sm:$0xff] %v4385
        %4414 = vst [vmem:[%s219 + $0xb8] sm:$0xff] %v4386
        %4415 = vst [vmem:[%s219 + $0xc0] sm:$0xff] %v4387
        %4416 = vst [vmem:[%s219 + $0xc8] sm:$0xff] %v4388
        %4417 = vst [vmem:[%s219 + $0xd0] sm:$0xff] %v4389
        %4418 = vst [vmem:[%s219 + $0xd8] sm:$0xff] %v4390
        %s4419 = sand.u32 %s98, 1
        %s4420 = scalar_lea.sflag [#allocation5], %s4419
        %s4421 = sand.u32 %s98, 1
        %s4422 = smul.addr %s4421, 224
        %s4423 = scalar_lea.vmem [#allocation8], %s4422
        // Predicated region
        $region37: #{tpu_custom_call.1} parent=27 // pred_check
          %p4424 = pneg %p108
        $region38: #{tpu_custom_call.1} parent=27 // pred_check_branch
          %4426 = sbr.rel (%p4424) target = $region40
        $region39: #{tpu_custom_call.1} parent=27 // pred_region
          %s4428 = ssub.s32 3584, 3584
          %4429 = vsyncadd %s4420, %s4428
          %s4430 = smul.addr %s27, 28
          %s4431 = smul.addr %s26, 56
          %s4432 = sadd.s32 %s4430, %s4431
          %s4433 = smul.addr %s4432, 128
          %s4434 = scalar_lea.hbm %s2, %s4433
          %s4435 = sshll.u32 %s4423, 4
          %s4436 = int_to_ptr.vmem [resolvable:$true] %s4435
          %4441 = dma.vmem_to_hbm [thread:$0]  %s4436, 3584, %s4434, %s4420, 128, 128, 8
        $region40: #{tpu_custom_call.1} parent=27 // pred_fallthru
          _
      $region28: #{tpu_custom_call.1} parent=5 // pred_fallthru
        _
      %p4442 = scmp.le.s32.totalorder 2, %s17
      // Predicated region
      $region41: #{tpu_custom_call.1} parent=5 // pred_check
        %p4443 = pneg %p4442
      $region42: #{tpu_custom_call.1} parent=5 // pred_check_branch
        %4445 = sbr.rel (%p4443) target = $region44
      $region43: #{tpu_custom_call.1} parent=5 // pred_region
        %s4446 = ssub.s32 %s17, 2
        // Predicated region
        $region45: #{tpu_custom_call.1} parent=43 // pred_check
          %p4447 = pneg %p114
        $region46: #{tpu_custom_call.1} parent=43 // pred_check_branch
          %4449 = sbr.rel (%p4447) target = $region48
        $region47: #{tpu_custom_call.1} parent=43 // pred_region
          %s4450 = sand.u32 %s99, 1
          %s4451 = scalar_lea.sflag [#allocation5], %s4450
          %s4452 = sand.u32 %s99, 1
          %s4453 = smul.addr %s4452, 224
          %s4454 = scalar_lea.vmem [#allocation8], %s4453
          %4455 = dma.done %s4451, 3584
        $region48: #{tpu_custom_call.1} parent=43 // pred_fallthru
          _
      $region44: #{tpu_custom_call.1} parent=5 // pred_fallthru
        _
    $region6: #{tpu_custom_call.1} parent=1 // loop_footer
      %s21 = sadd.s32 1, %s17
    $region7: #{tpu_custom_call.1} parent=1 // loop_footer_branch
      %16 = sbr.rel target = $region3
    $region8: #{tpu_custom_call.1} parent=1 // loop_exit
      _
    %4456 = vsyncpa [#allocation4], 1
    %s4457 = scalar_lea.sflag [#allocation4], 1
    %4458 = vsyncpa %s4457, 1
    %4459 = vsyncpa [#allocation7], 1
    %s4460 = scalar_lea.sflag [#allocation7], 1
    %4461 = vsyncpa %s4460, 1
    %4462 = vsyncpa [#allocation5], 1
    %s4463 = scalar_lea.sflag [#allocation5], 1
    %4464 = vsyncpa %s4463, 1

</llo_original>
